<compile_context>
chip_gen: v5e
topology: v5e:2x2
jax: 0.10.0
libtpu: 0.0.40
codegen_flags: <defaults>
</compile_context>

<pallas_src>
import functools

import jax
import jax.numpy as jnp
from jax.experimental import pallas as pl
from jax.experimental.pallas import tpu as pltpu

LEAKY_SLOPE = 0.01   # nn.LeakyReLU() default
BN_EPS = 1e-5


# ----------------------------------------------------------------------------
# Pallas kernel: fused KxK conv (stride 1) + folded-BN bias + LeakyReLU.
# One (image, Cout-block) pair per grid step.
# ----------------------------------------------------------------------------
def _dbl_conv_kernel(x_ref, w_ref, b_ref, o_ref, acc_ref, *, ksize, h_out, w_out):
    # x_ref  : (1, Hp, Wp, Cin)        padded NHWC input tile (bf16)
    # w_ref  : (K*K, Cin, tCout)       BN-scale-folded weights (bf16)
    # b_ref  : (1, tCout)              folded BN bias (f32)
    # o_ref  : (1, h_out, w_out, tCout)
    # acc_ref: (h_out*w_out, tCout)    f32 VMEM accumulator
    cin = x_ref.shape[-1]
    # Gather the K*K taps from the VMEM-resident padded tile (no HBM im2col),
    # one MXU matmul per tap accumulated in f32.
    for kh in range(ksize):
        for kw in range(ksize):
            patch = x_ref[0, kh:kh + h_out, kw:kw + w_out, :]
            x2d = patch.reshape(h_out * w_out, cin)
            tap = kh * ksize + kw
            contrib = jnp.dot(x2d, w_ref[tap],
                              preferred_element_type=jnp.float32)
            if tap == 0:
                acc_ref[...] = contrib          # init with first tap (no zero pass)
            else:
                acc_ref[...] += contrib
    y = acc_ref[...] + b_ref[...]               # folded BatchNorm (bias only)
    y = jnp.where(y > 0, y, LEAKY_SLOPE * y)    # LeakyReLU
    o_ref[...] = y.reshape(1, h_out, w_out, -1).astype(o_ref.dtype)


# ----------------------------------------------------------------------------
# Public forward: NCHW in / NCHW out (PyTorch convention).
# ksize / stride / padding are static jit args.
# ----------------------------------------------------------------------------
@functools.partial(jax.jit, static_argnames=("ksize", "stride", "padding"))
def dbl_forward(x_nchw, w_kio, bias, *, ksize, stride, padding):
    x = jnp.transpose(x_nchw, (0, 2, 3, 1))              # NCHW -> NHWC
    B, H, W, Cin = x.shape
    Cout = w_kio.shape[-1]
    Hp, Wp = H + 2 * padding, W + 2 * padding
    h_out = Hp - ksize + 1                                # stride-1 output size
    w_out = Wp - ksize + 1

    x = x.astype(jnp.bfloat16)                            # cast, then pad (bf16 copy)
    xp = jnp.pad(x, ((0, 0), (padding, padding), (padding, padding), (0, 0)))

    # Tile Cout so the weight block stays small at large channel counts and the
    # grid has enough independent steps for both v7x TensorCores.
    tco = Cout if Cout <= 128 else 128
    assert Cout % tco == 0
    n_co = Cout // tco

    kernel = functools.partial(_dbl_conv_kernel, ksize=ksize,
                               h_out=h_out, w_out=w_out)
    y = pl.pallas_call(
        kernel,
        out_shape=jax.ShapeDtypeStruct((B, h_out, w_out, Cout), jnp.float32),
        grid=(B, n_co),
        in_specs=[
            pl.BlockSpec((1, Hp, Wp, Cin), lambda b, co: (b, 0, 0, 0)),
            pl.BlockSpec((ksize * ksize, Cin, tco), lambda b, co: (0, 0, co)),
            pl.BlockSpec((1, tco), lambda b, co: (0, co)),
        ],
        out_specs=pl.BlockSpec((1, h_out, w_out, tco),
                               lambda b, co: (b, 0, 0, co)),
        scratch_shapes=[pltpu.VMEM((h_out * w_out, tco), jnp.float32)],
        compiler_params=pltpu.CompilerParams(
            dimension_semantics=("parallel", "parallel")),
    )(xp, w_kio, bias)

    # Conv with stride s == stride-1 conv subsampled at multiples of s.
    if stride > 1:
        y = y[:, ::stride, ::stride, :]
    return jnp.transpose(y, (0, 3, 1, 2))                 # NHWC -> NCHW


# ----------------------------------------------------------------------------
# Deterministic synthetic parameters mirroring nn.Conv2d / nn.BatchNorm2d.
# BatchNorm folded with inference (running) statistics; per-channel scale is
# folded straight into the conv weights:  (x * w) * s == x * (w * s).
# ----------------------------------------------------------------------------
def make_dbl_params(key, cin, cout, ksize):
    k1, k2, k3, k4, k5 = jax.random.split(key, 5)
    w = jax.random.normal(k1, (cout, cin, ksize, ksize), jnp.float32) * 0.05
    gamma = 1.0 + 0.1 * jax.random.normal(k2, (cout,), jnp.float32)
    beta = 0.1 * jax.random.normal(k3, (cout,), jnp.float32)
    run_mean = 0.1 * jax.random.normal(k4, (cout,), jnp.float32)
    run_var = jnp.abs(jax.random.normal(k5, (cout,), jnp.float32)) + 0.5
    scale = gamma / jnp.sqrt(run_var + BN_EPS)
    bias = beta - run_mean * scale
    w_folded = w * scale[:, None, None, None]
    # (O, I, kH, kW) -> (kH, kW, I, O) -> (kH*kW, I, O)  (matches kernel tap order)
    w_kio = jnp.transpose(w_folded, (2, 3, 1, 0)).reshape(ksize * ksize, cin, cout)
    return w_kio.astype(jnp.bfloat16), bias.reshape(1, cout)


# Pure-JAX reference (same folded bf16 weights, f32 accumulation) for a
# tolerance check of the Pallas kernel.
def _dbl_reference(x_nchw, w_kio, bias, *, ksize, stride, padding):
    x = jnp.transpose(x_nchw, (0, 2, 3, 1)).astype(jnp.bfloat16)
    cin, cout = x.shape[-1], w_kio.shape[-1]
    w_hwio = w_kio.reshape(ksize, ksize, cin, cout)
    y = jax.lax.conv_general_dilated(
        x, w_hwio, window_strides=(stride, stride),
        padding=[(padding, padding), (padding, padding)],
        dimension_numbers=("NHWC", "HWIO", "NHWC"),
        preferred_element_type=jnp.float32)
    y = y + bias.reshape(1, 1, 1, -1)
    y = jnp.where(y > 0, y, LEAKY_SLOPE * y)
    return jnp.transpose(y, (0, 3, 1, 2))


if __name__ == "__main__":
    # Small but lane-dense demo shapes (channels multiple of 128).
    B, C_IN, C_OUT, H, W = 2, 128, 128, 16, 16
    KSIZE, STRIDE, PADDING = 3, 1, 1

    key = jax.random.PRNGKey(0)
    k_x, k_p = jax.random.split(key)
    x = jax.random.normal(k_x, (B, C_IN, H, W), jnp.float32)     # NCHW input
    w_kio, bias = make_dbl_params(k_p, C_IN, C_OUT, KSIZE)

    y = dbl_forward(x, w_kio, bias, ksize=KSIZE, stride=STRIDE, padding=PADDING)
    jax.block_until_ready(y)
    assert y.shape == (B, C_OUT, H, W), y.shape

    y_ref = _dbl_reference(x, w_kio, bias,
                           ksize=KSIZE, stride=STRIDE, padding=PADDING)
    max_err = float(jnp.max(jnp.abs(y - y_ref)))
    assert max_err < 1e-1, f"mismatch vs reference conv: {max_err}"

    print("KERNEL_OK")
</pallas_src>

<mosaic_0001>
module attributes {stable_mosaic.version = 11 : i64} {
  func.func @_dbl_conv_kernel(%arg0: i32, %arg1: i32, %arg2: memref<1x18x18x128xbf16, #tpu.memory_space<vmem>>, %arg3: memref<9x128x128xbf16, #tpu.memory_space<vmem>>, %arg4: memref<1x128xf32, #tpu.memory_space<vmem>>, %arg5: memref<1x16x16x128xf32, #tpu.memory_space<vmem>>, %arg6: memref<256x128xf32, #tpu.memory_space<vmem>>) attributes {dimension_semantics = [#tpu.dimension_semantics<parallel>, #tpu.dimension_semantics<parallel>], iteration_bounds = array<i64: 2, 1>, scalar_prefetch = 0 : i64, scratch_operands = 1 : i64, tpu.core_type = #tpu.core_type<tc>, window_params = [{transform_indices = @transform_0, window_bounds = array<i64: 1, 18, 18, 128>}, {transform_indices = @transform_1, window_bounds = array<i64: 9, 128, 128>}, {transform_indices = @transform_2, window_bounds = array<i64: 1, 128>}, {transform_indices = @transform_3, window_bounds = array<i64: 1, 16, 16, 128>}]} {
    %c0 = arith.constant 0 : index
    %c0_0 = arith.constant 0 : index
    %c0_1 = arith.constant 0 : index
    %c0_2 = arith.constant 0 : index
    %0 = vector.load %arg2[%c0, %c0_0, %c0_1, %c0_2] : memref<1x18x18x128xbf16, #tpu.memory_space<vmem>>, vector<1x16x16x128xbf16>
    %1 = vector.shape_cast %0 : vector<1x16x16x128xbf16> to vector<16x16x128xbf16>
    %2 = vector.shape_cast %1 : vector<16x16x128xbf16> to vector<256x128xbf16>
    %c0_3 = arith.constant 0 : index
    %c0_4 = arith.constant 0 : index
    %c0_5 = arith.constant 0 : index
    %3 = vector.load %arg3[%c0_3, %c0_4, %c0_5] : memref<9x128x128xbf16, #tpu.memory_space<vmem>>, vector<1x128x128xbf16>
    %4 = vector.shape_cast %3 : vector<1x128x128xbf16> to vector<128x128xbf16>
    %cst = arith.constant dense<0.000000e+00> : vector<256x128xf32>
    %5 = tpu.matmul %2, %4, %cst {dimension_numbers = #tpu.dot_dimension_numbers<[1], [0], [0], [1], [0, 0, 1, 1], [], []>} : vector<256x128xbf16>, vector<128x128xbf16>, vector<256x128xf32> -> vector<256x128xf32>
    %c0_6 = arith.constant 0 : index
    %c0_7 = arith.constant 0 : index
    %6 = vector.load %arg6[%c0_6, %c0_7] : memref<256x128xf32, #tpu.memory_space<vmem>>, vector<256x128xf32>
    tpu.vector_store %arg6[%c0_6, %c0_7], %5 {strides = array<i32>} : memref<256x128xf32, #tpu.memory_space<vmem>>, vector<256x128xf32>,
    %c0_8 = arith.constant 0 : index
    %c0_9 = arith.constant 0 : index
    %c1 = arith.constant 1 : index
    %c0_10 = arith.constant 0 : index
    %7 = vector.load %arg2[%c0_8, %c0_9, %c1, %c0_10] : memref<1x18x18x128xbf16, #tpu.memory_space<vmem>>, vector<1x16x16x128xbf16>
    %8 = vector.shape_cast %7 : vector<1x16x16x128xbf16> to vector<16x16x128xbf16>
    %9 = vector.shape_cast %8 : vector<16x16x128xbf16> to vector<256x128xbf16>
    %c1_11 = arith.constant 1 : index
    %c0_12 = arith.constant 0 : index
    %c0_13 = arith.constant 0 : index
    %10 = vector.load %arg3[%c1_11, %c0_12, %c0_13] : memref<9x128x128xbf16, #tpu.memory_space<vmem>>, vector<1x128x128xbf16>
    %11 = vector.shape_cast %10 : vector<1x128x128xbf16> to vector<128x128xbf16>
    %cst_14 = arith.constant dense<0.000000e+00> : vector<256x128xf32>
    %12 = tpu.matmul %9, %11, %cst_14 {dimension_numbers = #tpu.dot_dimension_numbers<[1], [0], [0], [1], [0, 0, 1, 1], [], []>} : vector<256x128xbf16>, vector<128x128xbf16>, vector<256x128xf32> -> vector<256x128xf32>
    %c0_15 = arith.constant 0 : index
    %c0_16 = arith.constant 0 : index
    %13 = vector.load %arg6[%c0_15, %c0_16] : memref<256x128xf32, #tpu.memory_space<vmem>>, vector<256x128xf32>
    %14 = arith.addf %13, %12 : vector<256x128xf32>
    %c0_17 = arith.constant 0 : index
    %c0_18 = arith.constant 0 : index
    %15 = vector.load %arg6[%c0_17, %c0_18] : memref<256x128xf32, #tpu.memory_space<vmem>>, vector<256x128xf32>
    tpu.vector_store %arg6[%c0_17, %c0_18], %14 {strides = array<i32>} : memref<256x128xf32, #tpu.memory_space<vmem>>, vector<256x128xf32>,
    %c0_19 = arith.constant 0 : index
    %c0_20 = arith.constant 0 : index
    %c2 = arith.constant 2 : index
    %c0_21 = arith.constant 0 : index
    %16 = vector.load %arg2[%c0_19, %c0_20, %c2, %c0_21] : memref<1x18x18x128xbf16, #tpu.memory_space<vmem>>, vector<1x16x16x128xbf16>
    %17 = vector.shape_cast %16 : vector<1x16x16x128xbf16> to vector<16x16x128xbf16>
    %18 = vector.shape_cast %17 : vector<16x16x128xbf16> to vector<256x128xbf16>
    %c2_22 = arith.constant 2 : index
    %c0_23 = arith.constant 0 : index
    %c0_24 = arith.constant 0 : index
    %19 = vector.load %arg3[%c2_22, %c0_23, %c0_24] : memref<9x128x128xbf16, #tpu.memory_space<vmem>>, vector<1x128x128xbf16>
    %20 = vector.shape_cast %19 : vector<1x128x128xbf16> to vector<128x128xbf16>
    %cst_25 = arith.constant dense<0.000000e+00> : vector<256x128xf32>
    %21 = tpu.matmul %18, %20, %cst_25 {dimension_numbers = #tpu.dot_dimension_numbers<[1], [0], [0], [1], [0, 0, 1, 1], [], []>} : vector<256x128xbf16>, vector<128x128xbf16>, vector<256x128xf32> -> vector<256x128xf32>
    %c0_26 = arith.constant 0 : index
    %c0_27 = arith.constant 0 : index
    %22 = vector.load %arg6[%c0_26, %c0_27] : memref<256x128xf32, #tpu.memory_space<vmem>>, vector<256x128xf32>
    %23 = arith.addf %22, %21 : vector<256x128xf32>
    %c0_28 = arith.constant 0 : index
    %c0_29 = arith.constant 0 : index
    %24 = vector.load %arg6[%c0_28, %c0_29] : memref<256x128xf32, #tpu.memory_space<vmem>>, vector<256x128xf32>
    tpu.vector_store %arg6[%c0_28, %c0_29], %23 {strides = array<i32>} : memref<256x128xf32, #tpu.memory_space<vmem>>, vector<256x128xf32>,
    %c0_30 = arith.constant 0 : index
    %c1_31 = arith.constant 1 : index
    %c0_32 = arith.constant 0 : index
    %c0_33 = arith.constant 0 : index
    %25 = vector.load %arg2[%c0_30, %c1_31, %c0_32, %c0_33] : memref<1x18x18x128xbf16, #tpu.memory_space<vmem>>, vector<1x16x16x128xbf16>
    %26 = vector.shape_cast %25 : vector<1x16x16x128xbf16> to vector<16x16x128xbf16>
    %27 = vector.shape_cast %26 : vector<16x16x128xbf16> to vector<256x128xbf16>
    %c3 = arith.constant 3 : index
    %c0_34 = arith.constant 0 : index
    %c0_35 = arith.constant 0 : index
    %28 = vector.load %arg3[%c3, %c0_34, %c0_35] : memref<9x128x128xbf16, #tpu.memory_space<vmem>>, vector<1x128x128xbf16>
    %29 = vector.shape_cast %28 : vector<1x128x128xbf16> to vector<128x128xbf16>
    %cst_36 = arith.constant dense<0.000000e+00> : vector<256x128xf32>
    %30 = tpu.matmul %27, %29, %cst_36 {dimension_numbers = #tpu.dot_dimension_numbers<[1], [0], [0], [1], [0, 0, 1, 1], [], []>} : vector<256x128xbf16>, vector<128x128xbf16>, vector<256x128xf32> -> vector<256x128xf32>
    %c0_37 = arith.constant 0 : index
    %c0_38 = arith.constant 0 : index
    %31 = vector.load %arg6[%c0_37, %c0_38] : memref<256x128xf32, #tpu.memory_space<vmem>>, vector<256x128xf32>
    %32 = arith.addf %31, %30 : vector<256x128xf32>
    %c0_39 = arith.constant 0 : index
    %c0_40 = arith.constant 0 : index
    %33 = vector.load %arg6[%c0_39, %c0_40] : memref<256x128xf32, #tpu.memory_space<vmem>>, vector<256x128xf32>
    tpu.vector_store %arg6[%c0_39, %c0_40], %32 {strides = array<i32>} : memref<256x128xf32, #tpu.memory_space<vmem>>, vector<256x128xf32>,
    %c0_41 = arith.constant 0 : index
    %c1_42 = arith.constant 1 : index
    %c1_43 = arith.constant 1 : index
    %c0_44 = arith.constant 0 : index
    %34 = vector.load %arg2[%c0_41, %c1_42, %c1_43, %c0_44] : memref<1x18x18x128xbf16, #tpu.memory_space<vmem>>, vector<1x16x16x128xbf16>
    %35 = vector.shape_cast %34 : vector<1x16x16x128xbf16> to vector<16x16x128xbf16>
    %36 = vector.shape_cast %35 : vector<16x16x128xbf16> to vector<256x128xbf16>
    %c4 = arith.constant 4 : index
    %c0_45 = arith.constant 0 : index
    %c0_46 = arith.constant 0 : index
    %37 = vector.load %arg3[%c4, %c0_45, %c0_46] : memref<9x128x128xbf16, #tpu.memory_space<vmem>>, vector<1x128x128xbf16>
    %38 = vector.shape_cast %37 : vector<1x128x128xbf16> to vector<128x128xbf16>
    %cst_47 = arith.constant dense<0.000000e+00> : vector<256x128xf32>
    %39 = tpu.matmul %36, %38, %cst_47 {dimension_numbers = #tpu.dot_dimension_numbers<[1], [0], [0], [1], [0, 0, 1, 1], [], []>} : vector<256x128xbf16>, vector<128x128xbf16>, vector<256x128xf32> -> vector<256x128xf32>
    %c0_48 = arith.constant 0 : index
    %c0_49 = arith.constant 0 : index
    %40 = vector.load %arg6[%c0_48, %c0_49] : memref<256x128xf32, #tpu.memory_space<vmem>>, vector<256x128xf32>
    %41 = arith.addf %40, %39 : vector<256x128xf32>
    %c0_50 = arith.constant 0 : index
    %c0_51 = arith.constant 0 : index
    %42 = vector.load %arg6[%c0_50, %c0_51] : memref<256x128xf32, #tpu.memory_space<vmem>>, vector<256x128xf32>
    tpu.vector_store %arg6[%c0_50, %c0_51], %41 {strides = array<i32>} : memref<256x128xf32, #tpu.memory_space<vmem>>, vector<256x128xf32>,
    %c0_52 = arith.constant 0 : index
    %c1_53 = arith.constant 1 : index
    %c2_54 = arith.constant 2 : index
    %c0_55 = arith.constant 0 : index
    %43 = vector.load %arg2[%c0_52, %c1_53, %c2_54, %c0_55] : memref<1x18x18x128xbf16, #tpu.memory_space<vmem>>, vector<1x16x16x128xbf16>
    %44 = vector.shape_cast %43 : vector<1x16x16x128xbf16> to vector<16x16x128xbf16>
    %45 = vector.shape_cast %44 : vector<16x16x128xbf16> to vector<256x128xbf16>
    %c5 = arith.constant 5 : index
    %c0_56 = arith.constant 0 : index
    %c0_57 = arith.constant 0 : index
    %46 = vector.load %arg3[%c5, %c0_56, %c0_57] : memref<9x128x128xbf16, #tpu.memory_space<vmem>>, vector<1x128x128xbf16>
    %47 = vector.shape_cast %46 : vector<1x128x128xbf16> to vector<128x128xbf16>
    %cst_58 = arith.constant dense<0.000000e+00> : vector<256x128xf32>
    %48 = tpu.matmul %45, %47, %cst_58 {dimension_numbers = #tpu.dot_dimension_numbers<[1], [0], [0], [1], [0, 0, 1, 1], [], []>} : vector<256x128xbf16>, vector<128x128xbf16>, vector<256x128xf32> -> vector<256x128xf32>
    %c0_59 = arith.constant 0 : index
    %c0_60 = arith.constant 0 : index
    %49 = vector.load %arg6[%c0_59, %c0_60] : memref<256x128xf32, #tpu.memory_space<vmem>>, vector<256x128xf32>
    %50 = arith.addf %49, %48 : vector<256x128xf32>
    %c0_61 = arith.constant 0 : index
    %c0_62 = arith.constant 0 : index
    %51 = vector.load %arg6[%c0_61, %c0_62] : memref<256x128xf32, #tpu.memory_space<vmem>>, vector<256x128xf32>
    tpu.vector_store %arg6[%c0_61, %c0_62], %50 {strides = array<i32>} : memref<256x128xf32, #tpu.memory_space<vmem>>, vector<256x128xf32>,
    %c0_63 = arith.constant 0 : index
    %c2_64 = arith.constant 2 : index
    %c0_65 = arith.constant 0 : index
    %c0_66 = arith.constant 0 : index
    %52 = vector.load %arg2[%c0_63, %c2_64, %c0_65, %c0_66] : memref<1x18x18x128xbf16, #tpu.memory_space<vmem>>, vector<1x16x16x128xbf16>
    %53 = vector.shape_cast %52 : vector<1x16x16x128xbf16> to vector<16x16x128xbf16>
    %54 = vector.shape_cast %53 : vector<16x16x128xbf16> to vector<256x128xbf16>
    %c6 = arith.constant 6 : index
    %c0_67 = arith.constant 0 : index
    %c0_68 = arith.constant 0 : index
    %55 = vector.load %arg3[%c6, %c0_67, %c0_68] : memref<9x128x128xbf16, #tpu.memory_space<vmem>>, vector<1x128x128xbf16>
    %56 = vector.shape_cast %55 : vector<1x128x128xbf16> to vector<128x128xbf16>
    %cst_69 = arith.constant dense<0.000000e+00> : vector<256x128xf32>
    %57 = tpu.matmul %54, %56, %cst_69 {dimension_numbers = #tpu.dot_dimension_numbers<[1], [0], [0], [1], [0, 0, 1, 1], [], []>} : vector<256x128xbf16>, vector<128x128xbf16>, vector<256x128xf32> -> vector<256x128xf32>
    %c0_70 = arith.constant 0 : index
    %c0_71 = arith.constant 0 : index
    %58 = vector.load %arg6[%c0_70, %c0_71] : memref<256x128xf32, #tpu.memory_space<vmem>>, vector<256x128xf32>
    %59 = arith.addf %58, %57 : vector<256x128xf32>
    %c0_72 = arith.constant 0 : index
    %c0_73 = arith.constant 0 : index
    %60 = vector.load %arg6[%c0_72, %c0_73] : memref<256x128xf32, #tpu.memory_space<vmem>>, vector<256x128xf32>
    tpu.vector_store %arg6[%c0_72, %c0_73], %59 {strides = array<i32>} : memref<256x128xf32, #tpu.memory_space<vmem>>, vector<256x128xf32>,
    %c0_74 = arith.constant 0 : index
    %c2_75 = arith.constant 2 : index
    %c1_76 = arith.constant 1 : index
    %c0_77 = arith.constant 0 : index
    %61 = vector.load %arg2[%c0_74, %c2_75, %c1_76, %c0_77] : memref<1x18x18x128xbf16, #tpu.memory_space<vmem>>, vector<1x16x16x128xbf16>
    %62 = vector.shape_cast %61 : vector<1x16x16x128xbf16> to vector<16x16x128xbf16>
    %63 = vector.shape_cast %62 : vector<16x16x128xbf16> to vector<256x128xbf16>
    %c7 = arith.constant 7 : index
    %c0_78 = arith.constant 0 : index
    %c0_79 = arith.constant 0 : index
    %64 = vector.load %arg3[%c7, %c0_78, %c0_79] : memref<9x128x128xbf16, #tpu.memory_space<vmem>>, vector<1x128x128xbf16>
    %65 = vector.shape_cast %64 : vector<1x128x128xbf16> to vector<128x128xbf16>
    %cst_80 = arith.constant dense<0.000000e+00> : vector<256x128xf32>
    %66 = tpu.matmul %63, %65, %cst_80 {dimension_numbers = #tpu.dot_dimension_numbers<[1], [0], [0], [1], [0, 0, 1, 1], [], []>} : vector<256x128xbf16>, vector<128x128xbf16>, vector<256x128xf32> -> vector<256x128xf32>
    %c0_81 = arith.constant 0 : index
    %c0_82 = arith.constant 0 : index
    %67 = vector.load %arg6[%c0_81, %c0_82] : memref<256x128xf32, #tpu.memory_space<vmem>>, vector<256x128xf32>
    %68 = arith.addf %67, %66 : vector<256x128xf32>
    %c0_83 = arith.constant 0 : index
    %c0_84 = arith.constant 0 : index
    %69 = vector.load %arg6[%c0_83, %c0_84] : memref<256x128xf32, #tpu.memory_space<vmem>>, vector<256x128xf32>
    tpu.vector_store %arg6[%c0_83, %c0_84], %68 {strides = array<i32>} : memref<256x128xf32, #tpu.memory_space<vmem>>, vector<256x128xf32>,
    %c0_85 = arith.constant 0 : index
    %c2_86 = arith.constant 2 : index
    %c2_87 = arith.constant 2 : index
    %c0_88 = arith.constant 0 : index
    %70 = vector.load %arg2[%c0_85, %c2_86, %c2_87, %c0_88] : memref<1x18x18x128xbf16, #tpu.memory_space<vmem>>, vector<1x16x16x128xbf16>
    %71 = vector.shape_cast %70 : vector<1x16x16x128xbf16> to vector<16x16x128xbf16>
    %72 = vector.shape_cast %71 : vector<16x16x128xbf16> to vector<256x128xbf16>
    %c8 = arith.constant 8 : index
    %c0_89 = arith.constant 0 : index
    %c0_90 = arith.constant 0 : index
    %73 = vector.load %arg3[%c8, %c0_89, %c0_90] : memref<9x128x128xbf16, #tpu.memory_space<vmem>>, vector<1x128x128xbf16>
    %74 = vector.shape_cast %73 : vector<1x128x128xbf16> to vector<128x128xbf16>
    %cst_91 = arith.constant dense<0.000000e+00> : vector<256x128xf32>
    %75 = tpu.matmul %72, %74, %cst_91 {dimension_numbers = #tpu.dot_dimension_numbers<[1], [0], [0], [1], [0, 0, 1, 1], [], []>} : vector<256x128xbf16>, vector<128x128xbf16>, vector<256x128xf32> -> vector<256x128xf32>
    %c0_92 = arith.constant 0 : index
    %c0_93 = arith.constant 0 : index
    %76 = vector.load %arg6[%c0_92, %c0_93] : memref<256x128xf32, #tpu.memory_space<vmem>>, vector<256x128xf32>
    %77 = arith.addf %76, %75 : vector<256x128xf32>
    %c0_94 = arith.constant 0 : index
    %c0_95 = arith.constant 0 : index
    %78 = vector.load %arg6[%c0_94, %c0_95] : memref<256x128xf32, #tpu.memory_space<vmem>>, vector<256x128xf32>
    tpu.vector_store %arg6[%c0_94, %c0_95], %77 {strides = array<i32>} : memref<256x128xf32, #tpu.memory_space<vmem>>, vector<256x128xf32>,
    %c0_96 = arith.constant 0 : index
    %c0_97 = arith.constant 0 : index
    %79 = vector.load %arg6[%c0_96, %c0_97] : memref<256x128xf32, #tpu.memory_space<vmem>>, vector<256x128xf32>
    %c0_98 = arith.constant 0 : index
    %c0_99 = arith.constant 0 : index
    %80 = vector.load %arg4[%c0_98, %c0_99] : memref<1x128xf32, #tpu.memory_space<vmem>>, vector<1x128xf32>
    %81 = vector.broadcast %80 : vector<1x128xf32> to vector<256x128xf32>
    %82 = arith.addf %79, %81 : vector<256x128xf32>
    %cst_100 = arith.constant 0.000000e+00 : f32
    %83 = vector.broadcast %cst_100 : f32 to vector<256x128xf32>
    %84 = arith.cmpf ogt, %82, %83 : vector<256x128xf32>
    %cst_101 = arith.constant 0.00999999977 : f32
    %85 = vector.broadcast %cst_101 : f32 to vector<256x128xf32>
    %86 = arith.mulf %85, %82 : vector<256x128xf32>
    %87 = arith.select %84, %82, %86 : vector<256x128xi1>, vector<256x128xf32>
    %88 = vector.shape_cast %87 : vector<256x128xf32> to vector<1x16x16x128xf32>
    %c0_102 = arith.constant 0 : index
    %c0_103 = arith.constant 0 : index
    %c0_104 = arith.constant 0 : index
    %c0_105 = arith.constant 0 : index
    %89 = vector.load %arg5[%c0_102, %c0_103, %c0_104, %c0_105] : memref<1x16x16x128xf32, #tpu.memory_space<vmem>>, vector<1x16x16x128xf32>
    tpu.vector_store %arg5[%c0_102, %c0_103, %c0_104, %c0_105], %88 {strides = array<i32>} : memref<1x16x16x128xf32, #tpu.memory_space<vmem>>, vector<1x16x16x128xf32>,
    return
  }
  func.func @transform_0(%arg0: i32, %arg1: i32) -> (i32, i32, i32, i32) {
    %c0_i32 = arith.constant 0 : i32
    %c0_i32_0 = arith.constant 0 : i32
    %c0_i32_1 = arith.constant 0 : i32
    %c0_i32_2 = arith.constant 0 : i32
    return %arg0, %c0_i32, %c0_i32_0, %c0_i32_1 : i32, i32, i32, i32
  }
  func.func @transform_1(%arg0: i32, %arg1: i32) -> (i32, i32, i32) {
    %c0_i32 = arith.constant 0 : i32
    %c0_i32_0 = arith.constant 0 : i32
    %c0_i32_1 = arith.constant 0 : i32
    return %c0_i32, %c0_i32_0, %arg1 : i32, i32, i32
  }
  func.func @transform_2(%arg0: i32, %arg1: i32) -> (i32, i32) {
    %c0_i32 = arith.constant 0 : i32
    %c0_i32_0 = arith.constant 0 : i32
    return %c0_i32, %arg1 : i32, i32
  }
  func.func @transform_3(%arg0: i32, %arg1: i32) -> (i32, i32, i32, i32) {
    %c0_i32 = arith.constant 0 : i32
    %c0_i32_0 = arith.constant 0 : i32
    %c0_i32_1 = arith.constant 0 : i32
    return %arg0, %c0_i32, %c0_i32_0, %arg1 : i32, i32, i32, i32
  }
}

</mosaic_0001>

<llo_original>
// kernel: dbl_forward.1
$region0: #{dbl_forward.1}
  #allocation0 [shape = 'u32[]', space=smem, size = 0x4, offset = 0x4, fixed_abs, tag = 'smem constant byte address 0x4 - core index']
  #allocation1 [shape = 'u32[72,128]{1,0:T(1,128)}', space=vmem, size = 0x9000, scoped, tag = 'internal scratch']
  #allocation2 [shape = 'f32[256,128]{1,0:T(8,128)}', space=vmem, size = 0x20000, scoped, tag = 'scratch operand']
  %s0 = inlined_call_operand.vmem [shape: bf16[2,18,18,128], index: 0, kind: input, shape index: {}]
  %s1 = inlined_call_operand.vmem [shape: bf16[9,128,128], index: 1, kind: input, shape index: {}]
  %s2 = inlined_call_operand.vmem [shape: f32[1,128], index: 2, kind: input, shape index: {}]
  %s3 = inlined_call_operand.hbm [shape: f32[2,16,16,128], index: 3, kind: output, shape index: {}]
  %s4 = sld [smem:[#allocation0]]
  $region45: #{dbl_forward.1} parent=0
    _
  %s6 = ssub.s32 1, %s4
  %s7 = scalar_select 0, %s6, %s4
  $region1: #{dbl_forward.1} parent=0
    #allocation3 [shape = 'u8[262144]{0}', space=vmem, size = 0x40000, scoped, tag = 'output window, operand 0']
    #allocation4 [shape = 's32[2]{0}', space=sflag, size = 0x8, scoped, tag = 'scoped memory for dbl_forward.1']
    %8 = vsyncpa [#allocation4], 0
    %s9 = scalar_lea.sflag [#allocation4], 1
    %10 = vsyncpa %s9, 0
    loop: start=0, step=1, limit=4
    $region2: #{dbl_forward.1} parent=1 // loop_pre_header
      _
    $region3: #{dbl_forward.1} parent=1 // loop_header
      %s12 = sphi 0, %s16
      %p13 = scmp.ge.s32.totalorder %s12, 4
      %s19 = sphi 0, %s31
      %s20 = sphi 0, %s27
      %s21 = sphi 0, %s19
      %s22 = sphi 0, %s20
      %s23 = sphi 0, %s21
      %s24 = sphi 0, %s22
      %s34 = sphi 0, %s36
      %s37 = sphi 0, %s34
      %s38 = sphi 0, %s37
      %s54 = sphi 0, %s38
      %s60 = sphi 0, %s62
      %s63 = sphi 0, %s60
      %s64 = sphi 0, %s63
      %s80 = sphi 0, %s64
      %s86 = sphi 0, %s88
      %s89 = sphi 0, %s86
      %s90 = sphi 0, %s89
      %s106 = sphi 0, %s90
      %s114 = sphi 0, %s116
      %s117 = sphi 0, %s114
      %s118 = sphi 0, %s117
      %s134 = sphi 0, %s118
    $region4: #{dbl_forward.1} parent=1 // loop_header_branch
      %15 = sbr.rel (%p13) target = $region8
    $region5: #{dbl_forward.1} parent=1 // loop_body
      %s17 = ssub.s32 %s12, 1
      %s18 = ssub.s32 %s12, 2
      %s25 = sadd.s32 1, %s20
      %p26 = scmp.ge.s32.totalorder %s25, 1
      %s27 = scalar_select %p26, 0, %s25
      %s28 = sadd.s32 1, %s19
      %s29 = scalar_select %p26, %s28, %s19
      %p30 = scmp.ge.s32.totalorder %s29, 2
      %s31 = scalar_select %p30, 0, %s29
      %s32 = ssub.s32 %s19, %s31
      %p33 = scmp.eq.s32.totalorder %s32, 0
      %s35 = sadd.s32 %s34, 1
      %s36 = scalar_select %p33, %s34, %s35
      %p39 = pneg %p33
      %p40 = scmp.eq.s32.totalorder %s12, 1
      %p41 = por %p39, %p40
      %p42 = scmp.ne.s32.totalorder %s34, %s37
      %p43 = scmp.eq.s32.totalorder %s12, 0
      %p44 = por %p42, %p43
      %p45 = scmp.ne.s32.totalorder %s34, %s37
      %p46 = scmp.eq.s32.totalorder %s17, 1
      %p47 = por %p45, %p46
      %p48 = scmp.ne.s32.totalorder %s37, %s38
      %p49 = scmp.eq.s32.totalorder %s17, 0
      %p50 = por %p48, %p49
      %p51 = scmp.ne.s32.totalorder %s37, %s38
      %p52 = scmp.eq.s32.totalorder %s18, 1
      %p53 = por %p51, %p52
      %p55 = scmp.ne.s32.totalorder %s38, %s54
      %p56 = scmp.eq.s32.totalorder %s18, 0
      %p57 = por %p55, %p56
      %s58 = ssub.s32 %s20, %s27
      %p59 = scmp.eq.s32.totalorder %s58, 0
      %s61 = sadd.s32 %s60, 1
      %s62 = scalar_select %p59, %s60, %s61
      %p65 = pneg %p59
      %p66 = scmp.eq.s32.totalorder %s12, 1
      %p67 = por %p65, %p66
      %p68 = scmp.ne.s32.totalorder %s60, %s63
      %p69 = scmp.eq.s32.totalorder %s12, 0
      %p70 = por %p68, %p69
      %p71 = scmp.ne.s32.totalorder %s60, %s63
      %p72 = scmp.eq.s32.totalorder %s17, 1
      %p73 = por %p71, %p72
      %p74 = scmp.ne.s32.totalorder %s63, %s64
      %p75 = scmp.eq.s32.totalorder %s17, 0
      %p76 = por %p74, %p75
      %p77 = scmp.ne.s32.totalorder %s63, %s64
      %p78 = scmp.eq.s32.totalorder %s18, 1
      %p79 = por %p77, %p78
      %p81 = scmp.ne.s32.totalorder %s64, %s80
      %p82 = scmp.eq.s32.totalorder %s18, 0
      %p83 = por %p81, %p82
      %s84 = ssub.s32 %s20, %s27
      %p85 = scmp.eq.s32.totalorder %s84, 0
      %s87 = sadd.s32 %s86, 1
      %s88 = scalar_select %p85, %s86, %s87
      %p91 = pneg %p85
      %p92 = scmp.eq.s32.totalorder %s12, 1
      %p93 = por %p91, %p92
      %p94 = scmp.ne.s32.totalorder %s86, %s89
      %p95 = scmp.eq.s32.totalorder %s12, 0
      %p96 = por %p94, %p95
      %p97 = scmp.ne.s32.totalorder %s86, %s89
      %p98 = scmp.eq.s32.totalorder %s17, 1
      %p99 = por %p97, %p98
      %p100 = scmp.ne.s32.totalorder %s89, %s90
      %p101 = scmp.eq.s32.totalorder %s17, 0
      %p102 = por %p100, %p101
      %p103 = scmp.ne.s32.totalorder %s89, %s90
      %p104 = scmp.eq.s32.totalorder %s18, 1
      %p105 = por %p103, %p104
      %p107 = scmp.ne.s32.totalorder %s90, %s106
      %p108 = scmp.eq.s32.totalorder %s18, 0
      %p109 = por %p107, %p108
      %s110 = ssub.s32 %s19, %s31
      %s111 = ssub.s32 %s20, %s27
      %s112 = sor.u32 %s110, %s111
      %p113 = scmp.eq.s32.totalorder %s112, 0
      %s115 = sadd.s32 %s114, 1
      %s116 = scalar_select %p113, %s114, %s115
      %p119 = pneg %p113
      %p120 = scmp.eq.s32.totalorder %s12, 1
      %p121 = por %p119, %p120
      %p122 = scmp.ne.s32.totalorder %s114, %s117
      %p123 = scmp.eq.s32.totalorder %s12, 0
      %p124 = por %p122, %p123
      %p125 = scmp.ne.s32.totalorder %s114, %s117
      %p126 = scmp.eq.s32.totalorder %s17, 1
      %p127 = por %p125, %p126
      %p128 = scmp.ne.s32.totalorder %s117, %s118
      %p129 = scmp.eq.s32.totalorder %s17, 0
      %p130 = por %p128, %p129
      %p131 = scmp.ne.s32.totalorder %s117, %s118
      %p132 = scmp.eq.s32.totalorder %s18, 1
      %p133 = por %p131, %p132
      %p135 = scmp.ne.s32.totalorder %s118, %s134
      %p136 = scmp.eq.s32.totalorder %s18, 0
      %p137 = por %p135, %p136
      %p138 = scmp.le.s32.totalorder 1, %s12
      %p139 = scmp.lt.s32.totalorder %s12, 3
      %p140 = pnand %p138, %p139
      %p141 = pneg %p140
      // Predicated region
      $region9: #{dbl_forward.1} parent=5 // pred_check
        _
      $region10: #{dbl_forward.1} parent=5 // pred_check_branch
        %143 = sbr.rel (%p140) target = $region12
      $region11: #{dbl_forward.1} parent=5 // pred_region
        %s144 = ssub.s32 %s12, 1
        // Predicated region
        $region13: #{dbl_forward.1} parent=11 // pred_check
          %p145 = pneg %p76
        $region14: #{dbl_forward.1} parent=11 // pred_check_branch
          %147 = sbr.rel (%p145) target = $region16
        $region15: #{dbl_forward.1} parent=11 // pred_region
          %p148 = scmp.lt.s32.totalorder %s22, 0
          %s149 = scalar_select %p148, %s22, 0
          %s150 = smul.addr %s149, 4
          %s151 = scalar_lea.vmem %s1, %s150
        $region16: #{dbl_forward.1} parent=11 // pred_fallthru
          _
        // Predicated region
        $region17: #{dbl_forward.1} parent=11 // pred_check
          %p152 = pneg %p102
        $region18: #{dbl_forward.1} parent=11 // pred_check_branch
          %154 = sbr.rel (%p152) target = $region20
        $region19: #{dbl_forward.1} parent=11 // pred_region
          %p155 = scmp.lt.s32.totalorder %s22, 0
          %s156 = scalar_select %p155, %s22, 0
          %s157 = scalar_lea.vmem %s2, %s156
        $region20: #{dbl_forward.1} parent=11 // pred_fallthru
          _
      $region12: #{dbl_forward.1} parent=5 // pred_fallthru
        _
      %p158 = scmp.lt.s32.totalorder %s12, 2
      // Predicated region
      $region21: #{dbl_forward.1} parent=5 // pred_check
        %p159 = pneg %p158
      $region22: #{dbl_forward.1} parent=5 // pred_check_branch
        %161 = sbr.rel (%p159) target = $region24
      $region23: #{dbl_forward.1} parent=5 // pred_region
        // Predicated region
        $region25: #{dbl_forward.1} parent=23 // pred_check
          %p162 = pneg %p44
        $region26: #{dbl_forward.1} parent=23 // pred_check_branch
          %164 = sbr.rel (%p162) target = $region28
        $region27: #{dbl_forward.1} parent=23 // pred_region
          %p165 = scmp.lt.s32.totalorder %s19, 1
          %s166 = scalar_select %p165, %s19, 1
          %s167 = smul.addr %s166, 54
          %s168 = smul.addr %s167, 4
          %s169 = scalar_lea.vmem %s0, %s168
        $region28: #{dbl_forward.1} parent=23 // pred_fallthru
          _
      $region24: #{dbl_forward.1} parent=5 // pred_fallthru
        _
      %p170 = scmp.le.s32.totalorder 1, %s12
      %p171 = scmp.lt.s32.totalorder %s12, 3
      %p172 = pnand %p170, %p171
      %p173 = pneg %p172
      // Predicated region
      $region29: #{dbl_forward.1} parent=5 // pred_check
        _
      $region30: #{dbl_forward.1} parent=5 // pred_check_branch
        %175 = sbr.rel (%p172) target = $region32
      $region31: #{dbl_forward.1} parent=5 // pred_region
        %s176 = ssub.s32 %s12, 1
        %p177 = scmp.lt.s32.totalorder %s21, 1
        %s178 = scalar_select %p177, %s21, 1
        %s179 = smul.addr %s178, 54
        %s180 = smul.addr %s179, 4
        %s181 = scalar_lea.vmem %s0, %s180
        %p182 = pneg %p50
        %p183 = pneg %p47
        %p184 = scmp.lt.s32.totalorder %s22, 0
        %s185 = scalar_select %p184, %s22, 0
        %s186 = smul.addr %s185, 4
        %s187 = scalar_lea.vmem %s1, %s186
        %p188 = pneg %p76
        %p189 = pneg %p73
        %p190 = scmp.lt.s32.totalorder %s22, 0
        %s191 = scalar_select %p190, %s22, 0
        %s192 = scalar_lea.vmem %s2, %s191
        %p193 = pneg %p102
        %p194 = pneg %p99
        %p195 = pneg %p130
        %p196 = pneg %p127
        %s197 = sand.u32 %s117, 1
        %s198 = scalar_lea.sflag [#allocation4], %s197
        %s199 = sand.u32 %s117, 1
        %s200 = smul.addr %s199, 256
        %s201 = scalar_lea.vmem [#allocation3], %s200
        %p202 = scmp.lt.s32.totalorder %s21, 1
        %s203 = scalar_select %p202, %s21, 1
        %s204 = smul.addr %s203, 54
        %s205 = smul.addr %s204, 4
        %s206 = scalar_lea.vmem %s0, %s205
        %p207 = scmp.lt.s32.totalorder %s22, 0
        %s208 = scalar_select %p207, %s22, 0
        %s209 = smul.addr %s208, 4
        %s210 = scalar_lea.vmem %s1, %s209
        %p211 = scmp.lt.s32.totalorder %s22, 0
        %s212 = scalar_select %p211, %s22, 0
        %s213 = scalar_lea.vmem %s2, %s212
        %v214 = vld [vmem:[%s206] sm:$0xf]
        %v215 = vld [vmem:[%s206 + $0x4] sm:$0xf]
        %v216 = vld [vmem:[%s206 + $0xc] sm:$0xf]
        %v217 = vld [vmem:[%s206 + $0x10] sm:$0xf]
        %v218 = vld [vmem:[%s206 + $0x18] sm:$0xf]
        %v219 = vld [vmem:[%s206 + $0x1c] sm:$0xf]
        %v220 = vld [vmem:[%s206 + $0x24] sm:$0xf]
        %v221 = vld [vmem:[%s206 + $0x28] sm:$0xf]
        %v222 = vld [vmem:[%s206 + $0x30] sm:$0xf]
        %v223 = vld [vmem:[%s206 + $0x34] sm:$0xf]
        %v224 = vld [vmem:[%s206 + $0x3c] sm:$0xf]
        %v225 = vld [vmem:[%s206 + $0x40] sm:$0xf]
        %v226 = vld [vmem:[%s206 + $0x48] sm:$0xf]
        %v227 = vld [vmem:[%s206 + $0x4c] sm:$0xf]
        %v228 = vld [vmem:[%s206 + $0x54] sm:$0xf]
        %v229 = vld [vmem:[%s206 + $0x58] sm:$0xf]
        %v230 = vld [vmem:[%s206 + $0x60] sm:$0xf]
        %v231 = vld [vmem:[%s206 + $0x64] sm:$0xf]
        %v232 = vld [vmem:[%s206 + $0x6c] sm:$0xf]
        %v233 = vld [vmem:[%s206 + $0x70] sm:$0xf]
        %v234 = vld [vmem:[%s206 + $0x78] sm:$0xf]
        %v235 = vld [vmem:[%s206 + $0x7c] sm:$0xf]
        %v236 = vld [vmem:[%s206 + $0x84] sm:$0xf]
        %v237 = vld [vmem:[%s206 + $0x88] sm:$0xf]
        %v238 = vld [vmem:[%s206 + $0x90] sm:$0xf]
        %v239 = vld [vmem:[%s206 + $0x94] sm:$0xf]
        %v240 = vld [vmem:[%s206 + $0x9c] sm:$0xf]
        %v241 = vld [vmem:[%s206 + $0xa0] sm:$0xf]
        %v242 = vld [vmem:[%s206 + $0xa8] sm:$0xf]
        %v243 = vld [vmem:[%s206 + $0xac] sm:$0xf]
        %v244 = vld [vmem:[%s206 + $0xb4] sm:$0xf]
        %v245 = vld [vmem:[%s206 + $0xb8] sm:$0xf]
        %v246 = vld [vmem:[%s210] sm:$0xf]
        %v247 = vld [vmem:[%s210 + $0x4] sm:$0xf]
        %v248 = vld [vmem:[%s210 + $0x8] sm:$0xf]
        %v249 = vld [vmem:[%s210 + $0xc] sm:$0xf]
        %v250 = vld [vmem:[%s210 + $0x10] sm:$0xf]
        %v251 = vld [vmem:[%s210 + $0x14] sm:$0xf]
        %v252 = vld [vmem:[%s210 + $0x18] sm:$0xf]
        %v253 = vld [vmem:[%s210 + $0x1c] sm:$0xf]
        %v254 = vld [vmem:[%s210 + $0x20] sm:$0xf]
        %v255 = vld [vmem:[%s210 + $0x24] sm:$0xf]
        %v256 = vld [vmem:[%s210 + $0x28] sm:$0xf]
        %v257 = vld [vmem:[%s210 + $0x2c] sm:$0xf]
        %v258 = vld [vmem:[%s210 + $0x30] sm:$0xf]
        %v259 = vld [vmem:[%s210 + $0x34] sm:$0xf]
        %v260 = vld [vmem:[%s210 + $0x38] sm:$0xf]
        %v261 = vld [vmem:[%s210 + $0x3c] sm:$0xf]
        %v294 = vunpack.c.l.b16 %v214
        %v295 = vunpack.c.l.b16 %v215
        %v296 = vunpack.c.l.b16 %v216
        %v297 = vunpack.c.l.b16 %v217
        %v298 = vunpack.c.l.b16 %v218
        %v299 = vunpack.c.l.b16 %v219
        %v300 = vunpack.c.l.b16 %v220
        %v301 = vunpack.c.l.b16 %v221
        %v302 = vunpack.c.l.b16 %v222
        %v303 = vunpack.c.l.b16 %v223
        %v304 = vunpack.c.l.b16 %v224
        %v305 = vunpack.c.l.b16 %v225
        %v306 = vunpack.c.l.b16 %v226
        %v307 = vunpack.c.l.b16 %v227
        %v308 = vunpack.c.l.b16 %v228
        %v309 = vunpack.c.l.b16 %v229
        %v310 = vunpack.c.l.b16 %v230
        %v311 = vunpack.c.l.b16 %v231
        %v312 = vunpack.c.l.b16 %v232
        %v313 = vunpack.c.l.b16 %v233
        %v314 = vunpack.c.l.b16 %v234
        %v315 = vunpack.c.l.b16 %v235
        %v316 = vunpack.c.l.b16 %v236
        %v317 = vunpack.c.l.b16 %v237
        %v318 = vunpack.c.l.b16 %v238
        %v319 = vunpack.c.l.b16 %v239
        %v320 = vunpack.c.l.b16 %v240
        %v321 = vunpack.c.l.b16 %v241
        %v322 = vunpack.c.l.b16 %v242
        %v323 = vunpack.c.l.b16 %v243
        %v324 = vunpack.c.l.b16 %v244
        %v325 = vunpack.c.l.b16 %v245
        %v326 = vpack.c.b16 %v295, %v294
        %v327 = vpack.c.b16 %v297, %v296
        %v328 = vpack.c.b16 %v299, %v298
        %v329 = vpack.c.b16 %v301, %v300
        %v330 = vpack.c.b16 %v303, %v302
        %v331 = vpack.c.b16 %v305, %v304
        %v332 = vpack.c.b16 %v307, %v306
        %v333 = vpack.c.b16 %v309, %v308
        %v334 = vpack.c.b16 %v311, %v310
        %v335 = vpack.c.b16 %v313, %v312
        %v336 = vpack.c.b16 %v315, %v314
        %v337 = vpack.c.b16 %v317, %v316
        %v338 = vpack.c.b16 %v319, %v318
        %v339 = vpack.c.b16 %v321, %v320
        %v340 = vpack.c.b16 %v323, %v322
        %v341 = vpack.c.b16 %v325, %v324
        %v374 = vunpack.c.l.b16 %v246
        %v375 = vunpack.c.l.b16 %v247
        %v376 = vunpack.c.l.b16 %v248
        %v377 = vunpack.c.l.b16 %v249
        %v378 = vunpack.c.l.b16 %v250
        %v379 = vunpack.c.l.b16 %v251
        %v380 = vunpack.c.l.b16 %v252
        %v381 = vunpack.c.l.b16 %v253
        %v382 = vunpack.c.l.b16 %v254
        %v383 = vunpack.c.l.b16 %v255
        %v384 = vunpack.c.l.b16 %v256
        %v385 = vunpack.c.l.b16 %v257
        %v386 = vunpack.c.l.b16 %v258
        %v387 = vunpack.c.l.b16 %v259
        %v388 = vunpack.c.l.b16 %v260
        %v389 = vunpack.c.l.b16 %v261
        %v390 = vpack.c.b16 %v375, %v374
        %v391 = vpack.c.b16 %v377, %v376
        %v392 = vpack.c.b16 %v379, %v378
        %v393 = vpack.c.b16 %v381, %v380
        %v394 = vpack.c.b16 %v383, %v382
        %v395 = vpack.c.b16 %v385, %v384
        %v396 = vpack.c.b16 %v387, %v386
        %v397 = vpack.c.b16 %v389, %v388
        %406 = vmatpush.bf16.msra.mxu0 %v397
        %407 = vmatpush.bf16.msra.mxu0 %v396
        %408 = vmatpush.bf16.msra.mxu0 %v395
        %409 = vmatpush.bf16.msra.mxu0 %v394
        %410 = vmatpush.bf16.msra.mxu0 %v393
        %411 = vmatpush.bf16.msra.mxu0 %v392
        %412 = vmatpush.bf16.msra.mxu0 %v391
        %413 = vmatpush.bf16.msra.mxu0 %v390
        %414 = vmatmul.bf16.gmra.mxu0 %v326
        %v415 = vpop.f32.mrf.mxu0
        %v416 = vadd.f32 0.0, %v415
        %v417 = vpop.f32.mrf.mxu0
        %v418 = vadd.f32 0.0, %v417
        %419 = vmatmul.bf16.gmra.mxu0 %v327
        %v420 = vpop.f32.mrf.mxu0
        %v421 = vadd.f32 0.0, %v420
        %v422 = vpop.f32.mrf.mxu0
        %v423 = vadd.f32 0.0, %v422
        %424 = vmatmul.bf16.gmra.mxu0 %v328
        %v425 = vpop.f32.mrf.mxu0
        %v426 = vadd.f32 0.0, %v425
        %v427 = vpop.f32.mrf.mxu0
        %v428 = vadd.f32 0.0, %v427
        %429 = vmatmul.bf16.gmra.mxu0 %v329
        %v430 = vpop.f32.mrf.mxu0
        %v431 = vadd.f32 0.0, %v430
        %v432 = vpop.f32.mrf.mxu0
        %v433 = vadd.f32 0.0, %v432
        %434 = vmatmul.bf16.gmra.mxu0 %v330
        %v435 = vpop.f32.mrf.mxu0
        %v436 = vadd.f32 0.0, %v435
        %v437 = vpop.f32.mrf.mxu0
        %v438 = vadd.f32 0.0, %v437
        %439 = vmatmul.bf16.gmra.mxu0 %v331
        %v440 = vpop.f32.mrf.mxu0
        %v441 = vadd.f32 0.0, %v440
        %v442 = vpop.f32.mrf.mxu0
        %v443 = vadd.f32 0.0, %v442
        %444 = vmatmul.bf16.gmra.mxu0 %v332
        %v445 = vpop.f32.mrf.mxu0
        %v446 = vadd.f32 0.0, %v445
        %v447 = vpop.f32.mrf.mxu0
        %v448 = vadd.f32 0.0, %v447
        %449 = vmatmul.bf16.gmra.mxu0 %v333
        %v450 = vpop.f32.mrf.mxu0
        %v451 = vadd.f32 0.0, %v450
        %v452 = vpop.f32.mrf.mxu0
        %v453 = vadd.f32 0.0, %v452
        %454 = vmatmul.bf16.gmra.mxu0 %v334
        %v455 = vpop.f32.mrf.mxu0
        %v456 = vadd.f32 0.0, %v455
        %v457 = vpop.f32.mrf.mxu0
        %v458 = vadd.f32 0.0, %v457
        %459 = vmatmul.bf16.gmra.mxu0 %v335
        %v460 = vpop.f32.mrf.mxu0
        %v461 = vadd.f32 0.0, %v460
        %v462 = vpop.f32.mrf.mxu0
        %v463 = vadd.f32 0.0, %v462
        %464 = vmatmul.bf16.gmra.mxu0 %v336
        %v465 = vpop.f32.mrf.mxu0
        %v466 = vadd.f32 0.0, %v465
        %v467 = vpop.f32.mrf.mxu0
        %v468 = vadd.f32 0.0, %v467
        %469 = vmatmul.bf16.gmra.mxu0 %v337
        %v470 = vpop.f32.mrf.mxu0
        %v471 = vadd.f32 0.0, %v470
        %v472 = vpop.f32.mrf.mxu0
        %v473 = vadd.f32 0.0, %v472
        %474 = vmatmul.bf16.gmra.mxu0 %v338
        %v475 = vpop.f32.mrf.mxu0
        %v476 = vadd.f32 0.0, %v475
        %v477 = vpop.f32.mrf.mxu0
        %v478 = vadd.f32 0.0, %v477
        %479 = vmatmul.bf16.gmra.mxu0 %v339
        %v480 = vpop.f32.mrf.mxu0
        %v481 = vadd.f32 0.0, %v480
        %v482 = vpop.f32.mrf.mxu0
        %v483 = vadd.f32 0.0, %v482
        %484 = vmatmul.bf16.gmra.mxu0 %v340
        %v485 = vpop.f32.mrf.mxu0
        %v486 = vadd.f32 0.0, %v485
        %v487 = vpop.f32.mrf.mxu0
        %v488 = vadd.f32 0.0, %v487
        %489 = vmatmul.bf16.gmra.mxu0 %v341
        %v490 = vpop.f32.mrf.mxu0
        %v491 = vadd.f32 0.0, %v490
        %v492 = vpop.f32.mrf.mxu0
        %v493 = vadd.f32 0.0, %v492
        %494 = vdwg.mxu0
        %495 = vst [vmem:[#allocation2] sm:$0xff] %v416
        %496 = vst [vmem:[#allocation2 + $0x8] sm:$0xff] %v418
        %497 = vst [vmem:[#allocation2 + $0x10] sm:$0xff] %v421
        %498 = vst [vmem:[#allocation2 + $0x18] sm:$0xff] %v423
        %499 = vst [vmem:[#allocation2 + $0x20] sm:$0xff] %v426
        %500 = vst [vmem:[#allocation2 + $0x28] sm:$0xff] %v428
        %501 = vst [vmem:[#allocation2 + $0x30] sm:$0xff] %v431
        %502 = vst [vmem:[#allocation2 + $0x38] sm:$0xff] %v433
        %503 = vst [vmem:[#allocation2 + $0x40] sm:$0xff] %v436
        %504 = vst [vmem:[#allocation2 + $0x48] sm:$0xff] %v438
        %505 = vst [vmem:[#allocation2 + $0x50] sm:$0xff] %v441
        %506 = vst [vmem:[#allocation2 + $0x58] sm:$0xff] %v443
        %507 = vst [vmem:[#allocation2 + $0x60] sm:$0xff] %v446
        %508 = vst [vmem:[#allocation2 + $0x68] sm:$0xff] %v448
        %509 = vst [vmem:[#allocation2 + $0x70] sm:$0xff] %v451
        %510 = vst [vmem:[#allocation2 + $0x78] sm:$0xff] %v453
        %511 = vst [vmem:[#allocation2 + $0x80] sm:$0xff] %v456
        %512 = vst [vmem:[#allocation2 + $0x88] sm:$0xff] %v458
        %513 = vst [vmem:[#allocation2 + $0x90] sm:$0xff] %v461
        %514 = vst [vmem:[#allocation2 + $0x98] sm:$0xff] %v463
        %515 = vst [vmem:[#allocation2 + $0xa0] sm:$0xff] %v466
        %516 = vst [vmem:[#allocation2 + $0xa8] sm:$0xff] %v468
        %517 = vst [vmem:[#allocation2 + $0xb0] sm:$0xff] %v471
        %518 = vst [vmem:[#allocation2 + $0xb8] sm:$0xff] %v473
        %519 = vst [vmem:[#allocation2 + $0xc0] sm:$0xff] %v476
        %520 = vst [vmem:[#allocation2 + $0xc8] sm:$0xff] %v478
        %521 = vst [vmem:[#allocation2 + $0xd0] sm:$0xff] %v481
        %522 = vst [vmem:[#allocation2 + $0xd8] sm:$0xff] %v483
        %523 = vst [vmem:[#allocation2 + $0xe0] sm:$0xff] %v486
        %524 = vst [vmem:[#allocation2 + $0xe8] sm:$0xff] %v488
        %525 = vst [vmem:[#allocation2 + $0xf0] sm:$0xff] %v491
        %526 = vst [vmem:[#allocation2 + $0xf8] sm:$0xff] %v493
        %v527 = vld [vmem:[%s206] sm:$0xf]
        %v528 = vld [vmem:[%s206 + $0x4] sm:$0xf]
        %v529 = vld [vmem:[%s206 + $0x8] sm:$0x1]
        %v530 = vld [vmem:[%s206 + $0xc] sm:$0xf]
        %v531 = vld [vmem:[%s206 + $0x10] sm:$0xf]
        %v532 = vld [vmem:[%s206 + $0x14] sm:$0x1]
        %v533 = vld [vmem:[%s206 + $0x18] sm:$0xf]
        %v534 = vld [vmem:[%s206 + $0x1c] sm:$0xf]
        %v535 = vld [vmem:[%s206 + $0x20] sm:$0x1]
        %v536 = vld [vmem:[%s206 + $0x24] sm:$0xf]
        %v537 = vld [vmem:[%s206 + $0x28] sm:$0xf]
        %v538 = vld [vmem:[%s206 + $0x2c] sm:$0x1]
        %v539 = vld [vmem:[%s206 + $0x30] sm:$0xf]
        %v540 = vld [vmem:[%s206 + $0x34] sm:$0xf]
        %v541 = vld [vmem:[%s206 + $0x38] sm:$0x1]
        %v542 = vld [vmem:[%s206 + $0x3c] sm:$0xf]
        %v543 = vld [vmem:[%s206 + $0x40] sm:$0xf]
        %v544 = vld [vmem:[%s206 + $0x44] sm:$0x1]
        %v545 = vld [vmem:[%s206 + $0x48] sm:$0xf]
        %v546 = vld [vmem:[%s206 + $0x4c] sm:$0xf]
        %v547 = vld [vmem:[%s206 + $0x50] sm:$0x1]
        %v548 = vld [vmem:[%s206 + $0x54] sm:$0xf]
        %v549 = vld [vmem:[%s206 + $0x58] sm:$0xf]
        %v550 = vld [vmem:[%s206 + $0x5c] sm:$0x1]
        %v551 = vld [vmem:[%s206 + $0x60] sm:$0xf]
        %v552 = vld [vmem:[%s206 + $0x64] sm:$0xf]
        %v553 = vld [vmem:[%s206 + $0x68] sm:$0x1]
        %v554 = vld [vmem:[%s206 + $0x6c] sm:$0xf]
        %v555 = vld [vmem:[%s206 + $0x70] sm:$0xf]
        %v556 = vld [vmem:[%s206 + $0x74] sm:$0x1]
        %v557 = vld [vmem:[%s206 + $0x78] sm:$0xf]
        %v558 = vld [vmem:[%s206 + $0x7c] sm:$0xf]
        %v559 = vld [vmem:[%s206 + $0x80] sm:$0x1]
        %v560 = vld [vmem:[%s206 + $0x84] sm:$0xf]
        %v561 = vld [vmem:[%s206 + $0x88] sm:$0xf]
        %v562 = vld [vmem:[%s206 + $0x8c] sm:$0x1]
        %v563 = vld [vmem:[%s206 + $0x90] sm:$0xf]
        %v564 = vld [vmem:[%s206 + $0x94] sm:$0xf]
        %v565 = vld [vmem:[%s206 + $0x98] sm:$0x1]
        %v566 = vld [vmem:[%s206 + $0x9c] sm:$0xf]
        %v567 = vld [vmem:[%s206 + $0xa0] sm:$0xf]
        %v568 = vld [vmem:[%s206 + $0xa4] sm:$0x1]
        %v569 = vld [vmem:[%s206 + $0xa8] sm:$0xf]
        %v570 = vld [vmem:[%s206 + $0xac] sm:$0xf]
        %v571 = vld [vmem:[%s206 + $0xb0] sm:$0x1]
        %v572 = vld [vmem:[%s206 + $0xb4] sm:$0xf]
        %v573 = vld [vmem:[%s206 + $0xb8] sm:$0xf]
        %v574 = vld [vmem:[%s206 + $0xbc] sm:$0x1]
        %vm575 = vsmask.f32 3328
        %vm576 = vsmask.f32 7440
        %vm577 = vmor %vm575, %vm576
        %v579 = vshrl.u32 %v527, 16
        %v581 = vrot.slane %v579, 4
        %v582 = vshll.u32 %v527, 16
        %v584 = vrot.slane %v582, 5
        %v585 = vor.u32 %v581, %v584
        %v586 = vrot.slane %v585, 4
        %v588 = vshll.u32 %v528, 16
        %v590 = vrot.slane %v588, 5
        %v591 = vsel %vm577, %v586, %v590
        %v592 = vshrl.u32 %v528, 16
        %v594 = vrot.slane %v592, 4
        %v595 = vor.u32 %v594, %v590
        %v596 = vrot.slane %v595, 4
        %v598 = vshll.u32 %v529, 16
        %v600 = vrot.slane %v598, 5
        %v601 = vsel %vm577, %v596, %v600
        %v603 = vshrl.u32 %v530, 16
        %v605 = vrot.slane %v603, 4
        %v606 = vshll.u32 %v530, 16
        %v608 = vrot.slane %v606, 5
        %v609 = vor.u32 %v605, %v608
        %v610 = vrot.slane %v609, 4
        %v612 = vshll.u32 %v531, 16
        %v614 = vrot.slane %v612, 5
        %v615 = vsel %vm577, %v610, %v614
        %v616 = vshrl.u32 %v531, 16
        %v618 = vrot.slane %v616, 4
        %v619 = vor.u32 %v618, %v614
        %v620 = vrot.slane %v619, 4
        %v622 = vshll.u32 %v532, 16
        %v624 = vrot.slane %v622, 5
        %v625 = vsel %vm577, %v620, %v624
        %v627 = vshrl.u32 %v533, 16
        %v629 = vrot.slane %v627, 4
        %v630 = vshll.u32 %v533, 16
        %v632 = vrot.slane %v630, 5
        %v633 = vor.u32 %v629, %v632
        %v634 = vrot.slane %v633, 4
        %v636 = vshll.u32 %v534, 16
        %v638 = vrot.slane %v636, 5
        %v639 = vsel %vm577, %v634, %v638
        %v640 = vshrl.u32 %v534, 16
        %v642 = vrot.slane %v640, 4
        %v643 = vor.u32 %v642, %v638
        %v644 = vrot.slane %v643, 4
        %v646 = vshll.u32 %v535, 16
        %v648 = vrot.slane %v646, 5
        %v649 = vsel %vm577, %v644, %v648
        %v651 = vshrl.u32 %v536, 16
        %v653 = vrot.slane %v651, 4
        %v654 = vshll.u32 %v536, 16
        %v656 = vrot.slane %v654, 5
        %v657 = vor.u32 %v653, %v656
        %v658 = vrot.slane %v657, 4
        %v660 = vshll.u32 %v537, 16
        %v662 = vrot.slane %v660, 5
        %v663 = vsel %vm577, %v658, %v662
        %v664 = vshrl.u32 %v537, 16
        %v666 = vrot.slane %v664, 4
        %v667 = vor.u32 %v666, %v662
        %v668 = vrot.slane %v667, 4
        %v670 = vshll.u32 %v538, 16
        %v672 = vrot.slane %v670, 5
        %v673 = vsel %vm577, %v668, %v672
        %v675 = vshrl.u32 %v539, 16
        %v677 = vrot.slane %v675, 4
        %v678 = vshll.u32 %v539, 16
        %v680 = vrot.slane %v678, 5
        %v681 = vor.u32 %v677, %v680
        %v682 = vrot.slane %v681, 4
        %v684 = vshll.u32 %v540, 16
        %v686 = vrot.slane %v684, 5
        %v687 = vsel %vm577, %v682, %v686
        %v688 = vshrl.u32 %v540, 16
        %v690 = vrot.slane %v688, 4
        %v691 = vor.u32 %v690, %v686
        %v692 = vrot.slane %v691, 4
        %v694 = vshll.u32 %v541, 16
        %v696 = vrot.slane %v694, 5
        %v697 = vsel %vm577, %v692, %v696
        %v699 = vshrl.u32 %v542, 16
        %v701 = vrot.slane %v699, 4
        %v702 = vshll.u32 %v542, 16
        %v704 = vrot.slane %v702, 5
        %v705 = vor.u32 %v701, %v704
        %v706 = vrot.slane %v705, 4
        %v708 = vshll.u32 %v543, 16
        %v710 = vrot.slane %v708, 5
        %v711 = vsel %vm577, %v706, %v710
        %v712 = vshrl.u32 %v543, 16
        %v714 = vrot.slane %v712, 4
        %v715 = vor.u32 %v714, %v710
        %v716 = vrot.slane %v715, 4
        %v718 = vshll.u32 %v544, 16
        %v720 = vrot.slane %v718, 5
        %v721 = vsel %vm577, %v716, %v720
        %v723 = vshrl.u32 %v545, 16
        %v725 = vrot.slane %v723, 4
        %v726 = vshll.u32 %v545, 16
        %v728 = vrot.slane %v726, 5
        %v729 = vor.u32 %v725, %v728
        %v730 = vrot.slane %v729, 4
        %v732 = vshll.u32 %v546, 16
        %v734 = vrot.slane %v732, 5
        %v735 = vsel %vm577, %v730, %v734
        %v736 = vshrl.u32 %v546, 16
        %v738 = vrot.slane %v736, 4
        %v739 = vor.u32 %v738, %v734
        %v740 = vrot.slane %v739, 4
        %v742 = vshll.u32 %v547, 16
        %v744 = vrot.slane %v742, 5
        %v745 = vsel %vm577, %v740, %v744
        %v747 = vshrl.u32 %v548, 16
        %v749 = vrot.slane %v747, 4
        %v750 = vshll.u32 %v548, 16
        %v752 = vrot.slane %v750, 5
        %v753 = vor.u32 %v749, %v752
        %v754 = vrot.slane %v753, 4
        %v756 = vshll.u32 %v549, 16
        %v758 = vrot.slane %v756, 5
        %v759 = vsel %vm577, %v754, %v758
        %v760 = vshrl.u32 %v549, 16
        %v762 = vrot.slane %v760, 4
        %v763 = vor.u32 %v762, %v758
        %v764 = vrot.slane %v763, 4
        %v766 = vshll.u32 %v550, 16
        %v768 = vrot.slane %v766, 5
        %v769 = vsel %vm577, %v764, %v768
        %v771 = vshrl.u32 %v551, 16
        %v773 = vrot.slane %v771, 4
        %v774 = vshll.u32 %v551, 16
        %v776 = vrot.slane %v774, 5
        %v777 = vor.u32 %v773, %v776
        %v778 = vrot.slane %v777, 4
        %v780 = vshll.u32 %v552, 16
        %v782 = vrot.slane %v780, 5
        %v783 = vsel %vm577, %v778, %v782
        %v784 = vshrl.u32 %v552, 16
        %v786 = vrot.slane %v784, 4
        %v787 = vor.u32 %v786, %v782
        %v788 = vrot.slane %v787, 4
        %v790 = vshll.u32 %v553, 16
        %v792 = vrot.slane %v790, 5
        %v793 = vsel %vm577, %v788, %v792
        %v795 = vshrl.u32 %v554, 16
        %v797 = vrot.slane %v795, 4
        %v798 = vshll.u32 %v554, 16
        %v800 = vrot.slane %v798, 5
        %v801 = vor.u32 %v797, %v800
        %v802 = vrot.slane %v801, 4
        %v804 = vshll.u32 %v555, 16
        %v806 = vrot.slane %v804, 5
        %v807 = vsel %vm577, %v802, %v806
        %v808 = vshrl.u32 %v555, 16
        %v810 = vrot.slane %v808, 4
        %v811 = vor.u32 %v810, %v806
        %v812 = vrot.slane %v811, 4
        %v814 = vshll.u32 %v556, 16
        %v816 = vrot.slane %v814, 5
        %v817 = vsel %vm577, %v812, %v816
        %v819 = vshrl.u32 %v557, 16
        %v821 = vrot.slane %v819, 4
        %v822 = vshll.u32 %v557, 16
        %v824 = vrot.slane %v822, 5
        %v825 = vor.u32 %v821, %v824
        %v826 = vrot.slane %v825, 4
        %v828 = vshll.u32 %v558, 16
        %v830 = vrot.slane %v828, 5
        %v831 = vsel %vm577, %v826, %v830
        %v832 = vshrl.u32 %v558, 16
        %v834 = vrot.slane %v832, 4
        %v835 = vor.u32 %v834, %v830
        %v836 = vrot.slane %v835, 4
        %v838 = vshll.u32 %v559, 16
        %v840 = vrot.slane %v838, 5
        %v841 = vsel %vm577, %v836, %v840
        %v843 = vshrl.u32 %v560, 16
        %v845 = vrot.slane %v843, 4
        %v846 = vshll.u32 %v560, 16
        %v848 = vrot.slane %v846, 5
        %v849 = vor.u32 %v845, %v848
        %v850 = vrot.slane %v849, 4
        %v852 = vshll.u32 %v561, 16
        %v854 = vrot.slane %v852, 5
        %v855 = vsel %vm577, %v850, %v854
        %v856 = vshrl.u32 %v561, 16
        %v858 = vrot.slane %v856, 4
        %v859 = vor.u32 %v858, %v854
        %v860 = vrot.slane %v859, 4
        %v862 = vshll.u32 %v562, 16
        %v864 = vrot.slane %v862, 5
        %v865 = vsel %vm577, %v860, %v864
        %v867 = vshrl.u32 %v563, 16
        %v869 = vrot.slane %v867, 4
        %v870 = vshll.u32 %v563, 16
        %v872 = vrot.slane %v870, 5
        %v873 = vor.u32 %v869, %v872
        %v874 = vrot.slane %v873, 4
        %v876 = vshll.u32 %v564, 16
        %v878 = vrot.slane %v876, 5
        %v879 = vsel %vm577, %v874, %v878
        %v880 = vshrl.u32 %v564, 16
        %v882 = vrot.slane %v880, 4
        %v883 = vor.u32 %v882, %v878
        %v884 = vrot.slane %v883, 4
        %v886 = vshll.u32 %v565, 16
        %v888 = vrot.slane %v886, 5
        %v889 = vsel %vm577, %v884, %v888
        %v891 = vshrl.u32 %v566, 16
        %v893 = vrot.slane %v891, 4
        %v894 = vshll.u32 %v566, 16
        %v896 = vrot.slane %v894, 5
        %v897 = vor.u32 %v893, %v896
        %v898 = vrot.slane %v897, 4
        %v900 = vshll.u32 %v567, 16
        %v902 = vrot.slane %v900, 5
        %v903 = vsel %vm577, %v898, %v902
        %v904 = vshrl.u32 %v567, 16
        %v906 = vrot.slane %v904, 4
        %v907 = vor.u32 %v906, %v902
        %v908 = vrot.slane %v907, 4
        %v910 = vshll.u32 %v568, 16
        %v912 = vrot.slane %v910, 5
        %v913 = vsel %vm577, %v908, %v912
        %v915 = vshrl.u32 %v569, 16
        %v917 = vrot.slane %v915, 4
        %v918 = vshll.u32 %v569, 16
        %v920 = vrot.slane %v918, 5
        %v921 = vor.u32 %v917, %v920
        %v922 = vrot.slane %v921, 4
        %v924 = vshll.u32 %v570, 16
        %v926 = vrot.slane %v924, 5
        %v927 = vsel %vm577, %v922, %v926
        %v928 = vshrl.u32 %v570, 16
        %v930 = vrot.slane %v928, 4
        %v931 = vor.u32 %v930, %v926
        %v932 = vrot.slane %v931, 4
        %v934 = vshll.u32 %v571, 16
        %v936 = vrot.slane %v934, 5
        %v937 = vsel %vm577, %v932, %v936
        %v939 = vshrl.u32 %v572, 16
        %v941 = vrot.slane %v939, 4
        %v942 = vshll.u32 %v572, 16
        %v944 = vrot.slane %v942, 5
        %v945 = vor.u32 %v941, %v944
        %v946 = vrot.slane %v945, 4
        %v948 = vshll.u32 %v573, 16
        %v950 = vrot.slane %v948, 5
        %v951 = vsel %vm577, %v946, %v950
        %v952 = vshrl.u32 %v573, 16
        %v954 = vrot.slane %v952, 4
        %v955 = vor.u32 %v954, %v950
        %v956 = vrot.slane %v955, 4
        %v958 = vshll.u32 %v574, 16
        %v960 = vrot.slane %v958, 5
        %v961 = vsel %vm577, %v956, %v960
        %s962 = scalar_lea.vmem %s210, 64
        %v963 = vld [vmem:[%s962] sm:$0xf]
        %v964 = vld [vmem:[%s962 + $0x4] sm:$0xf]
        %v965 = vld [vmem:[%s962 + $0x8] sm:$0xf]
        %v966 = vld [vmem:[%s962 + $0xc] sm:$0xf]
        %v967 = vld [vmem:[%s962 + $0x10] sm:$0xf]
        %v968 = vld [vmem:[%s962 + $0x14] sm:$0xf]
        %v969 = vld [vmem:[%s962 + $0x18] sm:$0xf]
        %v970 = vld [vmem:[%s962 + $0x1c] sm:$0xf]
        %v971 = vld [vmem:[%s962 + $0x20] sm:$0xf]
        %v972 = vld [vmem:[%s962 + $0x24] sm:$0xf]
        %v973 = vld [vmem:[%s962 + $0x28] sm:$0xf]
        %v974 = vld [vmem:[%s962 + $0x2c] sm:$0xf]
        %v975 = vld [vmem:[%s962 + $0x30] sm:$0xf]
        %v976 = vld [vmem:[%s962 + $0x34] sm:$0xf]
        %v977 = vld [vmem:[%s962 + $0x38] sm:$0xf]
        %v978 = vld [vmem:[%s962 + $0x3c] sm:$0xf]
        %v979 = vunpack.c.l.b16 %v591
        %v980 = vunpack.c.l.b16 %v601
        %v981 = vunpack.c.l.b16 %v615
        %v982 = vunpack.c.l.b16 %v625
        %v983 = vunpack.c.l.b16 %v639
        %v984 = vunpack.c.l.b16 %v649
        %v985 = vunpack.c.l.b16 %v663
        %v986 = vunpack.c.l.b16 %v673
        %v987 = vunpack.c.l.b16 %v687
        %v988 = vunpack.c.l.b16 %v697
        %v989 = vunpack.c.l.b16 %v711
        %v990 = vunpack.c.l.b16 %v721
        %v991 = vunpack.c.l.b16 %v735
        %v992 = vunpack.c.l.b16 %v745
        %v993 = vunpack.c.l.b16 %v759
        %v994 = vunpack.c.l.b16 %v769
        %v995 = vunpack.c.l.b16 %v783
        %v996 = vunpack.c.l.b16 %v793
        %v997 = vunpack.c.l.b16 %v807
        %v998 = vunpack.c.l.b16 %v817
        %v999 = vunpack.c.l.b16 %v831
        %v1000 = vunpack.c.l.b16 %v841
        %v1001 = vunpack.c.l.b16 %v855
        %v1002 = vunpack.c.l.b16 %v865
        %v1003 = vunpack.c.l.b16 %v879
        %v1004 = vunpack.c.l.b16 %v889
        %v1005 = vunpack.c.l.b16 %v903
        %v1006 = vunpack.c.l.b16 %v913
        %v1007 = vunpack.c.l.b16 %v927
        %v1008 = vunpack.c.l.b16 %v937
        %v1009 = vunpack.c.l.b16 %v951
        %v1010 = vunpack.c.l.b16 %v961
        %v1011 = vpack.c.b16 %v980, %v979
        %v1012 = vpack.c.b16 %v982, %v981
        %v1013 = vpack.c.b16 %v984, %v983
        %v1014 = vpack.c.b16 %v986, %v985
        %v1015 = vpack.c.b16 %v988, %v987
        %v1016 = vpack.c.b16 %v990, %v989
        %v1017 = vpack.c.b16 %v992, %v991
        %v1018 = vpack.c.b16 %v994, %v993
        %v1019 = vpack.c.b16 %v996, %v995
        %v1020 = vpack.c.b16 %v998, %v997
        %v1021 = vpack.c.b16 %v1000, %v999
        %v1022 = vpack.c.b16 %v1002, %v1001
        %v1023 = vpack.c.b16 %v1004, %v1003
        %v1024 = vpack.c.b16 %v1006, %v1005
        %v1025 = vpack.c.b16 %v1008, %v1007
        %v1026 = vpack.c.b16 %v1010, %v1009
        %v1059 = vunpack.c.l.b16 %v963
        %v1060 = vunpack.c.l.b16 %v964
        %v1061 = vunpack.c.l.b16 %v965
        %v1062 = vunpack.c.l.b16 %v966
        %v1063 = vunpack.c.l.b16 %v967
        %v1064 = vunpack.c.l.b16 %v968
        %v1065 = vunpack.c.l.b16 %v969
        %v1066 = vunpack.c.l.b16 %v970
        %v1067 = vunpack.c.l.b16 %v971
        %v1068 = vunpack.c.l.b16 %v972
        %v1069 = vunpack.c.l.b16 %v973
        %v1070 = vunpack.c.l.b16 %v974
        %v1071 = vunpack.c.l.b16 %v975
        %v1072 = vunpack.c.l.b16 %v976
        %v1073 = vunpack.c.l.b16 %v977
        %v1074 = vunpack.c.l.b16 %v978
        %v1075 = vpack.c.b16 %v1060, %v1059
        %v1076 = vpack.c.b16 %v1062, %v1061
        %v1077 = vpack.c.b16 %v1064, %v1063
        %v1078 = vpack.c.b16 %v1066, %v1065
        %v1079 = vpack.c.b16 %v1068, %v1067
        %v1080 = vpack.c.b16 %v1070, %v1069
        %v1081 = vpack.c.b16 %v1072, %v1071
        %v1082 = vpack.c.b16 %v1074, %v1073
        %1091 = vmatpush.bf16.msra.mxu0 %v1082
        %1092 = vmatpush.bf16.msra.mxu0 %v1081
        %1093 = vmatpush.bf16.msra.mxu0 %v1080
        %1094 = vmatpush.bf16.msra.mxu0 %v1079
        %1095 = vmatpush.bf16.msra.mxu0 %v1078
        %1096 = vmatpush.bf16.msra.mxu0 %v1077
        %1097 = vmatpush.bf16.msra.mxu0 %v1076
        %1098 = vmatpush.bf16.msra.mxu0 %v1075
        %1099 = vmatmul.bf16.gmra.mxu0 %v1011
        %v1100 = vpop.f32.mrf.mxu0
        %v1101 = vadd.f32 0.0, %v1100
        %v1102 = vpop.f32.mrf.mxu0
        %v1103 = vadd.f32 0.0, %v1102
        %1104 = vmatmul.bf16.gmra.mxu0 %v1012
        %v1105 = vpop.f32.mrf.mxu0
        %v1106 = vadd.f32 0.0, %v1105
        %v1107 = vpop.f32.mrf.mxu0
        %v1108 = vadd.f32 0.0, %v1107
        %1109 = vmatmul.bf16.gmra.mxu0 %v1013
        %v1110 = vpop.f32.mrf.mxu0
        %v1111 = vadd.f32 0.0, %v1110
        %v1112 = vpop.f32.mrf.mxu0
        %v1113 = vadd.f32 0.0, %v1112
        %1114 = vmatmul.bf16.gmra.mxu0 %v1014
        %v1115 = vpop.f32.mrf.mxu0
        %v1116 = vadd.f32 0.0, %v1115
        %v1117 = vpop.f32.mrf.mxu0
        %v1118 = vadd.f32 0.0, %v1117
        %1119 = vmatmul.bf16.gmra.mxu0 %v1015
        %v1120 = vpop.f32.mrf.mxu0
        %v1121 = vadd.f32 0.0, %v1120
        %v1122 = vpop.f32.mrf.mxu0
        %v1123 = vadd.f32 0.0, %v1122
        %1124 = vmatmul.bf16.gmra.mxu0 %v1016
        %v1125 = vpop.f32.mrf.mxu0
        %v1126 = vadd.f32 0.0, %v1125
        %v1127 = vpop.f32.mrf.mxu0
        %v1128 = vadd.f32 0.0, %v1127
        %1129 = vmatmul.bf16.gmra.mxu0 %v1017
        %v1130 = vpop.f32.mrf.mxu0
        %v1131 = vadd.f32 0.0, %v1130
        %v1132 = vpop.f32.mrf.mxu0
        %v1133 = vadd.f32 0.0, %v1132
        %1134 = vmatmul.bf16.gmra.mxu0 %v1018
        %v1135 = vpop.f32.mrf.mxu0
        %v1136 = vadd.f32 0.0, %v1135
        %v1137 = vpop.f32.mrf.mxu0
        %v1138 = vadd.f32 0.0, %v1137
        %1139 = vmatmul.bf16.gmra.mxu0 %v1019
        %v1140 = vpop.f32.mrf.mxu0
        %v1141 = vadd.f32 0.0, %v1140
        %v1142 = vpop.f32.mrf.mxu0
        %v1143 = vadd.f32 0.0, %v1142
        %1144 = vmatmul.bf16.gmra.mxu0 %v1020
        %v1145 = vpop.f32.mrf.mxu0
        %v1146 = vadd.f32 0.0, %v1145
        %v1147 = vpop.f32.mrf.mxu0
        %v1148 = vadd.f32 0.0, %v1147
        %1149 = vmatmul.bf16.gmra.mxu0 %v1021
        %v1150 = vpop.f32.mrf.mxu0
        %v1151 = vadd.f32 0.0, %v1150
        %v1152 = vpop.f32.mrf.mxu0
        %v1153 = vadd.f32 0.0, %v1152
        %1154 = vmatmul.bf16.gmra.mxu0 %v1022
        %v1155 = vpop.f32.mrf.mxu0
        %v1156 = vadd.f32 0.0, %v1155
        %v1157 = vpop.f32.mrf.mxu0
        %v1158 = vadd.f32 0.0, %v1157
        %1159 = vmatmul.bf16.gmra.mxu0 %v1023
        %v1160 = vpop.f32.mrf.mxu0
        %v1161 = vadd.f32 0.0, %v1160
        %v1162 = vpop.f32.mrf.mxu0
        %v1163 = vadd.f32 0.0, %v1162
        %1164 = vmatmul.bf16.gmra.mxu0 %v1024
        %v1165 = vpop.f32.mrf.mxu0
        %v1166 = vadd.f32 0.0, %v1165
        %v1167 = vpop.f32.mrf.mxu0
        %v1168 = vadd.f32 0.0, %v1167
        %1169 = vmatmul.bf16.gmra.mxu0 %v1025
        %v1170 = vpop.f32.mrf.mxu0
        %v1171 = vadd.f32 0.0, %v1170
        %v1172 = vpop.f32.mrf.mxu0
        %v1173 = vadd.f32 0.0, %v1172
        %1174 = vmatmul.bf16.gmra.mxu0 %v1026
        %v1175 = vpop.f32.mrf.mxu0
        %v1176 = vadd.f32 0.0, %v1175
        %v1177 = vpop.f32.mrf.mxu0
        %v1178 = vadd.f32 0.0, %v1177
        %1179 = vdwg.mxu0
        %v1180 = vld [vmem:[#allocation2] sm:$0xff]
        %v1181 = vld [vmem:[#allocation2 + $0x8] sm:$0xff]
        %v1182 = vld [vmem:[#allocation2 + $0x10] sm:$0xff]
        %v1183 = vld [vmem:[#allocation2 + $0x18] sm:$0xff]
        %v1184 = vld [vmem:[#allocation2 + $0x20] sm:$0xff]
        %v1185 = vld [vmem:[#allocation2 + $0x28] sm:$0xff]
        %v1186 = vld [vmem:[#allocation2 + $0x30] sm:$0xff]
        %v1187 = vld [vmem:[#allocation2 + $0x38] sm:$0xff]
        %v1188 = vld [vmem:[#allocation2 + $0x40] sm:$0xff]
        %v1189 = vld [vmem:[#allocation2 + $0x48] sm:$0xff]
        %v1190 = vld [vmem:[#allocation2 + $0x50] sm:$0xff]
        %v1191 = vld [vmem:[#allocation2 + $0x58] sm:$0xff]
        %v1192 = vld [vmem:[#allocation2 + $0x60] sm:$0xff]
        %v1193 = vld [vmem:[#allocation2 + $0x68] sm:$0xff]
        %v1194 = vld [vmem:[#allocation2 + $0x70] sm:$0xff]
        %v1195 = vld [vmem:[#allocation2 + $0x78] sm:$0xff]
        %v1196 = vld [vmem:[#allocation2 + $0x80] sm:$0xff]
        %v1197 = vld [vmem:[#allocation2 + $0x88] sm:$0xff]
        %v1198 = vld [vmem:[#allocation2 + $0x90] sm:$0xff]
        %v1199 = vld [vmem:[#allocation2 + $0x98] sm:$0xff]
        %v1200 = vld [vmem:[#allocation2 + $0xa0] sm:$0xff]
        %v1201 = vld [vmem:[#allocation2 + $0xa8] sm:$0xff]
        %v1202 = vld [vmem:[#allocation2 + $0xb0] sm:$0xff]
        %v1203 = vld [vmem:[#allocation2 + $0xb8] sm:$0xff]
        %v1204 = vld [vmem:[#allocation2 + $0xc0] sm:$0xff]
        %v1205 = vld [vmem:[#allocation2 + $0xc8] sm:$0xff]
        %v1206 = vld [vmem:[#allocation2 + $0xd0] sm:$0xff]
        %v1207 = vld [vmem:[#allocation2 + $0xd8] sm:$0xff]
        %v1208 = vld [vmem:[#allocation2 + $0xe0] sm:$0xff]
        %v1209 = vld [vmem:[#allocation2 + $0xe8] sm:$0xff]
        %v1210 = vld [vmem:[#allocation2 + $0xf0] sm:$0xff]
        %v1211 = vld [vmem:[#allocation2 + $0xf8] sm:$0xff]
        %v1212 = vadd.f32 %v1180, %v1101
        %v1213 = vadd.f32 %v1181, %v1103
        %v1214 = vadd.f32 %v1182, %v1106
        %v1215 = vadd.f32 %v1183, %v1108
        %v1216 = vadd.f32 %v1184, %v1111
        %v1217 = vadd.f32 %v1185, %v1113
        %v1218 = vadd.f32 %v1186, %v1116
        %v1219 = vadd.f32 %v1187, %v1118
        %v1220 = vadd.f32 %v1188, %v1121
        %v1221 = vadd.f32 %v1189, %v1123
        %v1222 = vadd.f32 %v1190, %v1126
        %v1223 = vadd.f32 %v1191, %v1128
        %v1224 = vadd.f32 %v1192, %v1131
        %v1225 = vadd.f32 %v1193, %v1133
        %v1226 = vadd.f32 %v1194, %v1136
        %v1227 = vadd.f32 %v1195, %v1138
        %v1228 = vadd.f32 %v1196, %v1141
        %v1229 = vadd.f32 %v1197, %v1143
        %v1230 = vadd.f32 %v1198, %v1146
        %v1231 = vadd.f32 %v1199, %v1148
        %v1232 = vadd.f32 %v1200, %v1151
        %v1233 = vadd.f32 %v1201, %v1153
        %v1234 = vadd.f32 %v1202, %v1156
        %v1235 = vadd.f32 %v1203, %v1158
        %v1236 = vadd.f32 %v1204, %v1161
        %v1237 = vadd.f32 %v1205, %v1163
        %v1238 = vadd.f32 %v1206, %v1166
        %v1239 = vadd.f32 %v1207, %v1168
        %v1240 = vadd.f32 %v1208, %v1171
        %v1241 = vadd.f32 %v1209, %v1173
        %v1242 = vadd.f32 %v1210, %v1176
        %v1243 = vadd.f32 %v1211, %v1178
        %1244 = vst [vmem:[#allocation2] sm:$0xff] %v1212
        %1245 = vst [vmem:[#allocation2 + $0x8] sm:$0xff] %v1213
        %1246 = vst [vmem:[#allocation2 + $0x10] sm:$0xff] %v1214
        %1247 = vst [vmem:[#allocation2 + $0x18] sm:$0xff] %v1215
        %1248 = vst [vmem:[#allocation2 + $0x20] sm:$0xff] %v1216
        %1249 = vst [vmem:[#allocation2 + $0x28] sm:$0xff] %v1217
        %1250 = vst [vmem:[#allocation2 + $0x30] sm:$0xff] %v1218
        %1251 = vst [vmem:[#allocation2 + $0x38] sm:$0xff] %v1219
        %1252 = vst [vmem:[#allocation2 + $0x40] sm:$0xff] %v1220
        %1253 = vst [vmem:[#allocation2 + $0x48] sm:$0xff] %v1221
        %1254 = vst [vmem:[#allocation2 + $0x50] sm:$0xff] %v1222
        %1255 = vst [vmem:[#allocation2 + $0x58] sm:$0xff] %v1223
        %1256 = vst [vmem:[#allocation2 + $0x60] sm:$0xff] %v1224
        %1257 = vst [vmem:[#allocation2 + $0x68] sm:$0xff] %v1225
        %1258 = vst [vmem:[#allocation2 + $0x70] sm:$0xff] %v1226
        %1259 = vst [vmem:[#allocation2 + $0x78] sm:$0xff] %v1227
        %1260 = vst [vmem:[#allocation2 + $0x80] sm:$0xff] %v1228
        %1261 = vst [vmem:[#allocation2 + $0x88] sm:$0xff] %v1229
        %1262 = vst [vmem:[#allocation2 + $0x90] sm:$0xff] %v1230
        %1263 = vst [vmem:[#allocation2 + $0x98] sm:$0xff] %v1231
        %1264 = vst [vmem:[#allocation2 + $0xa0] sm:$0xff] %v1232
        %1265 = vst [vmem:[#allocation2 + $0xa8] sm:$0xff] %v1233
        %1266 = vst [vmem:[#allocation2 + $0xb0] sm:$0xff] %v1234
        %1267 = vst [vmem:[#allocation2 + $0xb8] sm:$0xff] %v1235
        %1268 = vst [vmem:[#allocation2 + $0xc0] sm:$0xff] %v1236
        %1269 = vst [vmem:[#allocation2 + $0xc8] sm:$0xff] %v1237
        %1270 = vst [vmem:[#allocation2 + $0xd0] sm:$0xff] %v1238
        %1271 = vst [vmem:[#allocation2 + $0xd8] sm:$0xff] %v1239
        %1272 = vst [vmem:[#allocation2 + $0xe0] sm:$0xff] %v1240
        %1273 = vst [vmem:[#allocation2 + $0xe8] sm:$0xff] %v1241
        %1274 = vst [vmem:[#allocation2 + $0xf0] sm:$0xff] %v1242
        %1275 = vst [vmem:[#allocation2 + $0xf8] sm:$0xff] %v1243
        %v1276 = vld [vmem:[%s206] sm:$0xe]
        %v1277 = vld [vmem:[%s206 + $0x4] sm:$0xf]
        %v1278 = vld [vmem:[%s206 + $0x8] sm:$0x1]
        %v1279 = vld [vmem:[%s206 + $0xc] sm:$0xe]
        %v1280 = vld [vmem:[%s206 + $0x10] sm:$0xf]
        %v1281 = vld [vmem:[%s206 + $0x14] sm:$0x1]
        %v1282 = vld [vmem:[%s206 + $0x18] sm:$0xe]
        %v1283 = vld [vmem:[%s206 + $0x1c] sm:$0xf]
        %v1284 = vld [vmem:[%s206 + $0x20] sm:$0x1]
        %v1285 = vld [vmem:[%s206 + $0x24] sm:$0xe]
        %v1286 = vld [vmem:[%s206 + $0x28] sm:$0xf]
        %v1287 = vld [vmem:[%s206 + $0x2c] sm:$0x1]
        %v1288 = vld [vmem:[%s206 + $0x30] sm:$0xe]
        %v1289 = vld [vmem:[%s206 + $0x34] sm:$0xf]
        %v1290 = vld [vmem:[%s206 + $0x38] sm:$0x1]
        %v1291 = vld [vmem:[%s206 + $0x3c] sm:$0xe]
        %v1292 = vld [vmem:[%s206 + $0x40] sm:$0xf]
        %v1293 = vld [vmem:[%s206 + $0x44] sm:$0x1]
        %v1294 = vld [vmem:[%s206 + $0x48] sm:$0xe]
        %v1295 = vld [vmem:[%s206 + $0x4c] sm:$0xf]
        %v1296 = vld [vmem:[%s206 + $0x50] sm:$0x1]
        %v1297 = vld [vmem:[%s206 + $0x54] sm:$0xe]
        %v1298 = vld [vmem:[%s206 + $0x58] sm:$0xf]
        %v1299 = vld [vmem:[%s206 + $0x5c] sm:$0x1]
        %v1300 = vld [vmem:[%s206 + $0x60] sm:$0xe]
        %v1301 = vld [vmem:[%s206 + $0x64] sm:$0xf]
        %v1302 = vld [vmem:[%s206 + $0x68] sm:$0x1]
        %v1303 = vld [vmem:[%s206 + $0x6c] sm:$0xe]
        %v1304 = vld [vmem:[%s206 + $0x70] sm:$0xf]
        %v1305 = vld [vmem:[%s206 + $0x74] sm:$0x1]
        %v1306 = vld [vmem:[%s206 + $0x78] sm:$0xe]
        %v1307 = vld [vmem:[%s206 + $0x7c] sm:$0xf]
        %v1308 = vld [vmem:[%s206 + $0x80] sm:$0x1]
        %v1309 = vld [vmem:[%s206 + $0x84] sm:$0xe]
        %v1310 = vld [vmem:[%s206 + $0x88] sm:$0xf]
        %v1311 = vld [vmem:[%s206 + $0x8c] sm:$0x1]
        %v1312 = vld [vmem:[%s206 + $0x90] sm:$0xe]
        %v1313 = vld [vmem:[%s206 + $0x94] sm:$0xf]
        %v1314 = vld [vmem:[%s206 + $0x98] sm:$0x1]
        %v1315 = vld [vmem:[%s206 + $0x9c] sm:$0xe]
        %v1316 = vld [vmem:[%s206 + $0xa0] sm:$0xf]
        %v1317 = vld [vmem:[%s206 + $0xa4] sm:$0x1]
        %v1318 = vld [vmem:[%s206 + $0xa8] sm:$0xe]
        %v1319 = vld [vmem:[%s206 + $0xac] sm:$0xf]
        %v1320 = vld [vmem:[%s206 + $0xb0] sm:$0x1]
        %v1321 = vld [vmem:[%s206 + $0xb4] sm:$0xe]
        %v1322 = vld [vmem:[%s206 + $0xb8] sm:$0xf]
        %v1323 = vld [vmem:[%s206 + $0xbc] sm:$0x1]
        %vm1372 = vcmask 1042432
        %vm1373 = vcmask 1046532
        %vm1374 = vmor %vm1372, %vm1373
        %v1375 = vrot.slane %v1276, 5
        %v1376 = vrot.slane %v1375, 4
        %v1377 = vrot.slane %v1277, 5
        %v1378 = vsel %vm1374, %v1376, %v1377
        %v1379 = vrot.slane %v1377, 4
        %v1380 = vrot.slane %v1278, 5
        %v1381 = vsel %vm1374, %v1379, %v1380
        %v1382 = vrot.slane %v1279, 5
        %v1383 = vrot.slane %v1382, 4
        %v1384 = vrot.slane %v1280, 5
        %v1385 = vsel %vm1374, %v1383, %v1384
        %v1386 = vrot.slane %v1384, 4
        %v1387 = vrot.slane %v1281, 5
        %v1388 = vsel %vm1374, %v1386, %v1387
        %v1389 = vrot.slane %v1282, 5
        %v1390 = vrot.slane %v1389, 4
        %v1391 = vrot.slane %v1283, 5
        %v1392 = vsel %vm1374, %v1390, %v1391
        %v1393 = vrot.slane %v1391, 4
        %v1394 = vrot.slane %v1284, 5
        %v1395 = vsel %vm1374, %v1393, %v1394
        %v1396 = vrot.slane %v1285, 5
        %v1397 = vrot.slane %v1396, 4
        %v1398 = vrot.slane %v1286, 5
        %v1399 = vsel %vm1374, %v1397, %v1398
        %v1400 = vrot.slane %v1398, 4
        %v1401 = vrot.slane %v1287, 5
        %v1402 = vsel %vm1374, %v1400, %v1401
        %v1403 = vrot.slane %v1288, 5
        %v1404 = vrot.slane %v1403, 4
        %v1405 = vrot.slane %v1289, 5
        %v1406 = vsel %vm1374, %v1404, %v1405
        %v1407 = vrot.slane %v1405, 4
        %v1408 = vrot.slane %v1290, 5
        %v1409 = vsel %vm1374, %v1407, %v1408
        %v1410 = vrot.slane %v1291, 5
        %v1411 = vrot.slane %v1410, 4
        %v1412 = vrot.slane %v1292, 5
        %v1413 = vsel %vm1374, %v1411, %v1412
        %v1414 = vrot.slane %v1412, 4
        %v1415 = vrot.slane %v1293, 5
        %v1416 = vsel %vm1374, %v1414, %v1415
        %v1417 = vrot.slane %v1294, 5
        %v1418 = vrot.slane %v1417, 4
        %v1419 = vrot.slane %v1295, 5
        %v1420 = vsel %vm1374, %v1418, %v1419
        %v1421 = vrot.slane %v1419, 4
        %v1422 = vrot.slane %v1296, 5
        %v1423 = vsel %vm1374, %v1421, %v1422
        %v1424 = vrot.slane %v1297, 5
        %v1425 = vrot.slane %v1424, 4
        %v1426 = vrot.slane %v1298, 5
        %v1427 = vsel %vm1374, %v1425, %v1426
        %v1428 = vrot.slane %v1426, 4
        %v1429 = vrot.slane %v1299, 5
        %v1430 = vsel %vm1374, %v1428, %v1429
        %v1431 = vrot.slane %v1300, 5
        %v1432 = vrot.slane %v1431, 4
        %v1433 = vrot.slane %v1301, 5
        %v1434 = vsel %vm1374, %v1432, %v1433
        %v1435 = vrot.slane %v1433, 4
        %v1436 = vrot.slane %v1302, 5
        %v1437 = vsel %vm1374, %v1435, %v1436
        %v1438 = vrot.slane %v1303, 5
        %v1439 = vrot.slane %v1438, 4
        %v1440 = vrot.slane %v1304, 5
        %v1441 = vsel %vm1374, %v1439, %v1440
        %v1442 = vrot.slane %v1440, 4
        %v1443 = vrot.slane %v1305, 5
        %v1444 = vsel %vm1374, %v1442, %v1443
        %v1445 = vrot.slane %v1306, 5
        %v1446 = vrot.slane %v1445, 4
        %v1447 = vrot.slane %v1307, 5
        %v1448 = vsel %vm1374, %v1446, %v1447
        %v1449 = vrot.slane %v1447, 4
        %v1450 = vrot.slane %v1308, 5
        %v1451 = vsel %vm1374, %v1449, %v1450
        %v1452 = vrot.slane %v1309, 5
        %v1453 = vrot.slane %v1452, 4
        %v1454 = vrot.slane %v1310, 5
        %v1455 = vsel %vm1374, %v1453, %v1454
        %v1456 = vrot.slane %v1454, 4
        %v1457 = vrot.slane %v1311, 5
        %v1458 = vsel %vm1374, %v1456, %v1457
        %v1459 = vrot.slane %v1312, 5
        %v1460 = vrot.slane %v1459, 4
        %v1461 = vrot.slane %v1313, 5
        %v1462 = vsel %vm1374, %v1460, %v1461
        %v1463 = vrot.slane %v1461, 4
        %v1464 = vrot.slane %v1314, 5
        %v1465 = vsel %vm1374, %v1463, %v1464
        %v1466 = vrot.slane %v1315, 5
        %v1467 = vrot.slane %v1466, 4
        %v1468 = vrot.slane %v1316, 5
        %v1469 = vsel %vm1374, %v1467, %v1468
        %v1470 = vrot.slane %v1468, 4
        %v1471 = vrot.slane %v1317, 5
        %v1472 = vsel %vm1374, %v1470, %v1471
        %v1473 = vrot.slane %v1318, 5
        %v1474 = vrot.slane %v1473, 4
        %v1475 = vrot.slane %v1319, 5
        %v1476 = vsel %vm1374, %v1474, %v1475
        %v1477 = vrot.slane %v1475, 4
        %v1478 = vrot.slane %v1320, 5
        %v1479 = vsel %vm1374, %v1477, %v1478
        %v1480 = vrot.slane %v1321, 5
        %v1481 = vrot.slane %v1480, 4
        %v1482 = vrot.slane %v1322, 5
        %v1483 = vsel %vm1374, %v1481, %v1482
        %v1484 = vrot.slane %v1482, 4
        %v1485 = vrot.slane %v1323, 5
        %v1486 = vsel %vm1374, %v1484, %v1485
        %s1487 = scalar_lea.vmem %s210, 128
        %v1488 = vld [vmem:[%s1487] sm:$0xf]
        %v1489 = vld [vmem:[%s1487 + $0x4] sm:$0xf]
        %v1490 = vld [vmem:[%s1487 + $0x8] sm:$0xf]
        %v1491 = vld [vmem:[%s1487 + $0xc] sm:$0xf]
        %v1492 = vld [vmem:[%s1487 + $0x10] sm:$0xf]
        %v1493 = vld [vmem:[%s1487 + $0x14] sm:$0xf]
        %v1494 = vld [vmem:[%s1487 + $0x18] sm:$0xf]
        %v1495 = vld [vmem:[%s1487 + $0x1c] sm:$0xf]
        %v1496 = vld [vmem:[%s1487 + $0x20] sm:$0xf]
        %v1497 = vld [vmem:[%s1487 + $0x24] sm:$0xf]
        %v1498 = vld [vmem:[%s1487 + $0x28] sm:$0xf]
        %v1499 = vld [vmem:[%s1487 + $0x2c] sm:$0xf]
        %v1500 = vld [vmem:[%s1487 + $0x30] sm:$0xf]
        %v1501 = vld [vmem:[%s1487 + $0x34] sm:$0xf]
        %v1502 = vld [vmem:[%s1487 + $0x38] sm:$0xf]
        %v1503 = vld [vmem:[%s1487 + $0x3c] sm:$0xf]
        %v1504 = vunpack.c.l.b16 %v1378
        %v1505 = vunpack.c.l.b16 %v1381
        %v1506 = vunpack.c.l.b16 %v1385
        %v1507 = vunpack.c.l.b16 %v1388
        %v1508 = vunpack.c.l.b16 %v1392
        %v1509 = vunpack.c.l.b16 %v1395
        %v1510 = vunpack.c.l.b16 %v1399
        %v1511 = vunpack.c.l.b16 %v1402
        %v1512 = vunpack.c.l.b16 %v1406
        %v1513 = vunpack.c.l.b16 %v1409
        %v1514 = vunpack.c.l.b16 %v1413
        %v1515 = vunpack.c.l.b16 %v1416
        %v1516 = vunpack.c.l.b16 %v1420
        %v1517 = vunpack.c.l.b16 %v1423
        %v1518 = vunpack.c.l.b16 %v1427
        %v1519 = vunpack.c.l.b16 %v1430
        %v1520 = vunpack.c.l.b16 %v1434
        %v1521 = vunpack.c.l.b16 %v1437
        %v1522 = vunpack.c.l.b16 %v1441
        %v1523 = vunpack.c.l.b16 %v1444
        %v1524 = vunpack.c.l.b16 %v1448
        %v1525 = vunpack.c.l.b16 %v1451
        %v1526 = vunpack.c.l.b16 %v1455
        %v1527 = vunpack.c.l.b16 %v1458
        %v1528 = vunpack.c.l.b16 %v1462
        %v1529 = vunpack.c.l.b16 %v1465
        %v1530 = vunpack.c.l.b16 %v1469
        %v1531 = vunpack.c.l.b16 %v1472
        %v1532 = vunpack.c.l.b16 %v1476
        %v1533 = vunpack.c.l.b16 %v1479
        %v1534 = vunpack.c.l.b16 %v1483
        %v1535 = vunpack.c.l.b16 %v1486
        %v1536 = vpack.c.b16 %v1505, %v1504
        %v1537 = vpack.c.b16 %v1507, %v1506
        %v1538 = vpack.c.b16 %v1509, %v1508
        %v1539 = vpack.c.b16 %v1511, %v1510
        %v1540 = vpack.c.b16 %v1513, %v1512
        %v1541 = vpack.c.b16 %v1515, %v1514
        %v1542 = vpack.c.b16 %v1517, %v1516
        %v1543 = vpack.c.b16 %v1519, %v1518
        %v1544 = vpack.c.b16 %v1521, %v1520
        %v1545 = vpack.c.b16 %v1523, %v1522
        %v1546 = vpack.c.b16 %v1525, %v1524
        %v1547 = vpack.c.b16 %v1527, %v1526
        %v1548 = vpack.c.b16 %v1529, %v1528
        %v1549 = vpack.c.b16 %v1531, %v1530
        %v1550 = vpack.c.b16 %v1533, %v1532
        %v1551 = vpack.c.b16 %v1535, %v1534
        %v1584 = vunpack.c.l.b16 %v1488
        %v1585 = vunpack.c.l.b16 %v1489
        %v1586 = vunpack.c.l.b16 %v1490
        %v1587 = vunpack.c.l.b16 %v1491
        %v1588 = vunpack.c.l.b16 %v1492
        %v1589 = vunpack.c.l.b16 %v1493
        %v1590 = vunpack.c.l.b16 %v1494
        %v1591 = vunpack.c.l.b16 %v1495
        %v1592 = vunpack.c.l.b16 %v1496
        %v1593 = vunpack.c.l.b16 %v1497
        %v1594 = vunpack.c.l.b16 %v1498
        %v1595 = vunpack.c.l.b16 %v1499
        %v1596 = vunpack.c.l.b16 %v1500
        %v1597 = vunpack.c.l.b16 %v1501
        %v1598 = vunpack.c.l.b16 %v1502
        %v1599 = vunpack.c.l.b16 %v1503
        %v1600 = vpack.c.b16 %v1585, %v1584
        %v1601 = vpack.c.b16 %v1587, %v1586
        %v1602 = vpack.c.b16 %v1589, %v1588
        %v1603 = vpack.c.b16 %v1591, %v1590
        %v1604 = vpack.c.b16 %v1593, %v1592
        %v1605 = vpack.c.b16 %v1595, %v1594
        %v1606 = vpack.c.b16 %v1597, %v1596
        %v1607 = vpack.c.b16 %v1599, %v1598
        %1616 = vmatpush.bf16.msra.mxu0 %v1607
        %1617 = vmatpush.bf16.msra.mxu0 %v1606
        %1618 = vmatpush.bf16.msra.mxu0 %v1605
        %1619 = vmatpush.bf16.msra.mxu0 %v1604
        %1620 = vmatpush.bf16.msra.mxu0 %v1603
        %1621 = vmatpush.bf16.msra.mxu0 %v1602
        %1622 = vmatpush.bf16.msra.mxu0 %v1601
        %1623 = vmatpush.bf16.msra.mxu0 %v1600
        %1624 = vmatmul.bf16.gmra.mxu0 %v1536
        %v1625 = vpop.f32.mrf.mxu0
        %v1626 = vadd.f32 0.0, %v1625
        %v1627 = vpop.f32.mrf.mxu0
        %v1628 = vadd.f32 0.0, %v1627
        %1629 = vmatmul.bf16.gmra.mxu0 %v1537
        %v1630 = vpop.f32.mrf.mxu0
        %v1631 = vadd.f32 0.0, %v1630
        %v1632 = vpop.f32.mrf.mxu0
        %v1633 = vadd.f32 0.0, %v1632
        %1634 = vmatmul.bf16.gmra.mxu0 %v1538
        %v1635 = vpop.f32.mrf.mxu0
        %v1636 = vadd.f32 0.0, %v1635
        %v1637 = vpop.f32.mrf.mxu0
        %v1638 = vadd.f32 0.0, %v1637
        %1639 = vmatmul.bf16.gmra.mxu0 %v1539
        %v1640 = vpop.f32.mrf.mxu0
        %v1641 = vadd.f32 0.0, %v1640
        %v1642 = vpop.f32.mrf.mxu0
        %v1643 = vadd.f32 0.0, %v1642
        %1644 = vmatmul.bf16.gmra.mxu0 %v1540
        %v1645 = vpop.f32.mrf.mxu0
        %v1646 = vadd.f32 0.0, %v1645
        %v1647 = vpop.f32.mrf.mxu0
        %v1648 = vadd.f32 0.0, %v1647
        %1649 = vmatmul.bf16.gmra.mxu0 %v1541
        %v1650 = vpop.f32.mrf.mxu0
        %v1651 = vadd.f32 0.0, %v1650
        %v1652 = vpop.f32.mrf.mxu0
        %v1653 = vadd.f32 0.0, %v1652
        %1654 = vmatmul.bf16.gmra.mxu0 %v1542
        %v1655 = vpop.f32.mrf.mxu0
        %v1656 = vadd.f32 0.0, %v1655
        %v1657 = vpop.f32.mrf.mxu0
        %v1658 = vadd.f32 0.0, %v1657
        %1659 = vmatmul.bf16.gmra.mxu0 %v1543
        %v1660 = vpop.f32.mrf.mxu0
        %v1661 = vadd.f32 0.0, %v1660
        %v1662 = vpop.f32.mrf.mxu0
        %v1663 = vadd.f32 0.0, %v1662
        %1664 = vmatmul.bf16.gmra.mxu0 %v1544
        %v1665 = vpop.f32.mrf.mxu0
        %v1666 = vadd.f32 0.0, %v1665
        %v1667 = vpop.f32.mrf.mxu0
        %v1668 = vadd.f32 0.0, %v1667
        %1669 = vmatmul.bf16.gmra.mxu0 %v1545
        %v1670 = vpop.f32.mrf.mxu0
        %v1671 = vadd.f32 0.0, %v1670
        %v1672 = vpop.f32.mrf.mxu0
        %v1673 = vadd.f32 0.0, %v1672
        %1674 = vmatmul.bf16.gmra.mxu0 %v1546
        %v1675 = vpop.f32.mrf.mxu0
        %v1676 = vadd.f32 0.0, %v1675
        %v1677 = vpop.f32.mrf.mxu0
        %v1678 = vadd.f32 0.0, %v1677
        %1679 = vmatmul.bf16.gmra.mxu0 %v1547
        %v1680 = vpop.f32.mrf.mxu0
        %v1681 = vadd.f32 0.0, %v1680
        %v1682 = vpop.f32.mrf.mxu0
        %v1683 = vadd.f32 0.0, %v1682
        %1684 = vmatmul.bf16.gmra.mxu0 %v1548
        %v1685 = vpop.f32.mrf.mxu0
        %v1686 = vadd.f32 0.0, %v1685
        %v1687 = vpop.f32.mrf.mxu0
        %v1688 = vadd.f32 0.0, %v1687
        %1689 = vmatmul.bf16.gmra.mxu0 %v1549
        %v1690 = vpop.f32.mrf.mxu0
        %v1691 = vadd.f32 0.0, %v1690
        %v1692 = vpop.f32.mrf.mxu0
        %v1693 = vadd.f32 0.0, %v1692
        %1694 = vmatmul.bf16.gmra.mxu0 %v1550
        %v1695 = vpop.f32.mrf.mxu0
        %v1696 = vadd.f32 0.0, %v1695
        %v1697 = vpop.f32.mrf.mxu0
        %v1698 = vadd.f32 0.0, %v1697
        %1699 = vmatmul.bf16.gmra.mxu0 %v1551
        %v1700 = vpop.f32.mrf.mxu0
        %v1701 = vadd.f32 0.0, %v1700
        %v1702 = vpop.f32.mrf.mxu0
        %v1703 = vadd.f32 0.0, %v1702
        %1704 = vdwg.mxu0
        %v1705 = vld [vmem:[#allocation2] sm:$0xff]
        %v1706 = vld [vmem:[#allocation2 + $0x8] sm:$0xff]
        %v1707 = vld [vmem:[#allocation2 + $0x10] sm:$0xff]
        %v1708 = vld [vmem:[#allocation2 + $0x18] sm:$0xff]
        %v1709 = vld [vmem:[#allocation2 + $0x20] sm:$0xff]
        %v1710 = vld [vmem:[#allocation2 + $0x28] sm:$0xff]
        %v1711 = vld [vmem:[#allocation2 + $0x30] sm:$0xff]
        %v1712 = vld [vmem:[#allocation2 + $0x38] sm:$0xff]
        %v1713 = vld [vmem:[#allocation2 + $0x40] sm:$0xff]
        %v1714 = vld [vmem:[#allocation2 + $0x48] sm:$0xff]
        %v1715 = vld [vmem:[#allocation2 + $0x50] sm:$0xff]
        %v1716 = vld [vmem:[#allocation2 + $0x58] sm:$0xff]
        %v1717 = vld [vmem:[#allocation2 + $0x60] sm:$0xff]
        %v1718 = vld [vmem:[#allocation2 + $0x68] sm:$0xff]
        %v1719 = vld [vmem:[#allocation2 + $0x70] sm:$0xff]
        %v1720 = vld [vmem:[#allocation2 + $0x78] sm:$0xff]
        %v1721 = vld [vmem:[#allocation2 + $0x80] sm:$0xff]
        %v1722 = vld [vmem:[#allocation2 + $0x88] sm:$0xff]
        %v1723 = vld [vmem:[#allocation2 + $0x90] sm:$0xff]
        %v1724 = vld [vmem:[#allocation2 + $0x98] sm:$0xff]
        %v1725 = vld [vmem:[#allocation2 + $0xa0] sm:$0xff]
        %v1726 = vld [vmem:[#allocation2 + $0xa8] sm:$0xff]
        %v1727 = vld [vmem:[#allocation2 + $0xb0] sm:$0xff]
        %v1728 = vld [vmem:[#allocation2 + $0xb8] sm:$0xff]
        %v1729 = vld [vmem:[#allocation2 + $0xc0] sm:$0xff]
        %v1730 = vld [vmem:[#allocation2 + $0xc8] sm:$0xff]
        %v1731 = vld [vmem:[#allocation2 + $0xd0] sm:$0xff]
        %v1732 = vld [vmem:[#allocation2 + $0xd8] sm:$0xff]
        %v1733 = vld [vmem:[#allocation2 + $0xe0] sm:$0xff]
        %v1734 = vld [vmem:[#allocation2 + $0xe8] sm:$0xff]
        %v1735 = vld [vmem:[#allocation2 + $0xf0] sm:$0xff]
        %v1736 = vld [vmem:[#allocation2 + $0xf8] sm:$0xff]
        %v1737 = vadd.f32 %v1705, %v1626
        %v1738 = vadd.f32 %v1706, %v1628
        %v1739 = vadd.f32 %v1707, %v1631
        %v1740 = vadd.f32 %v1708, %v1633
        %v1741 = vadd.f32 %v1709, %v1636
        %v1742 = vadd.f32 %v1710, %v1638
        %v1743 = vadd.f32 %v1711, %v1641
        %v1744 = vadd.f32 %v1712, %v1643
        %v1745 = vadd.f32 %v1713, %v1646
        %v1746 = vadd.f32 %v1714, %v1648
        %v1747 = vadd.f32 %v1715, %v1651
        %v1748 = vadd.f32 %v1716, %v1653
        %v1749 = vadd.f32 %v1717, %v1656
        %v1750 = vadd.f32 %v1718, %v1658
        %v1751 = vadd.f32 %v1719, %v1661
        %v1752 = vadd.f32 %v1720, %v1663
        %v1753 = vadd.f32 %v1721, %v1666
        %v1754 = vadd.f32 %v1722, %v1668
        %v1755 = vadd.f32 %v1723, %v1671
        %v1756 = vadd.f32 %v1724, %v1673
        %v1757 = vadd.f32 %v1725, %v1676
        %v1758 = vadd.f32 %v1726, %v1678
        %v1759 = vadd.f32 %v1727, %v1681
        %v1760 = vadd.f32 %v1728, %v1683
        %v1761 = vadd.f32 %v1729, %v1686
        %v1762 = vadd.f32 %v1730, %v1688
        %v1763 = vadd.f32 %v1731, %v1691
        %v1764 = vadd.f32 %v1732, %v1693
        %v1765 = vadd.f32 %v1733, %v1696
        %v1766 = vadd.f32 %v1734, %v1698
        %v1767 = vadd.f32 %v1735, %v1701
        %v1768 = vadd.f32 %v1736, %v1703
        %1769 = vst [vmem:[#allocation2] sm:$0xff] %v1737
        %1770 = vst [vmem:[#allocation2 + $0x8] sm:$0xff] %v1738
        %1771 = vst [vmem:[#allocation2 + $0x10] sm:$0xff] %v1739
        %1772 = vst [vmem:[#allocation2 + $0x18] sm:$0xff] %v1740
        %1773 = vst [vmem:[#allocation2 + $0x20] sm:$0xff] %v1741
        %1774 = vst [vmem:[#allocation2 + $0x28] sm:$0xff] %v1742
        %1775 = vst [vmem:[#allocation2 + $0x30] sm:$0xff] %v1743
        %1776 = vst [vmem:[#allocation2 + $0x38] sm:$0xff] %v1744
        %1777 = vst [vmem:[#allocation2 + $0x40] sm:$0xff] %v1745
        %1778 = vst [vmem:[#allocation2 + $0x48] sm:$0xff] %v1746
        %1779 = vst [vmem:[#allocation2 + $0x50] sm:$0xff] %v1747
        %1780 = vst [vmem:[#allocation2 + $0x58] sm:$0xff] %v1748
        %1781 = vst [vmem:[#allocation2 + $0x60] sm:$0xff] %v1749
        %1782 = vst [vmem:[#allocation2 + $0x68] sm:$0xff] %v1750
        %1783 = vst [vmem:[#allocation2 + $0x70] sm:$0xff] %v1751
        %1784 = vst [vmem:[#allocation2 + $0x78] sm:$0xff] %v1752
        %1785 = vst [vmem:[#allocation2 + $0x80] sm:$0xff] %v1753
        %1786 = vst [vmem:[#allocation2 + $0x88] sm:$0xff] %v1754
        %1787 = vst [vmem:[#allocation2 + $0x90] sm:$0xff] %v1755
        %1788 = vst [vmem:[#allocation2 + $0x98] sm:$0xff] %v1756
        %1789 = vst [vmem:[#allocation2 + $0xa0] sm:$0xff] %v1757
        %1790 = vst [vmem:[#allocation2 + $0xa8] sm:$0xff] %v1758
        %1791 = vst [vmem:[#allocation2 + $0xb0] sm:$0xff] %v1759
        %1792 = vst [vmem:[#allocation2 + $0xb8] sm:$0xff] %v1760
        %1793 = vst [vmem:[#allocation2 + $0xc0] sm:$0xff] %v1761
        %1794 = vst [vmem:[#allocation2 + $0xc8] sm:$0xff] %v1762
        %1795 = vst [vmem:[#allocation2 + $0xd0] sm:$0xff] %v1763
        %1796 = vst [vmem:[#allocation2 + $0xd8] sm:$0xff] %v1764
        %1797 = vst [vmem:[#allocation2 + $0xe0] sm:$0xff] %v1765
        %1798 = vst [vmem:[#allocation2 + $0xe8] sm:$0xff] %v1766
        %1799 = vst [vmem:[#allocation2 + $0xf0] sm:$0xff] %v1767
        %1800 = vst [vmem:[#allocation2 + $0xf8] sm:$0xff] %v1768
        %s1801 = scalar_lea.vmem %s206, 12
        %v1802 = vld [vmem:[%s1801] sm:$0xf]
        %v1803 = vld [vmem:[%s1801 + $0x4] sm:$0xf]
        %v1804 = vld [vmem:[%s1801 + $0xc] sm:$0xf]
        %v1805 = vld [vmem:[%s1801 + $0x10] sm:$0xf]
        %v1806 = vld [vmem:[%s1801 + $0x18] sm:$0xf]
        %v1807 = vld [vmem:[%s1801 + $0x1c] sm:$0xf]
        %v1808 = vld [vmem:[%s1801 + $0x24] sm:$0xf]
        %v1809 = vld [vmem:[%s1801 + $0x28] sm:$0xf]
        %v1810 = vld [vmem:[%s1801 + $0x30] sm:$0xf]
        %v1811 = vld [vmem:[%s1801 + $0x34] sm:$0xf]
        %v1812 = vld [vmem:[%s1801 + $0x3c] sm:$0xf]
        %v1813 = vld [vmem:[%s1801 + $0x40] sm:$0xf]
        %v1814 = vld [vmem:[%s1801 + $0x48] sm:$0xf]
        %v1815 = vld [vmem:[%s1801 + $0x4c] sm:$0xf]
        %v1816 = vld [vmem:[%s1801 + $0x54] sm:$0xf]
        %v1817 = vld [vmem:[%s1801 + $0x58] sm:$0xf]
        %v1818 = vld [vmem:[%s1801 + $0x60] sm:$0xf]
        %v1819 = vld [vmem:[%s1801 + $0x64] sm:$0xf]
        %v1820 = vld [vmem:[%s1801 + $0x6c] sm:$0xf]
        %v1821 = vld [vmem:[%s1801 + $0x70] sm:$0xf]
        %v1822 = vld [vmem:[%s1801 + $0x78] sm:$0xf]
        %v1823 = vld [vmem:[%s1801 + $0x7c] sm:$0xf]
        %v1824 = vld [vmem:[%s1801 + $0x84] sm:$0xf]
        %v1825 = vld [vmem:[%s1801 + $0x88] sm:$0xf]
        %v1826 = vld [vmem:[%s1801 + $0x90] sm:$0xf]
        %v1827 = vld [vmem:[%s1801 + $0x94] sm:$0xf]
        %v1828 = vld [vmem:[%s1801 + $0x9c] sm:$0xf]
        %v1829 = vld [vmem:[%s1801 + $0xa0] sm:$0xf]
        %v1830 = vld [vmem:[%s1801 + $0xa8] sm:$0xf]
        %v1831 = vld [vmem:[%s1801 + $0xac] sm:$0xf]
        %v1832 = vld [vmem:[%s1801 + $0xb4] sm:$0xf]
        %v1833 = vld [vmem:[%s1801 + $0xb8] sm:$0xf]
        %s1834 = scalar_lea.vmem %s210, 192
        %v1835 = vld [vmem:[%s1834] sm:$0xf]
        %v1836 = vld [vmem:[%s1834 + $0x4] sm:$0xf]
        %v1837 = vld [vmem:[%s1834 + $0x8] sm:$0xf]
        %v1838 = vld [vmem:[%s1834 + $0xc] sm:$0xf]
        %v1839 = vld [vmem:[%s1834 + $0x10] sm:$0xf]
        %v1840 = vld [vmem:[%s1834 + $0x14] sm:$0xf]
        %v1841 = vld [vmem:[%s1834 + $0x18] sm:$0xf]
        %v1842 = vld [vmem:[%s1834 + $0x1c] sm:$0xf]
        %v1843 = vld [vmem:[%s1834 + $0x20] sm:$0xf]
        %v1844 = vld [vmem:[%s1834 + $0x24] sm:$0xf]
        %v1845 = vld [vmem:[%s1834 + $0x28] sm:$0xf]
        %v1846 = vld [vmem:[%s1834 + $0x2c] sm:$0xf]
        %v1847 = vld [vmem:[%s1834 + $0x30] sm:$0xf]
        %v1848 = vld [vmem:[%s1834 + $0x34] sm:$0xf]
        %v1849 = vld [vmem:[%s1834 + $0x38] sm:$0xf]
        %v1850 = vld [vmem:[%s1834 + $0x3c] sm:$0xf]
        %v1883 = vunpack.c.l.b16 %v1802
        %v1884 = vunpack.c.l.b16 %v1803
        %v1885 = vunpack.c.l.b16 %v1804
        %v1886 = vunpack.c.l.b16 %v1805
        %v1887 = vunpack.c.l.b16 %v1806
        %v1888 = vunpack.c.l.b16 %v1807
        %v1889 = vunpack.c.l.b16 %v1808
        %v1890 = vunpack.c.l.b16 %v1809
        %v1891 = vunpack.c.l.b16 %v1810
        %v1892 = vunpack.c.l.b16 %v1811
        %v1893 = vunpack.c.l.b16 %v1812
        %v1894 = vunpack.c.l.b16 %v1813
        %v1895 = vunpack.c.l.b16 %v1814
        %v1896 = vunpack.c.l.b16 %v1815
        %v1897 = vunpack.c.l.b16 %v1816
        %v1898 = vunpack.c.l.b16 %v1817
        %v1899 = vunpack.c.l.b16 %v1818
        %v1900 = vunpack.c.l.b16 %v1819
        %v1901 = vunpack.c.l.b16 %v1820
        %v1902 = vunpack.c.l.b16 %v1821
        %v1903 = vunpack.c.l.b16 %v1822
        %v1904 = vunpack.c.l.b16 %v1823
        %v1905 = vunpack.c.l.b16 %v1824
        %v1906 = vunpack.c.l.b16 %v1825
        %v1907 = vunpack.c.l.b16 %v1826
        %v1908 = vunpack.c.l.b16 %v1827
        %v1909 = vunpack.c.l.b16 %v1828
        %v1910 = vunpack.c.l.b16 %v1829
        %v1911 = vunpack.c.l.b16 %v1830
        %v1912 = vunpack.c.l.b16 %v1831
        %v1913 = vunpack.c.l.b16 %v1832
        %v1914 = vunpack.c.l.b16 %v1833
        %v1915 = vpack.c.b16 %v1884, %v1883
        %v1916 = vpack.c.b16 %v1886, %v1885
        %v1917 = vpack.c.b16 %v1888, %v1887
        %v1918 = vpack.c.b16 %v1890, %v1889
        %v1919 = vpack.c.b16 %v1892, %v1891
        %v1920 = vpack.c.b16 %v1894, %v1893
        %v1921 = vpack.c.b16 %v1896, %v1895
        %v1922 = vpack.c.b16 %v1898, %v1897
        %v1923 = vpack.c.b16 %v1900, %v1899
        %v1924 = vpack.c.b16 %v1902, %v1901
        %v1925 = vpack.c.b16 %v1904, %v1903
        %v1926 = vpack.c.b16 %v1906, %v1905
        %v1927 = vpack.c.b16 %v1908, %v1907
        %v1928 = vpack.c.b16 %v1910, %v1909
        %v1929 = vpack.c.b16 %v1912, %v1911
        %v1930 = vpack.c.b16 %v1914, %v1913
        %v1963 = vunpack.c.l.b16 %v1835
        %v1964 = vunpack.c.l.b16 %v1836
        %v1965 = vunpack.c.l.b16 %v1837
        %v1966 = vunpack.c.l.b16 %v1838
        %v1967 = vunpack.c.l.b16 %v1839
        %v1968 = vunpack.c.l.b16 %v1840
        %v1969 = vunpack.c.l.b16 %v1841
        %v1970 = vunpack.c.l.b16 %v1842
        %v1971 = vunpack.c.l.b16 %v1843
        %v1972 = vunpack.c.l.b16 %v1844
        %v1973 = vunpack.c.l.b16 %v1845
        %v1974 = vunpack.c.l.b16 %v1846
        %v1975 = vunpack.c.l.b16 %v1847
        %v1976 = vunpack.c.l.b16 %v1848
        %v1977 = vunpack.c.l.b16 %v1849
        %v1978 = vunpack.c.l.b16 %v1850
        %v1979 = vpack.c.b16 %v1964, %v1963
        %v1980 = vpack.c.b16 %v1966, %v1965
        %v1981 = vpack.c.b16 %v1968, %v1967
        %v1982 = vpack.c.b16 %v1970, %v1969
        %v1983 = vpack.c.b16 %v1972, %v1971
        %v1984 = vpack.c.b16 %v1974, %v1973
        %v1985 = vpack.c.b16 %v1976, %v1975
        %v1986 = vpack.c.b16 %v1978, %v1977
        %1995 = vmatpush.bf16.msra.mxu0 %v1986
        %1996 = vmatpush.bf16.msra.mxu0 %v1985
        %1997 = vmatpush.bf16.msra.mxu0 %v1984
        %1998 = vmatpush.bf16.msra.mxu0 %v1983
        %1999 = vmatpush.bf16.msra.mxu0 %v1982
        %2000 = vmatpush.bf16.msra.mxu0 %v1981
        %2001 = vmatpush.bf16.msra.mxu0 %v1980
        %2002 = vmatpush.bf16.msra.mxu0 %v1979
        %2003 = vmatmul.bf16.gmra.mxu0 %v1915
        %v2004 = vpop.f32.mrf.mxu0
        %v2005 = vadd.f32 0.0, %v2004
        %v2006 = vpop.f32.mrf.mxu0
        %v2007 = vadd.f32 0.0, %v2006
        %2008 = vmatmul.bf16.gmra.mxu0 %v1916
        %v2009 = vpop.f32.mrf.mxu0
        %v2010 = vadd.f32 0.0, %v2009
        %v2011 = vpop.f32.mrf.mxu0
        %v2012 = vadd.f32 0.0, %v2011
        %2013 = vmatmul.bf16.gmra.mxu0 %v1917
        %v2014 = vpop.f32.mrf.mxu0
        %v2015 = vadd.f32 0.0, %v2014
        %v2016 = vpop.f32.mrf.mxu0
        %v2017 = vadd.f32 0.0, %v2016
        %2018 = vmatmul.bf16.gmra.mxu0 %v1918
        %v2019 = vpop.f32.mrf.mxu0
        %v2020 = vadd.f32 0.0, %v2019
        %v2021 = vpop.f32.mrf.mxu0
        %v2022 = vadd.f32 0.0, %v2021
        %2023 = vmatmul.bf16.gmra.mxu0 %v1919
        %v2024 = vpop.f32.mrf.mxu0
        %v2025 = vadd.f32 0.0, %v2024
        %v2026 = vpop.f32.mrf.mxu0
        %v2027 = vadd.f32 0.0, %v2026
        %2028 = vmatmul.bf16.gmra.mxu0 %v1920
        %v2029 = vpop.f32.mrf.mxu0
        %v2030 = vadd.f32 0.0, %v2029
        %v2031 = vpop.f32.mrf.mxu0
        %v2032 = vadd.f32 0.0, %v2031
        %2033 = vmatmul.bf16.gmra.mxu0 %v1921
        %v2034 = vpop.f32.mrf.mxu0
        %v2035 = vadd.f32 0.0, %v2034
        %v2036 = vpop.f32.mrf.mxu0
        %v2037 = vadd.f32 0.0, %v2036
        %2038 = vmatmul.bf16.gmra.mxu0 %v1922
        %v2039 = vpop.f32.mrf.mxu0
        %v2040 = vadd.f32 0.0, %v2039
        %v2041 = vpop.f32.mrf.mxu0
        %v2042 = vadd.f32 0.0, %v2041
        %2043 = vmatmul.bf16.gmra.mxu0 %v1923
        %v2044 = vpop.f32.mrf.mxu0
        %v2045 = vadd.f32 0.0, %v2044
        %v2046 = vpop.f32.mrf.mxu0
        %v2047 = vadd.f32 0.0, %v2046
        %2048 = vmatmul.bf16.gmra.mxu0 %v1924
        %v2049 = vpop.f32.mrf.mxu0
        %v2050 = vadd.f32 0.0, %v2049
        %v2051 = vpop.f32.mrf.mxu0
        %v2052 = vadd.f32 0.0, %v2051
        %2053 = vmatmul.bf16.gmra.mxu0 %v1925
        %v2054 = vpop.f32.mrf.mxu0
        %v2055 = vadd.f32 0.0, %v2054
        %v2056 = vpop.f32.mrf.mxu0
        %v2057 = vadd.f32 0.0, %v2056
        %2058 = vmatmul.bf16.gmra.mxu0 %v1926
        %v2059 = vpop.f32.mrf.mxu0
        %v2060 = vadd.f32 0.0, %v2059
        %v2061 = vpop.f32.mrf.mxu0
        %v2062 = vadd.f32 0.0, %v2061
        %2063 = vmatmul.bf16.gmra.mxu0 %v1927
        %v2064 = vpop.f32.mrf.mxu0
        %v2065 = vadd.f32 0.0, %v2064
        %v2066 = vpop.f32.mrf.mxu0
        %v2067 = vadd.f32 0.0, %v2066
        %2068 = vmatmul.bf16.gmra.mxu0 %v1928
        %v2069 = vpop.f32.mrf.mxu0
        %v2070 = vadd.f32 0.0, %v2069
        %v2071 = vpop.f32.mrf.mxu0
        %v2072 = vadd.f32 0.0, %v2071
        %2073 = vmatmul.bf16.gmra.mxu0 %v1929
        %v2074 = vpop.f32.mrf.mxu0
        %v2075 = vadd.f32 0.0, %v2074
        %v2076 = vpop.f32.mrf.mxu0
        %v2077 = vadd.f32 0.0, %v2076
        %2078 = vmatmul.bf16.gmra.mxu0 %v1930
        %v2079 = vpop.f32.mrf.mxu0
        %v2080 = vadd.f32 0.0, %v2079
        %v2081 = vpop.f32.mrf.mxu0
        %v2082 = vadd.f32 0.0, %v2081
        %2083 = vdwg.mxu0
        %v2084 = vld [vmem:[#allocation2] sm:$0xff]
        %v2085 = vld [vmem:[#allocation2 + $0x8] sm:$0xff]
        %v2086 = vld [vmem:[#allocation2 + $0x10] sm:$0xff]
        %v2087 = vld [vmem:[#allocation2 + $0x18] sm:$0xff]
        %v2088 = vld [vmem:[#allocation2 + $0x20] sm:$0xff]
        %v2089 = vld [vmem:[#allocation2 + $0x28] sm:$0xff]
        %v2090 = vld [vmem:[#allocation2 + $0x30] sm:$0xff]
        %v2091 = vld [vmem:[#allocation2 + $0x38] sm:$0xff]
        %v2092 = vld [vmem:[#allocation2 + $0x40] sm:$0xff]
        %v2093 = vld [vmem:[#allocation2 + $0x48] sm:$0xff]
        %v2094 = vld [vmem:[#allocation2 + $0x50] sm:$0xff]
        %v2095 = vld [vmem:[#allocation2 + $0x58] sm:$0xff]
        %v2096 = vld [vmem:[#allocation2 + $0x60] sm:$0xff]
        %v2097 = vld [vmem:[#allocation2 + $0x68] sm:$0xff]
        %v2098 = vld [vmem:[#allocation2 + $0x70] sm:$0xff]
        %v2099 = vld [vmem:[#allocation2 + $0x78] sm:$0xff]
        %v2100 = vld [vmem:[#allocation2 + $0x80] sm:$0xff]
        %v2101 = vld [vmem:[#allocation2 + $0x88] sm:$0xff]
        %v2102 = vld [vmem:[#allocation2 + $0x90] sm:$0xff]
        %v2103 = vld [vmem:[#allocation2 + $0x98] sm:$0xff]
        %v2104 = vld [vmem:[#allocation2 + $0xa0] sm:$0xff]
        %v2105 = vld [vmem:[#allocation2 + $0xa8] sm:$0xff]
        %v2106 = vld [vmem:[#allocation2 + $0xb0] sm:$0xff]
        %v2107 = vld [vmem:[#allocation2 + $0xb8] sm:$0xff]
        %v2108 = vld [vmem:[#allocation2 + $0xc0] sm:$0xff]
        %v2109 = vld [vmem:[#allocation2 + $0xc8] sm:$0xff]
        %v2110 = vld [vmem:[#allocation2 + $0xd0] sm:$0xff]
        %v2111 = vld [vmem:[#allocation2 + $0xd8] sm:$0xff]
        %v2112 = vld [vmem:[#allocation2 + $0xe0] sm:$0xff]
        %v2113 = vld [vmem:[#allocation2 + $0xe8] sm:$0xff]
        %v2114 = vld [vmem:[#allocation2 + $0xf0] sm:$0xff]
        %v2115 = vld [vmem:[#allocation2 + $0xf8] sm:$0xff]
        %v2116 = vadd.f32 %v2084, %v2005
        %v2117 = vadd.f32 %v2085, %v2007
        %v2118 = vadd.f32 %v2086, %v2010
        %v2119 = vadd.f32 %v2087, %v2012
        %v2120 = vadd.f32 %v2088, %v2015
        %v2121 = vadd.f32 %v2089, %v2017
        %v2122 = vadd.f32 %v2090, %v2020
        %v2123 = vadd.f32 %v2091, %v2022
        %v2124 = vadd.f32 %v2092, %v2025
        %v2125 = vadd.f32 %v2093, %v2027
        %v2126 = vadd.f32 %v2094, %v2030
        %v2127 = vadd.f32 %v2095, %v2032
        %v2128 = vadd.f32 %v2096, %v2035
        %v2129 = vadd.f32 %v2097, %v2037
        %v2130 = vadd.f32 %v2098, %v2040
        %v2131 = vadd.f32 %v2099, %v2042
        %v2132 = vadd.f32 %v2100, %v2045
        %v2133 = vadd.f32 %v2101, %v2047
        %v2134 = vadd.f32 %v2102, %v2050
        %v2135 = vadd.f32 %v2103, %v2052
        %v2136 = vadd.f32 %v2104, %v2055
        %v2137 = vadd.f32 %v2105, %v2057
        %v2138 = vadd.f32 %v2106, %v2060
        %v2139 = vadd.f32 %v2107, %v2062
        %v2140 = vadd.f32 %v2108, %v2065
        %v2141 = vadd.f32 %v2109, %v2067
        %v2142 = vadd.f32 %v2110, %v2070
        %v2143 = vadd.f32 %v2111, %v2072
        %v2144 = vadd.f32 %v2112, %v2075
        %v2145 = vadd.f32 %v2113, %v2077
        %v2146 = vadd.f32 %v2114, %v2080
        %v2147 = vadd.f32 %v2115, %v2082
        %2148 = vst [vmem:[#allocation2] sm:$0xff] %v2116
        %2149 = vst [vmem:[#allocation2 + $0x8] sm:$0xff] %v2117
        %2150 = vst [vmem:[#allocation2 + $0x10] sm:$0xff] %v2118
        %2151 = vst [vmem:[#allocation2 + $0x18] sm:$0xff] %v2119
        %2152 = vst [vmem:[#allocation2 + $0x20] sm:$0xff] %v2120
        %2153 = vst [vmem:[#allocation2 + $0x28] sm:$0xff] %v2121
        %2154 = vst [vmem:[#allocation2 + $0x30] sm:$0xff] %v2122
        %2155 = vst [vmem:[#allocation2 + $0x38] sm:$0xff] %v2123
        %2156 = vst [vmem:[#allocation2 + $0x40] sm:$0xff] %v2124
        %2157 = vst [vmem:[#allocation2 + $0x48] sm:$0xff] %v2125
        %2158 = vst [vmem:[#allocation2 + $0x50] sm:$0xff] %v2126
        %2159 = vst [vmem:[#allocation2 + $0x58] sm:$0xff] %v2127
        %2160 = vst [vmem:[#allocation2 + $0x60] sm:$0xff] %v2128
        %2161 = vst [vmem:[#allocation2 + $0x68] sm:$0xff] %v2129
        %2162 = vst [vmem:[#allocation2 + $0x70] sm:$0xff] %v2130
        %2163 = vst [vmem:[#allocation2 + $0x78] sm:$0xff] %v2131
        %2164 = vst [vmem:[#allocation2 + $0x80] sm:$0xff] %v2132
        %2165 = vst [vmem:[#allocation2 + $0x88] sm:$0xff] %v2133
        %2166 = vst [vmem:[#allocation2 + $0x90] sm:$0xff] %v2134
        %2167 = vst [vmem:[#allocation2 + $0x98] sm:$0xff] %v2135
        %2168 = vst [vmem:[#allocation2 + $0xa0] sm:$0xff] %v2136
        %2169 = vst [vmem:[#allocation2 + $0xa8] sm:$0xff] %v2137
        %2170 = vst [vmem:[#allocation2 + $0xb0] sm:$0xff] %v2138
        %2171 = vst [vmem:[#allocation2 + $0xb8] sm:$0xff] %v2139
        %2172 = vst [vmem:[#allocation2 + $0xc0] sm:$0xff] %v2140
        %2173 = vst [vmem:[#allocation2 + $0xc8] sm:$0xff] %v2141
        %2174 = vst [vmem:[#allocation2 + $0xd0] sm:$0xff] %v2142
        %2175 = vst [vmem:[#allocation2 + $0xd8] sm:$0xff] %v2143
        %2176 = vst [vmem:[#allocation2 + $0xe0] sm:$0xff] %v2144
        %2177 = vst [vmem:[#allocation2 + $0xe8] sm:$0xff] %v2145
        %2178 = vst [vmem:[#allocation2 + $0xf0] sm:$0xff] %v2146
        %2179 = vst [vmem:[#allocation2 + $0xf8] sm:$0xff] %v2147
        %v2180 = vld [vmem:[%s1801] sm:$0xf]
        %v2181 = vld [vmem:[%s1801 + $0x4] sm:$0xf]
        %v2182 = vld [vmem:[%s1801 + $0x8] sm:$0x1]
        %v2183 = vld [vmem:[%s1801 + $0xc] sm:$0xf]
        %v2184 = vld [vmem:[%s1801 + $0x10] sm:$0xf]
        %v2185 = vld [vmem:[%s1801 + $0x14] sm:$0x1]
        %v2186 = vld [vmem:[%s1801 + $0x18] sm:$0xf]
        %v2187 = vld [vmem:[%s1801 + $0x1c] sm:$0xf]
        %v2188 = vld [vmem:[%s1801 + $0x20] sm:$0x1]
        %v2189 = vld [vmem:[%s1801 + $0x24] sm:$0xf]
        %v2190 = vld [vmem:[%s1801 + $0x28] sm:$0xf]
        %v2191 = vld [vmem:[%s1801 + $0x2c] sm:$0x1]
        %v2192 = vld [vmem:[%s1801 + $0x30] sm:$0xf]
        %v2193 = vld [vmem:[%s1801 + $0x34] sm:$0xf]
        %v2194 = vld [vmem:[%s1801 + $0x38] sm:$0x1]
        %v2195 = vld [vmem:[%s1801 + $0x3c] sm:$0xf]
        %v2196 = vld [vmem:[%s1801 + $0x40] sm:$0xf]
        %v2197 = vld [vmem:[%s1801 + $0x44] sm:$0x1]
        %v2198 = vld [vmem:[%s1801 + $0x48] sm:$0xf]
        %v2199 = vld [vmem:[%s1801 + $0x4c] sm:$0xf]
        %v2200 = vld [vmem:[%s1801 + $0x50] sm:$0x1]
        %v2201 = vld [vmem:[%s1801 + $0x54] sm:$0xf]
        %v2202 = vld [vmem:[%s1801 + $0x58] sm:$0xf]
        %v2203 = vld [vmem:[%s1801 + $0x5c] sm:$0x1]
        %v2204 = vld [vmem:[%s1801 + $0x60] sm:$0xf]
        %v2205 = vld [vmem:[%s1801 + $0x64] sm:$0xf]
        %v2206 = vld [vmem:[%s1801 + $0x68] sm:$0x1]
        %v2207 = vld [vmem:[%s1801 + $0x6c] sm:$0xf]
        %v2208 = vld [vmem:[%s1801 + $0x70] sm:$0xf]
        %v2209 = vld [vmem:[%s1801 + $0x74] sm:$0x1]
        %v2210 = vld [vmem:[%s1801 + $0x78] sm:$0xf]
        %v2211 = vld [vmem:[%s1801 + $0x7c] sm:$0xf]
        %v2212 = vld [vmem:[%s1801 + $0x80] sm:$0x1]
        %v2213 = vld [vmem:[%s1801 + $0x84] sm:$0xf]
        %v2214 = vld [vmem:[%s1801 + $0x88] sm:$0xf]
        %v2215 = vld [vmem:[%s1801 + $0x8c] sm:$0x1]
        %v2216 = vld [vmem:[%s1801 + $0x90] sm:$0xf]
        %v2217 = vld [vmem:[%s1801 + $0x94] sm:$0xf]
        %v2218 = vld [vmem:[%s1801 + $0x98] sm:$0x1]
        %v2219 = vld [vmem:[%s1801 + $0x9c] sm:$0xf]
        %v2220 = vld [vmem:[%s1801 + $0xa0] sm:$0xf]
        %v2221 = vld [vmem:[%s1801 + $0xa4] sm:$0x1]
        %v2222 = vld [vmem:[%s1801 + $0xa8] sm:$0xf]
        %v2223 = vld [vmem:[%s1801 + $0xac] sm:$0xf]
        %v2224 = vld [vmem:[%s1801 + $0xb0] sm:$0x1]
        %v2225 = vld [vmem:[%s1801 + $0xb4] sm:$0xf]
        %v2226 = vld [vmem:[%s1801 + $0xb8] sm:$0xf]
        %v2227 = vld [vmem:[%s1801 + $0xbc] sm:$0x1]
        %v2229 = vshrl.u32 %v2180, 16
        %v2231 = vrot.slane %v2229, 4
        %v2232 = vshll.u32 %v2180, 16
        %v2234 = vrot.slane %v2232, 5
        %v2235 = vor.u32 %v2231, %v2234
        %v2236 = vrot.slane %v2235, 4
        %v2238 = vshll.u32 %v2181, 16
        %v2240 = vrot.slane %v2238, 5
        %v2241 = vsel %vm577, %v2236, %v2240
        %v2242 = vshrl.u32 %v2181, 16
        %v2244 = vrot.slane %v2242, 4
        %v2245 = vor.u32 %v2244, %v2240
        %v2246 = vrot.slane %v2245, 4
        %v2248 = vshll.u32 %v2182, 16
        %v2250 = vrot.slane %v2248, 5
        %v2251 = vsel %vm577, %v2246, %v2250
        %v2253 = vshrl.u32 %v2183, 16
        %v2255 = vrot.slane %v2253, 4
        %v2256 = vshll.u32 %v2183, 16
        %v2258 = vrot.slane %v2256, 5
        %v2259 = vor.u32 %v2255, %v2258
        %v2260 = vrot.slane %v2259, 4
        %v2262 = vshll.u32 %v2184, 16
        %v2264 = vrot.slane %v2262, 5
        %v2265 = vsel %vm577, %v2260, %v2264
        %v2266 = vshrl.u32 %v2184, 16
        %v2268 = vrot.slane %v2266, 4
        %v2269 = vor.u32 %v2268, %v2264
        %v2270 = vrot.slane %v2269, 4
        %v2272 = vshll.u32 %v2185, 16
        %v2274 = vrot.slane %v2272, 5
        %v2275 = vsel %vm577, %v2270, %v2274
        %v2277 = vshrl.u32 %v2186, 16
        %v2279 = vrot.slane %v2277, 4
        %v2280 = vshll.u32 %v2186, 16
        %v2282 = vrot.slane %v2280, 5
        %v2283 = vor.u32 %v2279, %v2282
        %v2284 = vrot.slane %v2283, 4
        %v2286 = vshll.u32 %v2187, 16
        %v2288 = vrot.slane %v2286, 5
        %v2289 = vsel %vm577, %v2284, %v2288
        %v2290 = vshrl.u32 %v2187, 16
        %v2292 = vrot.slane %v2290, 4
        %v2293 = vor.u32 %v2292, %v2288
        %v2294 = vrot.slane %v2293, 4
        %v2296 = vshll.u32 %v2188, 16
        %v2298 = vrot.slane %v2296, 5
        %v2299 = vsel %vm577, %v2294, %v2298
        %v2301 = vshrl.u32 %v2189, 16
        %v2303 = vrot.slane %v2301, 4
        %v2304 = vshll.u32 %v2189, 16
        %v2306 = vrot.slane %v2304, 5
        %v2307 = vor.u32 %v2303, %v2306
        %v2308 = vrot.slane %v2307, 4
        %v2310 = vshll.u32 %v2190, 16
        %v2312 = vrot.slane %v2310, 5
        %v2313 = vsel %vm577, %v2308, %v2312
        %v2314 = vshrl.u32 %v2190, 16
        %v2316 = vrot.slane %v2314, 4
        %v2317 = vor.u32 %v2316, %v2312
        %v2318 = vrot.slane %v2317, 4
        %v2320 = vshll.u32 %v2191, 16
        %v2322 = vrot.slane %v2320, 5
        %v2323 = vsel %vm577, %v2318, %v2322
        %v2325 = vshrl.u32 %v2192, 16
        %v2327 = vrot.slane %v2325, 4
        %v2328 = vshll.u32 %v2192, 16
        %v2330 = vrot.slane %v2328, 5
        %v2331 = vor.u32 %v2327, %v2330
        %v2332 = vrot.slane %v2331, 4
        %v2334 = vshll.u32 %v2193, 16
        %v2336 = vrot.slane %v2334, 5
        %v2337 = vsel %vm577, %v2332, %v2336
        %v2338 = vshrl.u32 %v2193, 16
        %v2340 = vrot.slane %v2338, 4
        %v2341 = vor.u32 %v2340, %v2336
        %v2342 = vrot.slane %v2341, 4
        %v2344 = vshll.u32 %v2194, 16
        %v2346 = vrot.slane %v2344, 5
        %v2347 = vsel %vm577, %v2342, %v2346
        %v2349 = vshrl.u32 %v2195, 16
        %v2351 = vrot.slane %v2349, 4
        %v2352 = vshll.u32 %v2195, 16
        %v2354 = vrot.slane %v2352, 5
        %v2355 = vor.u32 %v2351, %v2354
        %v2356 = vrot.slane %v2355, 4
        %v2358 = vshll.u32 %v2196, 16
        %v2360 = vrot.slane %v2358, 5
        %v2361 = vsel %vm577, %v2356, %v2360
        %v2362 = vshrl.u32 %v2196, 16
        %v2364 = vrot.slane %v2362, 4
        %v2365 = vor.u32 %v2364, %v2360
        %v2366 = vrot.slane %v2365, 4
        %v2368 = vshll.u32 %v2197, 16
        %v2370 = vrot.slane %v2368, 5
        %v2371 = vsel %vm577, %v2366, %v2370
        %v2373 = vshrl.u32 %v2198, 16
        %v2375 = vrot.slane %v2373, 4
        %v2376 = vshll.u32 %v2198, 16
        %v2378 = vrot.slane %v2376, 5
        %v2379 = vor.u32 %v2375, %v2378
        %v2380 = vrot.slane %v2379, 4
        %v2382 = vshll.u32 %v2199, 16
        %v2384 = vrot.slane %v2382, 5
        %v2385 = vsel %vm577, %v2380, %v2384
        %v2386 = vshrl.u32 %v2199, 16
        %v2388 = vrot.slane %v2386, 4
        %v2389 = vor.u32 %v2388, %v2384
        %v2390 = vrot.slane %v2389, 4
        %v2392 = vshll.u32 %v2200, 16
        %v2394 = vrot.slane %v2392, 5
        %v2395 = vsel %vm577, %v2390, %v2394
        %v2397 = vshrl.u32 %v2201, 16
        %v2399 = vrot.slane %v2397, 4
        %v2400 = vshll.u32 %v2201, 16
        %v2402 = vrot.slane %v2400, 5
        %v2403 = vor.u32 %v2399, %v2402
        %v2404 = vrot.slane %v2403, 4
        %v2406 = vshll.u32 %v2202, 16
        %v2408 = vrot.slane %v2406, 5
        %v2409 = vsel %vm577, %v2404, %v2408
        %v2410 = vshrl.u32 %v2202, 16
        %v2412 = vrot.slane %v2410, 4
        %v2413 = vor.u32 %v2412, %v2408
        %v2414 = vrot.slane %v2413, 4
        %v2416 = vshll.u32 %v2203, 16
        %v2418 = vrot.slane %v2416, 5
        %v2419 = vsel %vm577, %v2414, %v2418
        %v2421 = vshrl.u32 %v2204, 16
        %v2423 = vrot.slane %v2421, 4
        %v2424 = vshll.u32 %v2204, 16
        %v2426 = vrot.slane %v2424, 5
        %v2427 = vor.u32 %v2423, %v2426
        %v2428 = vrot.slane %v2427, 4
        %v2430 = vshll.u32 %v2205, 16
        %v2432 = vrot.slane %v2430, 5
        %v2433 = vsel %vm577, %v2428, %v2432
        %v2434 = vshrl.u32 %v2205, 16
        %v2436 = vrot.slane %v2434, 4
        %v2437 = vor.u32 %v2436, %v2432
        %v2438 = vrot.slane %v2437, 4
        %v2440 = vshll.u32 %v2206, 16
        %v2442 = vrot.slane %v2440, 5
        %v2443 = vsel %vm577, %v2438, %v2442
        %v2445 = vshrl.u32 %v2207, 16
        %v2447 = vrot.slane %v2445, 4
        %v2448 = vshll.u32 %v2207, 16
        %v2450 = vrot.slane %v2448, 5
        %v2451 = vor.u32 %v2447, %v2450
        %v2452 = vrot.slane %v2451, 4
        %v2454 = vshll.u32 %v2208, 16
        %v2456 = vrot.slane %v2454, 5
        %v2457 = vsel %vm577, %v2452, %v2456
        %v2458 = vshrl.u32 %v2208, 16
        %v2460 = vrot.slane %v2458, 4
        %v2461 = vor.u32 %v2460, %v2456
        %v2462 = vrot.slane %v2461, 4
        %v2464 = vshll.u32 %v2209, 16
        %v2466 = vrot.slane %v2464, 5
        %v2467 = vsel %vm577, %v2462, %v2466
        %v2469 = vshrl.u32 %v2210, 16
        %v2471 = vrot.slane %v2469, 4
        %v2472 = vshll.u32 %v2210, 16
        %v2474 = vrot.slane %v2472, 5
        %v2475 = vor.u32 %v2471, %v2474
        %v2476 = vrot.slane %v2475, 4
        %v2478 = vshll.u32 %v2211, 16
        %v2480 = vrot.slane %v2478, 5
        %v2481 = vsel %vm577, %v2476, %v2480
        %v2482 = vshrl.u32 %v2211, 16
        %v2484 = vrot.slane %v2482, 4
        %v2485 = vor.u32 %v2484, %v2480
        %v2486 = vrot.slane %v2485, 4
        %v2488 = vshll.u32 %v2212, 16
        %v2490 = vrot.slane %v2488, 5
        %v2491 = vsel %vm577, %v2486, %v2490
        %v2493 = vshrl.u32 %v2213, 16
        %v2495 = vrot.slane %v2493, 4
        %v2496 = vshll.u32 %v2213, 16
        %v2498 = vrot.slane %v2496, 5
        %v2499 = vor.u32 %v2495, %v2498
        %v2500 = vrot.slane %v2499, 4
        %v2502 = vshll.u32 %v2214, 16
        %v2504 = vrot.slane %v2502, 5
        %v2505 = vsel %vm577, %v2500, %v2504
        %v2506 = vshrl.u32 %v2214, 16
        %v2508 = vrot.slane %v2506, 4
        %v2509 = vor.u32 %v2508, %v2504
        %v2510 = vrot.slane %v2509, 4
        %v2512 = vshll.u32 %v2215, 16
        %v2514 = vrot.slane %v2512, 5
        %v2515 = vsel %vm577, %v2510, %v2514
        %v2517 = vshrl.u32 %v2216, 16
        %v2519 = vrot.slane %v2517, 4
        %v2520 = vshll.u32 %v2216, 16
        %v2522 = vrot.slane %v2520, 5
        %v2523 = vor.u32 %v2519, %v2522
        %v2524 = vrot.slane %v2523, 4
        %v2526 = vshll.u32 %v2217, 16
        %v2528 = vrot.slane %v2526, 5
        %v2529 = vsel %vm577, %v2524, %v2528
        %v2530 = vshrl.u32 %v2217, 16
        %v2532 = vrot.slane %v2530, 4
        %v2533 = vor.u32 %v2532, %v2528
        %v2534 = vrot.slane %v2533, 4
        %v2536 = vshll.u32 %v2218, 16
        %v2538 = vrot.slane %v2536, 5
        %v2539 = vsel %vm577, %v2534, %v2538
        %v2541 = vshrl.u32 %v2219, 16
        %v2543 = vrot.slane %v2541, 4
        %v2544 = vshll.u32 %v2219, 16
        %v2546 = vrot.slane %v2544, 5
        %v2547 = vor.u32 %v2543, %v2546
        %v2548 = vrot.slane %v2547, 4
        %v2550 = vshll.u32 %v2220, 16
        %v2552 = vrot.slane %v2550, 5
        %v2553 = vsel %vm577, %v2548, %v2552
        %v2554 = vshrl.u32 %v2220, 16
        %v2556 = vrot.slane %v2554, 4
        %v2557 = vor.u32 %v2556, %v2552
        %v2558 = vrot.slane %v2557, 4
        %v2560 = vshll.u32 %v2221, 16
        %v2562 = vrot.slane %v2560, 5
        %v2563 = vsel %vm577, %v2558, %v2562
        %v2565 = vshrl.u32 %v2222, 16
        %v2567 = vrot.slane %v2565, 4
        %v2568 = vshll.u32 %v2222, 16
        %v2570 = vrot.slane %v2568, 5
        %v2571 = vor.u32 %v2567, %v2570
        %v2572 = vrot.slane %v2571, 4
        %v2574 = vshll.u32 %v2223, 16
        %v2576 = vrot.slane %v2574, 5
        %v2577 = vsel %vm577, %v2572, %v2576
        %v2578 = vshrl.u32 %v2223, 16
        %v2580 = vrot.slane %v2578, 4
        %v2581 = vor.u32 %v2580, %v2576
        %v2582 = vrot.slane %v2581, 4
        %v2584 = vshll.u32 %v2224, 16
        %v2586 = vrot.slane %v2584, 5
        %v2587 = vsel %vm577, %v2582, %v2586
        %v2589 = vshrl.u32 %v2225, 16
        %v2591 = vrot.slane %v2589, 4
        %v2592 = vshll.u32 %v2225, 16
        %v2594 = vrot.slane %v2592, 5
        %v2595 = vor.u32 %v2591, %v2594
        %v2596 = vrot.slane %v2595, 4
        %v2598 = vshll.u32 %v2226, 16
        %v2600 = vrot.slane %v2598, 5
        %v2601 = vsel %vm577, %v2596, %v2600
        %v2602 = vshrl.u32 %v2226, 16
        %v2604 = vrot.slane %v2602, 4
        %v2605 = vor.u32 %v2604, %v2600
        %v2606 = vrot.slane %v2605, 4
        %v2608 = vshll.u32 %v2227, 16
        %v2610 = vrot.slane %v2608, 5
        %v2611 = vsel %vm577, %v2606, %v2610
        %s2612 = scalar_lea.vmem %s210, 256
        %v2613 = vld [vmem:[%s2612] sm:$0xf]
        %v2614 = vld [vmem:[%s2612 + $0x4] sm:$0xf]
        %v2615 = vld [vmem:[%s2612 + $0x8] sm:$0xf]
        %v2616 = vld [vmem:[%s2612 + $0xc] sm:$0xf]
        %v2617 = vld [vmem:[%s2612 + $0x10] sm:$0xf]
        %v2618 = vld [vmem:[%s2612 + $0x14] sm:$0xf]
        %v2619 = vld [vmem:[%s2612 + $0x18] sm:$0xf]
        %v2620 = vld [vmem:[%s2612 + $0x1c] sm:$0xf]
        %v2621 = vld [vmem:[%s2612 + $0x20] sm:$0xf]
        %v2622 = vld [vmem:[%s2612 + $0x24] sm:$0xf]
        %v2623 = vld [vmem:[%s2612 + $0x28] sm:$0xf]
        %v2624 = vld [vmem:[%s2612 + $0x2c] sm:$0xf]
        %v2625 = vld [vmem:[%s2612 + $0x30] sm:$0xf]
        %v2626 = vld [vmem:[%s2612 + $0x34] sm:$0xf]
        %v2627 = vld [vmem:[%s2612 + $0x38] sm:$0xf]
        %v2628 = vld [vmem:[%s2612 + $0x3c] sm:$0xf]
        %v2629 = vunpack.c.l.b16 %v2241
        %v2630 = vunpack.c.l.b16 %v2251
        %v2631 = vunpack.c.l.b16 %v2265
        %v2632 = vunpack.c.l.b16 %v2275
        %v2633 = vunpack.c.l.b16 %v2289
        %v2634 = vunpack.c.l.b16 %v2299
        %v2635 = vunpack.c.l.b16 %v2313
        %v2636 = vunpack.c.l.b16 %v2323
        %v2637 = vunpack.c.l.b16 %v2337
        %v2638 = vunpack.c.l.b16 %v2347
        %v2639 = vunpack.c.l.b16 %v2361
        %v2640 = vunpack.c.l.b16 %v2371
        %v2641 = vunpack.c.l.b16 %v2385
        %v2642 = vunpack.c.l.b16 %v2395
        %v2643 = vunpack.c.l.b16 %v2409
        %v2644 = vunpack.c.l.b16 %v2419
        %v2645 = vunpack.c.l.b16 %v2433
        %v2646 = vunpack.c.l.b16 %v2443
        %v2647 = vunpack.c.l.b16 %v2457
        %v2648 = vunpack.c.l.b16 %v2467
        %v2649 = vunpack.c.l.b16 %v2481
        %v2650 = vunpack.c.l.b16 %v2491
        %v2651 = vunpack.c.l.b16 %v2505
        %v2652 = vunpack.c.l.b16 %v2515
        %v2653 = vunpack.c.l.b16 %v2529
        %v2654 = vunpack.c.l.b16 %v2539
        %v2655 = vunpack.c.l.b16 %v2553
        %v2656 = vunpack.c.l.b16 %v2563
        %v2657 = vunpack.c.l.b16 %v2577
        %v2658 = vunpack.c.l.b16 %v2587
        %v2659 = vunpack.c.l.b16 %v2601
        %v2660 = vunpack.c.l.b16 %v2611
        %v2661 = vpack.c.b16 %v2630, %v2629
        %v2662 = vpack.c.b16 %v2632, %v2631
        %v2663 = vpack.c.b16 %v2634, %v2633
        %v2664 = vpack.c.b16 %v2636, %v2635
        %v2665 = vpack.c.b16 %v2638, %v2637
        %v2666 = vpack.c.b16 %v2640, %v2639
        %v2667 = vpack.c.b16 %v2642, %v2641
        %v2668 = vpack.c.b16 %v2644, %v2643
        %v2669 = vpack.c.b16 %v2646, %v2645
        %v2670 = vpack.c.b16 %v2648, %v2647
        %v2671 = vpack.c.b16 %v2650, %v2649
        %v2672 = vpack.c.b16 %v2652, %v2651
        %v2673 = vpack.c.b16 %v2654, %v2653
        %v2674 = vpack.c.b16 %v2656, %v2655
        %v2675 = vpack.c.b16 %v2658, %v2657
        %v2676 = vpack.c.b16 %v2660, %v2659
        %v2709 = vunpack.c.l.b16 %v2613
        %v2710 = vunpack.c.l.b16 %v2614
        %v2711 = vunpack.c.l.b16 %v2615
        %v2712 = vunpack.c.l.b16 %v2616
        %v2713 = vunpack.c.l.b16 %v2617
        %v2714 = vunpack.c.l.b16 %v2618
        %v2715 = vunpack.c.l.b16 %v2619
        %v2716 = vunpack.c.l.b16 %v2620
        %v2717 = vunpack.c.l.b16 %v2621
        %v2718 = vunpack.c.l.b16 %v2622
        %v2719 = vunpack.c.l.b16 %v2623
        %v2720 = vunpack.c.l.b16 %v2624
        %v2721 = vunpack.c.l.b16 %v2625
        %v2722 = vunpack.c.l.b16 %v2626
        %v2723 = vunpack.c.l.b16 %v2627
        %v2724 = vunpack.c.l.b16 %v2628
        %v2725 = vpack.c.b16 %v2710, %v2709
        %v2726 = vpack.c.b16 %v2712, %v2711
        %v2727 = vpack.c.b16 %v2714, %v2713
        %v2728 = vpack.c.b16 %v2716, %v2715
        %v2729 = vpack.c.b16 %v2718, %v2717
        %v2730 = vpack.c.b16 %v2720, %v2719
        %v2731 = vpack.c.b16 %v2722, %v2721
        %v2732 = vpack.c.b16 %v2724, %v2723
        %2741 = vmatpush.bf16.msra.mxu0 %v2732
        %2742 = vmatpush.bf16.msra.mxu0 %v2731
        %2743 = vmatpush.bf16.msra.mxu0 %v2730
        %2744 = vmatpush.bf16.msra.mxu0 %v2729
        %2745 = vmatpush.bf16.msra.mxu0 %v2728
        %2746 = vmatpush.bf16.msra.mxu0 %v2727
        %2747 = vmatpush.bf16.msra.mxu0 %v2726
        %2748 = vmatpush.bf16.msra.mxu0 %v2725
        %2749 = vmatmul.bf16.gmra.mxu0 %v2661
        %v2750 = vpop.f32.mrf.mxu0
        %v2751 = vadd.f32 0.0, %v2750
        %v2752 = vpop.f32.mrf.mxu0
        %v2753 = vadd.f32 0.0, %v2752
        %2754 = vmatmul.bf16.gmra.mxu0 %v2662
        %v2755 = vpop.f32.mrf.mxu0
        %v2756 = vadd.f32 0.0, %v2755
        %v2757 = vpop.f32.mrf.mxu0
        %v2758 = vadd.f32 0.0, %v2757
        %2759 = vmatmul.bf16.gmra.mxu0 %v2663
        %v2760 = vpop.f32.mrf.mxu0
        %v2761 = vadd.f32 0.0, %v2760
        %v2762 = vpop.f32.mrf.mxu0
        %v2763 = vadd.f32 0.0, %v2762
        %2764 = vmatmul.bf16.gmra.mxu0 %v2664
        %v2765 = vpop.f32.mrf.mxu0
        %v2766 = vadd.f32 0.0, %v2765
        %v2767 = vpop.f32.mrf.mxu0
        %v2768 = vadd.f32 0.0, %v2767
        %2769 = vmatmul.bf16.gmra.mxu0 %v2665
        %v2770 = vpop.f32.mrf.mxu0
        %v2771 = vadd.f32 0.0, %v2770
        %v2772 = vpop.f32.mrf.mxu0
        %v2773 = vadd.f32 0.0, %v2772
        %2774 = vmatmul.bf16.gmra.mxu0 %v2666
        %v2775 = vpop.f32.mrf.mxu0
        %v2776 = vadd.f32 0.0, %v2775
        %v2777 = vpop.f32.mrf.mxu0
        %v2778 = vadd.f32 0.0, %v2777
        %2779 = vmatmul.bf16.gmra.mxu0 %v2667
        %v2780 = vpop.f32.mrf.mxu0
        %v2781 = vadd.f32 0.0, %v2780
        %v2782 = vpop.f32.mrf.mxu0
        %v2783 = vadd.f32 0.0, %v2782
        %2784 = vmatmul.bf16.gmra.mxu0 %v2668
        %v2785 = vpop.f32.mrf.mxu0
        %v2786 = vadd.f32 0.0, %v2785
        %v2787 = vpop.f32.mrf.mxu0
        %v2788 = vadd.f32 0.0, %v2787
        %2789 = vmatmul.bf16.gmra.mxu0 %v2669
        %v2790 = vpop.f32.mrf.mxu0
        %v2791 = vadd.f32 0.0, %v2790
        %v2792 = vpop.f32.mrf.mxu0
        %v2793 = vadd.f32 0.0, %v2792
        %2794 = vmatmul.bf16.gmra.mxu0 %v2670
        %v2795 = vpop.f32.mrf.mxu0
        %v2796 = vadd.f32 0.0, %v2795
        %v2797 = vpop.f32.mrf.mxu0
        %v2798 = vadd.f32 0.0, %v2797
        %2799 = vmatmul.bf16.gmra.mxu0 %v2671
        %v2800 = vpop.f32.mrf.mxu0
        %v2801 = vadd.f32 0.0, %v2800
        %v2802 = vpop.f32.mrf.mxu0
        %v2803 = vadd.f32 0.0, %v2802
        %2804 = vmatmul.bf16.gmra.mxu0 %v2672
        %v2805 = vpop.f32.mrf.mxu0
        %v2806 = vadd.f32 0.0, %v2805
        %v2807 = vpop.f32.mrf.mxu0
        %v2808 = vadd.f32 0.0, %v2807
        %2809 = vmatmul.bf16.gmra.mxu0 %v2673
        %v2810 = vpop.f32.mrf.mxu0
        %v2811 = vadd.f32 0.0, %v2810
        %v2812 = vpop.f32.mrf.mxu0
        %v2813 = vadd.f32 0.0, %v2812
        %2814 = vmatmul.bf16.gmra.mxu0 %v2674
        %v2815 = vpop.f32.mrf.mxu0
        %v2816 = vadd.f32 0.0, %v2815
        %v2817 = vpop.f32.mrf.mxu0
        %v2818 = vadd.f32 0.0, %v2817
        %2819 = vmatmul.bf16.gmra.mxu0 %v2675
        %v2820 = vpop.f32.mrf.mxu0
        %v2821 = vadd.f32 0.0, %v2820
        %v2822 = vpop.f32.mrf.mxu0
        %v2823 = vadd.f32 0.0, %v2822
        %2824 = vmatmul.bf16.gmra.mxu0 %v2676
        %v2825 = vpop.f32.mrf.mxu0
        %v2826 = vadd.f32 0.0, %v2825
        %v2827 = vpop.f32.mrf.mxu0
        %v2828 = vadd.f32 0.0, %v2827
        %2829 = vdwg.mxu0
        %v2830 = vld [vmem:[#allocation2] sm:$0xff]
        %v2831 = vld [vmem:[#allocation2 + $0x8] sm:$0xff]
        %v2832 = vld [vmem:[#allocation2 + $0x10] sm:$0xff]
        %v2833 = vld [vmem:[#allocation2 + $0x18] sm:$0xff]
        %v2834 = vld [vmem:[#allocation2 + $0x20] sm:$0xff]
        %v2835 = vld [vmem:[#allocation2 + $0x28] sm:$0xff]
        %v2836 = vld [vmem:[#allocation2 + $0x30] sm:$0xff]
        %v2837 = vld [vmem:[#allocation2 + $0x38] sm:$0xff]
        %v2838 = vld [vmem:[#allocation2 + $0x40] sm:$0xff]
        %v2839 = vld [vmem:[#allocation2 + $0x48] sm:$0xff]
        %v2840 = vld [vmem:[#allocation2 + $0x50] sm:$0xff]
        %v2841 = vld [vmem:[#allocation2 + $0x58] sm:$0xff]
        %v2842 = vld [vmem:[#allocation2 + $0x60] sm:$0xff]
        %v2843 = vld [vmem:[#allocation2 + $0x68] sm:$0xff]
        %v2844 = vld [vmem:[#allocation2 + $0x70] sm:$0xff]
        %v2845 = vld [vmem:[#allocation2 + $0x78] sm:$0xff]
        %v2846 = vld [vmem:[#allocation2 + $0x80] sm:$0xff]
        %v2847 = vld [vmem:[#allocation2 + $0x88] sm:$0xff]
        %v2848 = vld [vmem:[#allocation2 + $0x90] sm:$0xff]
        %v2849 = vld [vmem:[#allocation2 + $0x98] sm:$0xff]
        %v2850 = vld [vmem:[#allocation2 + $0xa0] sm:$0xff]
        %v2851 = vld [vmem:[#allocation2 + $0xa8] sm:$0xff]
        %v2852 = vld [vmem:[#allocation2 + $0xb0] sm:$0xff]
        %v2853 = vld [vmem:[#allocation2 + $0xb8] sm:$0xff]
        %v2854 = vld [vmem:[#allocation2 + $0xc0] sm:$0xff]
        %v2855 = vld [vmem:[#allocation2 + $0xc8] sm:$0xff]
        %v2856 = vld [vmem:[#allocation2 + $0xd0] sm:$0xff]
        %v2857 = vld [vmem:[#allocation2 + $0xd8] sm:$0xff]
        %v2858 = vld [vmem:[#allocation2 + $0xe0] sm:$0xff]
        %v2859 = vld [vmem:[#allocation2 + $0xe8] sm:$0xff]
        %v2860 = vld [vmem:[#allocation2 + $0xf0] sm:$0xff]
        %v2861 = vld [vmem:[#allocation2 + $0xf8] sm:$0xff]
        %v2862 = vadd.f32 %v2830, %v2751
        %v2863 = vadd.f32 %v2831, %v2753
        %v2864 = vadd.f32 %v2832, %v2756
        %v2865 = vadd.f32 %v2833, %v2758
        %v2866 = vadd.f32 %v2834, %v2761
        %v2867 = vadd.f32 %v2835, %v2763
        %v2868 = vadd.f32 %v2836, %v2766
        %v2869 = vadd.f32 %v2837, %v2768
        %v2870 = vadd.f32 %v2838, %v2771
        %v2871 = vadd.f32 %v2839, %v2773
        %v2872 = vadd.f32 %v2840, %v2776
        %v2873 = vadd.f32 %v2841, %v2778
        %v2874 = vadd.f32 %v2842, %v2781
        %v2875 = vadd.f32 %v2843, %v2783
        %v2876 = vadd.f32 %v2844, %v2786
        %v2877 = vadd.f32 %v2845, %v2788
        %v2878 = vadd.f32 %v2846, %v2791
        %v2879 = vadd.f32 %v2847, %v2793
        %v2880 = vadd.f32 %v2848, %v2796
        %v2881 = vadd.f32 %v2849, %v2798
        %v2882 = vadd.f32 %v2850, %v2801
        %v2883 = vadd.f32 %v2851, %v2803
        %v2884 = vadd.f32 %v2852, %v2806
        %v2885 = vadd.f32 %v2853, %v2808
        %v2886 = vadd.f32 %v2854, %v2811
        %v2887 = vadd.f32 %v2855, %v2813
        %v2888 = vadd.f32 %v2856, %v2816
        %v2889 = vadd.f32 %v2857, %v2818
        %v2890 = vadd.f32 %v2858, %v2821
        %v2891 = vadd.f32 %v2859, %v2823
        %v2892 = vadd.f32 %v2860, %v2826
        %v2893 = vadd.f32 %v2861, %v2828
        %2894 = vst [vmem:[#allocation2] sm:$0xff] %v2862
        %2895 = vst [vmem:[#allocation2 + $0x8] sm:$0xff] %v2863
        %2896 = vst [vmem:[#allocation2 + $0x10] sm:$0xff] %v2864
        %2897 = vst [vmem:[#allocation2 + $0x18] sm:$0xff] %v2865
        %2898 = vst [vmem:[#allocation2 + $0x20] sm:$0xff] %v2866
        %2899 = vst [vmem:[#allocation2 + $0x28] sm:$0xff] %v2867
        %2900 = vst [vmem:[#allocation2 + $0x30] sm:$0xff] %v2868
        %2901 = vst [vmem:[#allocation2 + $0x38] sm:$0xff] %v2869
        %2902 = vst [vmem:[#allocation2 + $0x40] sm:$0xff] %v2870
        %2903 = vst [vmem:[#allocation2 + $0x48] sm:$0xff] %v2871
        %2904 = vst [vmem:[#allocation2 + $0x50] sm:$0xff] %v2872
        %2905 = vst [vmem:[#allocation2 + $0x58] sm:$0xff] %v2873
        %2906 = vst [vmem:[#allocation2 + $0x60] sm:$0xff] %v2874
        %2907 = vst [vmem:[#allocation2 + $0x68] sm:$0xff] %v2875
        %2908 = vst [vmem:[#allocation2 + $0x70] sm:$0xff] %v2876
        %2909 = vst [vmem:[#allocation2 + $0x78] sm:$0xff] %v2877
        %2910 = vst [vmem:[#allocation2 + $0x80] sm:$0xff] %v2878
        %2911 = vst [vmem:[#allocation2 + $0x88] sm:$0xff] %v2879
        %2912 = vst [vmem:[#allocation2 + $0x90] sm:$0xff] %v2880
        %2913 = vst [vmem:[#allocation2 + $0x98] sm:$0xff] %v2881
        %2914 = vst [vmem:[#allocation2 + $0xa0] sm:$0xff] %v2882
        %2915 = vst [vmem:[#allocation2 + $0xa8] sm:$0xff] %v2883
        %2916 = vst [vmem:[#allocation2 + $0xb0] sm:$0xff] %v2884
        %2917 = vst [vmem:[#allocation2 + $0xb8] sm:$0xff] %v2885
        %2918 = vst [vmem:[#allocation2 + $0xc0] sm:$0xff] %v2886
        %2919 = vst [vmem:[#allocation2 + $0xc8] sm:$0xff] %v2887
        %2920 = vst [vmem:[#allocation2 + $0xd0] sm:$0xff] %v2888
        %2921 = vst [vmem:[#allocation2 + $0xd8] sm:$0xff] %v2889
        %2922 = vst [vmem:[#allocation2 + $0xe0] sm:$0xff] %v2890
        %2923 = vst [vmem:[#allocation2 + $0xe8] sm:$0xff] %v2891
        %2924 = vst [vmem:[#allocation2 + $0xf0] sm:$0xff] %v2892
        %2925 = vst [vmem:[#allocation2 + $0xf8] sm:$0xff] %v2893
        %v2926 = vld [vmem:[%s1801] sm:$0xe]
        %v2927 = vld [vmem:[%s1801 + $0x4] sm:$0xf]
        %v2928 = vld [vmem:[%s1801 + $0x8] sm:$0x1]
        %v2929 = vld [vmem:[%s1801 + $0xc] sm:$0xe]
        %v2930 = vld [vmem:[%s1801 + $0x10] sm:$0xf]
        %v2931 = vld [vmem:[%s1801 + $0x14] sm:$0x1]
        %v2932 = vld [vmem:[%s1801 + $0x18] sm:$0xe]
        %v2933 = vld [vmem:[%s1801 + $0x1c] sm:$0xf]
        %v2934 = vld [vmem:[%s1801 + $0x20] sm:$0x1]
        %v2935 = vld [vmem:[%s1801 + $0x24] sm:$0xe]
        %v2936 = vld [vmem:[%s1801 + $0x28] sm:$0xf]
        %v2937 = vld [vmem:[%s1801 + $0x2c] sm:$0x1]
        %v2938 = vld [vmem:[%s1801 + $0x30] sm:$0xe]
        %v2939 = vld [vmem:[%s1801 + $0x34] sm:$0xf]
        %v2940 = vld [vmem:[%s1801 + $0x38] sm:$0x1]
        %v2941 = vld [vmem:[%s1801 + $0x3c] sm:$0xe]
        %v2942 = vld [vmem:[%s1801 + $0x40] sm:$0xf]
        %v2943 = vld [vmem:[%s1801 + $0x44] sm:$0x1]
        %v2944 = vld [vmem:[%s1801 + $0x48] sm:$0xe]
        %v2945 = vld [vmem:[%s1801 + $0x4c] sm:$0xf]
        %v2946 = vld [vmem:[%s1801 + $0x50] sm:$0x1]
        %v2947 = vld [vmem:[%s1801 + $0x54] sm:$0xe]
        %v2948 = vld [vmem:[%s1801 + $0x58] sm:$0xf]
        %v2949 = vld [vmem:[%s1801 + $0x5c] sm:$0x1]
        %v2950 = vld [vmem:[%s1801 + $0x60] sm:$0xe]
        %v2951 = vld [vmem:[%s1801 + $0x64] sm:$0xf]
        %v2952 = vld [vmem:[%s1801 + $0x68] sm:$0x1]
        %v2953 = vld [vmem:[%s1801 + $0x6c] sm:$0xe]
        %v2954 = vld [vmem:[%s1801 + $0x70] sm:$0xf]
        %v2955 = vld [vmem:[%s1801 + $0x74] sm:$0x1]
        %v2956 = vld [vmem:[%s1801 + $0x78] sm:$0xe]
        %v2957 = vld [vmem:[%s1801 + $0x7c] sm:$0xf]
        %v2958 = vld [vmem:[%s1801 + $0x80] sm:$0x1]
        %v2959 = vld [vmem:[%s1801 + $0x84] sm:$0xe]
        %v2960 = vld [vmem:[%s1801 + $0x88] sm:$0xf]
        %v2961 = vld [vmem:[%s1801 + $0x8c] sm:$0x1]
        %v2962 = vld [vmem:[%s1801 + $0x90] sm:$0xe]
        %v2963 = vld [vmem:[%s1801 + $0x94] sm:$0xf]
        %v2964 = vld [vmem:[%s1801 + $0x98] sm:$0x1]
        %v2965 = vld [vmem:[%s1801 + $0x9c] sm:$0xe]
        %v2966 = vld [vmem:[%s1801 + $0xa0] sm:$0xf]
        %v2967 = vld [vmem:[%s1801 + $0xa4] sm:$0x1]
        %v2968 = vld [vmem:[%s1801 + $0xa8] sm:$0xe]
        %v2969 = vld [vmem:[%s1801 + $0xac] sm:$0xf]
        %v2970 = vld [vmem:[%s1801 + $0xb0] sm:$0x1]
        %v2971 = vld [vmem:[%s1801 + $0xb4] sm:$0xe]
        %v2972 = vld [vmem:[%s1801 + $0xb8] sm:$0xf]
        %v2973 = vld [vmem:[%s1801 + $0xbc] sm:$0x1]
        %v3022 = vrot.slane %v2926, 5
        %v3023 = vrot.slane %v3022, 4
        %v3024 = vrot.slane %v2927, 5
        %v3025 = vsel %vm1374, %v3023, %v3024
        %v3026 = vrot.slane %v3024, 4
        %v3027 = vrot.slane %v2928, 5
        %v3028 = vsel %vm1374, %v3026, %v3027
        %v3029 = vrot.slane %v2929, 5
        %v3030 = vrot.slane %v3029, 4
        %v3031 = vrot.slane %v2930, 5
        %v3032 = vsel %vm1374, %v3030, %v3031
        %v3033 = vrot.slane %v3031, 4
        %v3034 = vrot.slane %v2931, 5
        %v3035 = vsel %vm1374, %v3033, %v3034
        %v3036 = vrot.slane %v2932, 5
        %v3037 = vrot.slane %v3036, 4
        %v3038 = vrot.slane %v2933, 5
        %v3039 = vsel %vm1374, %v3037, %v3038
        %v3040 = vrot.slane %v3038, 4
        %v3041 = vrot.slane %v2934, 5
        %v3042 = vsel %vm1374, %v3040, %v3041
        %v3043 = vrot.slane %v2935, 5
        %v3044 = vrot.slane %v3043, 4
        %v3045 = vrot.slane %v2936, 5
        %v3046 = vsel %vm1374, %v3044, %v3045
        %v3047 = vrot.slane %v3045, 4
        %v3048 = vrot.slane %v2937, 5
        %v3049 = vsel %vm1374, %v3047, %v3048
        %v3050 = vrot.slane %v2938, 5
        %v3051 = vrot.slane %v3050, 4
        %v3052 = vrot.slane %v2939, 5
        %v3053 = vsel %vm1374, %v3051, %v3052
        %v3054 = vrot.slane %v3052, 4
        %v3055 = vrot.slane %v2940, 5
        %v3056 = vsel %vm1374, %v3054, %v3055
        %v3057 = vrot.slane %v2941, 5
        %v3058 = vrot.slane %v3057, 4
        %v3059 = vrot.slane %v2942, 5
        %v3060 = vsel %vm1374, %v3058, %v3059
        %v3061 = vrot.slane %v3059, 4
        %v3062 = vrot.slane %v2943, 5
        %v3063 = vsel %vm1374, %v3061, %v3062
        %v3064 = vrot.slane %v2944, 5
        %v3065 = vrot.slane %v3064, 4
        %v3066 = vrot.slane %v2945, 5
        %v3067 = vsel %vm1374, %v3065, %v3066
        %v3068 = vrot.slane %v3066, 4
        %v3069 = vrot.slane %v2946, 5
        %v3070 = vsel %vm1374, %v3068, %v3069
        %v3071 = vrot.slane %v2947, 5
        %v3072 = vrot.slane %v3071, 4
        %v3073 = vrot.slane %v2948, 5
        %v3074 = vsel %vm1374, %v3072, %v3073
        %v3075 = vrot.slane %v3073, 4
        %v3076 = vrot.slane %v2949, 5
        %v3077 = vsel %vm1374, %v3075, %v3076
        %v3078 = vrot.slane %v2950, 5
        %v3079 = vrot.slane %v3078, 4
        %v3080 = vrot.slane %v2951, 5
        %v3081 = vsel %vm1374, %v3079, %v3080
        %v3082 = vrot.slane %v3080, 4
        %v3083 = vrot.slane %v2952, 5
        %v3084 = vsel %vm1374, %v3082, %v3083
        %v3085 = vrot.slane %v2953, 5
        %v3086 = vrot.slane %v3085, 4
        %v3087 = vrot.slane %v2954, 5
        %v3088 = vsel %vm1374, %v3086, %v3087
        %v3089 = vrot.slane %v3087, 4
        %v3090 = vrot.slane %v2955, 5
        %v3091 = vsel %vm1374, %v3089, %v3090
        %v3092 = vrot.slane %v2956, 5
        %v3093 = vrot.slane %v3092, 4
        %v3094 = vrot.slane %v2957, 5
        %v3095 = vsel %vm1374, %v3093, %v3094
        %v3096 = vrot.slane %v3094, 4
        %v3097 = vrot.slane %v2958, 5
        %v3098 = vsel %vm1374, %v3096, %v3097
        %v3099 = vrot.slane %v2959, 5
        %v3100 = vrot.slane %v3099, 4
        %v3101 = vrot.slane %v2960, 5
        %v3102 = vsel %vm1374, %v3100, %v3101
        %v3103 = vrot.slane %v3101, 4
        %v3104 = vrot.slane %v2961, 5
        %v3105 = vsel %vm1374, %v3103, %v3104
        %v3106 = vrot.slane %v2962, 5
        %v3107 = vrot.slane %v3106, 4
        %v3108 = vrot.slane %v2963, 5
        %v3109 = vsel %vm1374, %v3107, %v3108
        %v3110 = vrot.slane %v3108, 4
        %v3111 = vrot.slane %v2964, 5
        %v3112 = vsel %vm1374, %v3110, %v3111
        %v3113 = vrot.slane %v2965, 5
        %v3114 = vrot.slane %v3113, 4
        %v3115 = vrot.slane %v2966, 5
        %v3116 = vsel %vm1374, %v3114, %v3115
        %v3117 = vrot.slane %v3115, 4
        %v3118 = vrot.slane %v2967, 5
        %v3119 = vsel %vm1374, %v3117, %v3118
        %v3120 = vrot.slane %v2968, 5
        %v3121 = vrot.slane %v3120, 4
        %v3122 = vrot.slane %v2969, 5
        %v3123 = vsel %vm1374, %v3121, %v3122
        %v3124 = vrot.slane %v3122, 4
        %v3125 = vrot.slane %v2970, 5
        %v3126 = vsel %vm1374, %v3124, %v3125
        %v3127 = vrot.slane %v2971, 5
        %v3128 = vrot.slane %v3127, 4
        %v3129 = vrot.slane %v2972, 5
        %v3130 = vsel %vm1374, %v3128, %v3129
        %v3131 = vrot.slane %v3129, 4
        %v3132 = vrot.slane %v2973, 5
        %v3133 = vsel %vm1374, %v3131, %v3132
        %s3134 = scalar_lea.vmem %s210, 320
        %v3135 = vld [vmem:[%s3134] sm:$0xf]
        %v3136 = vld [vmem:[%s3134 + $0x4] sm:$0xf]
        %v3137 = vld [vmem:[%s3134 + $0x8] sm:$0xf]
        %v3138 = vld [vmem:[%s3134 + $0xc] sm:$0xf]
        %v3139 = vld [vmem:[%s3134 + $0x10] sm:$0xf]
        %v3140 = vld [vmem:[%s3134 + $0x14] sm:$0xf]
        %v3141 = vld [vmem:[%s3134 + $0x18] sm:$0xf]
        %v3142 = vld [vmem:[%s3134 + $0x1c] sm:$0xf]
        %v3143 = vld [vmem:[%s3134 + $0x20] sm:$0xf]
        %v3144 = vld [vmem:[%s3134 + $0x24] sm:$0xf]
        %v3145 = vld [vmem:[%s3134 + $0x28] sm:$0xf]
        %v3146 = vld [vmem:[%s3134 + $0x2c] sm:$0xf]
        %v3147 = vld [vmem:[%s3134 + $0x30] sm:$0xf]
        %v3148 = vld [vmem:[%s3134 + $0x34] sm:$0xf]
        %v3149 = vld [vmem:[%s3134 + $0x38] sm:$0xf]
        %v3150 = vld [vmem:[%s3134 + $0x3c] sm:$0xf]
        %v3151 = vunpack.c.l.b16 %v3025
        %v3152 = vunpack.c.l.b16 %v3028
        %v3153 = vunpack.c.l.b16 %v3032
        %v3154 = vunpack.c.l.b16 %v3035
        %v3155 = vunpack.c.l.b16 %v3039
        %v3156 = vunpack.c.l.b16 %v3042
        %v3157 = vunpack.c.l.b16 %v3046
        %v3158 = vunpack.c.l.b16 %v3049
        %v3159 = vunpack.c.l.b16 %v3053
        %v3160 = vunpack.c.l.b16 %v3056
        %v3161 = vunpack.c.l.b16 %v3060
        %v3162 = vunpack.c.l.b16 %v3063
        %v3163 = vunpack.c.l.b16 %v3067
        %v3164 = vunpack.c.l.b16 %v3070
        %v3165 = vunpack.c.l.b16 %v3074
        %v3166 = vunpack.c.l.b16 %v3077
        %v3167 = vunpack.c.l.b16 %v3081
        %v3168 = vunpack.c.l.b16 %v3084
        %v3169 = vunpack.c.l.b16 %v3088
        %v3170 = vunpack.c.l.b16 %v3091
        %v3171 = vunpack.c.l.b16 %v3095
        %v3172 = vunpack.c.l.b16 %v3098
        %v3173 = vunpack.c.l.b16 %v3102
        %v3174 = vunpack.c.l.b16 %v3105
        %v3175 = vunpack.c.l.b16 %v3109
        %v3176 = vunpack.c.l.b16 %v3112
        %v3177 = vunpack.c.l.b16 %v3116
        %v3178 = vunpack.c.l.b16 %v3119
        %v3179 = vunpack.c.l.b16 %v3123
        %v3180 = vunpack.c.l.b16 %v3126
        %v3181 = vunpack.c.l.b16 %v3130
        %v3182 = vunpack.c.l.b16 %v3133
        %v3183 = vpack.c.b16 %v3152, %v3151
        %v3184 = vpack.c.b16 %v3154, %v3153
        %v3185 = vpack.c.b16 %v3156, %v3155
        %v3186 = vpack.c.b16 %v3158, %v3157
        %v3187 = vpack.c.b16 %v3160, %v3159
        %v3188 = vpack.c.b16 %v3162, %v3161
        %v3189 = vpack.c.b16 %v3164, %v3163
        %v3190 = vpack.c.b16 %v3166, %v3165
        %v3191 = vpack.c.b16 %v3168, %v3167
        %v3192 = vpack.c.b16 %v3170, %v3169
        %v3193 = vpack.c.b16 %v3172, %v3171
        %v3194 = vpack.c.b16 %v3174, %v3173
        %v3195 = vpack.c.b16 %v3176, %v3175
        %v3196 = vpack.c.b16 %v3178, %v3177
        %v3197 = vpack.c.b16 %v3180, %v3179
        %v3198 = vpack.c.b16 %v3182, %v3181
        %v3231 = vunpack.c.l.b16 %v3135
        %v3232 = vunpack.c.l.b16 %v3136
        %v3233 = vunpack.c.l.b16 %v3137
        %v3234 = vunpack.c.l.b16 %v3138
        %v3235 = vunpack.c.l.b16 %v3139
        %v3236 = vunpack.c.l.b16 %v3140
        %v3237 = vunpack.c.l.b16 %v3141
        %v3238 = vunpack.c.l.b16 %v3142
        %v3239 = vunpack.c.l.b16 %v3143
        %v3240 = vunpack.c.l.b16 %v3144
        %v3241 = vunpack.c.l.b16 %v3145
        %v3242 = vunpack.c.l.b16 %v3146
        %v3243 = vunpack.c.l.b16 %v3147
        %v3244 = vunpack.c.l.b16 %v3148
        %v3245 = vunpack.c.l.b16 %v3149
        %v3246 = vunpack.c.l.b16 %v3150
        %v3247 = vpack.c.b16 %v3232, %v3231
        %v3248 = vpack.c.b16 %v3234, %v3233
        %v3249 = vpack.c.b16 %v3236, %v3235
        %v3250 = vpack.c.b16 %v3238, %v3237
        %v3251 = vpack.c.b16 %v3240, %v3239
        %v3252 = vpack.c.b16 %v3242, %v3241
        %v3253 = vpack.c.b16 %v3244, %v3243
        %v3254 = vpack.c.b16 %v3246, %v3245
        %3263 = vmatpush.bf16.msra.mxu0 %v3254
        %3264 = vmatpush.bf16.msra.mxu0 %v3253
        %3265 = vmatpush.bf16.msra.mxu0 %v3252
        %3266 = vmatpush.bf16.msra.mxu0 %v3251
        %3267 = vmatpush.bf16.msra.mxu0 %v3250
        %3268 = vmatpush.bf16.msra.mxu0 %v3249
        %3269 = vmatpush.bf16.msra.mxu0 %v3248
        %3270 = vmatpush.bf16.msra.mxu0 %v3247
        %3271 = vmatmul.bf16.gmra.mxu0 %v3183
        %v3272 = vpop.f32.mrf.mxu0
        %v3273 = vadd.f32 0.0, %v3272
        %v3274 = vpop.f32.mrf.mxu0
        %v3275 = vadd.f32 0.0, %v3274
        %3276 = vmatmul.bf16.gmra.mxu0 %v3184
        %v3277 = vpop.f32.mrf.mxu0
        %v3278 = vadd.f32 0.0, %v3277
        %v3279 = vpop.f32.mrf.mxu0
        %v3280 = vadd.f32 0.0, %v3279
        %3281 = vmatmul.bf16.gmra.mxu0 %v3185
        %v3282 = vpop.f32.mrf.mxu0
        %v3283 = vadd.f32 0.0, %v3282
        %v3284 = vpop.f32.mrf.mxu0
        %v3285 = vadd.f32 0.0, %v3284
        %3286 = vmatmul.bf16.gmra.mxu0 %v3186
        %v3287 = vpop.f32.mrf.mxu0
        %v3288 = vadd.f32 0.0, %v3287
        %v3289 = vpop.f32.mrf.mxu0
        %v3290 = vadd.f32 0.0, %v3289
        %3291 = vmatmul.bf16.gmra.mxu0 %v3187
        %v3292 = vpop.f32.mrf.mxu0
        %v3293 = vadd.f32 0.0, %v3292
        %v3294 = vpop.f32.mrf.mxu0
        %v3295 = vadd.f32 0.0, %v3294
        %3296 = vmatmul.bf16.gmra.mxu0 %v3188
        %v3297 = vpop.f32.mrf.mxu0
        %v3298 = vadd.f32 0.0, %v3297
        %v3299 = vpop.f32.mrf.mxu0
        %v3300 = vadd.f32 0.0, %v3299
        %3301 = vmatmul.bf16.gmra.mxu0 %v3189
        %v3302 = vpop.f32.mrf.mxu0
        %v3303 = vadd.f32 0.0, %v3302
        %v3304 = vpop.f32.mrf.mxu0
        %v3305 = vadd.f32 0.0, %v3304
        %3306 = vmatmul.bf16.gmra.mxu0 %v3190
        %v3307 = vpop.f32.mrf.mxu0
        %v3308 = vadd.f32 0.0, %v3307
        %v3309 = vpop.f32.mrf.mxu0
        %v3310 = vadd.f32 0.0, %v3309
        %3311 = vmatmul.bf16.gmra.mxu0 %v3191
        %v3312 = vpop.f32.mrf.mxu0
        %v3313 = vadd.f32 0.0, %v3312
        %v3314 = vpop.f32.mrf.mxu0
        %v3315 = vadd.f32 0.0, %v3314
        %3316 = vmatmul.bf16.gmra.mxu0 %v3192
        %v3317 = vpop.f32.mrf.mxu0
        %v3318 = vadd.f32 0.0, %v3317
        %v3319 = vpop.f32.mrf.mxu0
        %v3320 = vadd.f32 0.0, %v3319
        %3321 = vmatmul.bf16.gmra.mxu0 %v3193
        %v3322 = vpop.f32.mrf.mxu0
        %v3323 = vadd.f32 0.0, %v3322
        %v3324 = vpop.f32.mrf.mxu0
        %v3325 = vadd.f32 0.0, %v3324
        %3326 = vmatmul.bf16.gmra.mxu0 %v3194
        %v3327 = vpop.f32.mrf.mxu0
        %v3328 = vadd.f32 0.0, %v3327
        %v3329 = vpop.f32.mrf.mxu0
        %v3330 = vadd.f32 0.0, %v3329
        %3331 = vmatmul.bf16.gmra.mxu0 %v3195
        %v3332 = vpop.f32.mrf.mxu0
        %v3333 = vadd.f32 0.0, %v3332
        %v3334 = vpop.f32.mrf.mxu0
        %v3335 = vadd.f32 0.0, %v3334
        %3336 = vmatmul.bf16.gmra.mxu0 %v3196
        %v3337 = vpop.f32.mrf.mxu0
        %v3338 = vadd.f32 0.0, %v3337
        %v3339 = vpop.f32.mrf.mxu0
        %v3340 = vadd.f32 0.0, %v3339
        %3341 = vmatmul.bf16.gmra.mxu0 %v3197
        %v3342 = vpop.f32.mrf.mxu0
        %v3343 = vadd.f32 0.0, %v3342
        %v3344 = vpop.f32.mrf.mxu0
        %v3345 = vadd.f32 0.0, %v3344
        %3346 = vmatmul.bf16.gmra.mxu0 %v3198
        %v3347 = vpop.f32.mrf.mxu0
        %v3348 = vadd.f32 0.0, %v3347
        %v3349 = vpop.f32.mrf.mxu0
        %v3350 = vadd.f32 0.0, %v3349
        %3351 = vdwg.mxu0
        %v3352 = vld [vmem:[#allocation2] sm:$0xff]
        %v3353 = vld [vmem:[#allocation2 + $0x8] sm:$0xff]
        %v3354 = vld [vmem:[#allocation2 + $0x10] sm:$0xff]
        %v3355 = vld [vmem:[#allocation2 + $0x18] sm:$0xff]
        %v3356 = vld [vmem:[#allocation2 + $0x20] sm:$0xff]
        %v3357 = vld [vmem:[#allocation2 + $0x28] sm:$0xff]
        %v3358 = vld [vmem:[#allocation2 + $0x30] sm:$0xff]
        %v3359 = vld [vmem:[#allocation2 + $0x38] sm:$0xff]
        %v3360 = vld [vmem:[#allocation2 + $0x40] sm:$0xff]
        %v3361 = vld [vmem:[#allocation2 + $0x48] sm:$0xff]
        %v3362 = vld [vmem:[#allocation2 + $0x50] sm:$0xff]
        %v3363 = vld [vmem:[#allocation2 + $0x58] sm:$0xff]
        %v3364 = vld [vmem:[#allocation2 + $0x60] sm:$0xff]
        %v3365 = vld [vmem:[#allocation2 + $0x68] sm:$0xff]
        %v3366 = vld [vmem:[#allocation2 + $0x70] sm:$0xff]
        %v3367 = vld [vmem:[#allocation2 + $0x78] sm:$0xff]
        %v3368 = vld [vmem:[#allocation2 + $0x80] sm:$0xff]
        %v3369 = vld [vmem:[#allocation2 + $0x88] sm:$0xff]
        %v3370 = vld [vmem:[#allocation2 + $0x90] sm:$0xff]
        %v3371 = vld [vmem:[#allocation2 + $0x98] sm:$0xff]
        %v3372 = vld [vmem:[#allocation2 + $0xa0] sm:$0xff]
        %v3373 = vld [vmem:[#allocation2 + $0xa8] sm:$0xff]
        %v3374 = vld [vmem:[#allocation2 + $0xb0] sm:$0xff]
        %v3375 = vld [vmem:[#allocation2 + $0xb8] sm:$0xff]
        %v3376 = vld [vmem:[#allocation2 + $0xc0] sm:$0xff]
        %v3377 = vld [vmem:[#allocation2 + $0xc8] sm:$0xff]
        %v3378 = vld [vmem:[#allocation2 + $0xd0] sm:$0xff]
        %v3379 = vld [vmem:[#allocation2 + $0xd8] sm:$0xff]
        %v3380 = vld [vmem:[#allocation2 + $0xe0] sm:$0xff]
        %v3381 = vld [vmem:[#allocation2 + $0xe8] sm:$0xff]
        %v3382 = vld [vmem:[#allocation2 + $0xf0] sm:$0xff]
        %v3383 = vld [vmem:[#allocation2 + $0xf8] sm:$0xff]
        %v3384 = vadd.f32 %v3352, %v3273
        %v3385 = vadd.f32 %v3353, %v3275
        %v3386 = vadd.f32 %v3354, %v3278
        %v3387 = vadd.f32 %v3355, %v3280
        %v3388 = vadd.f32 %v3356, %v3283
        %v3389 = vadd.f32 %v3357, %v3285
        %v3390 = vadd.f32 %v3358, %v3288
        %v3391 = vadd.f32 %v3359, %v3290
        %v3392 = vadd.f32 %v3360, %v3293
        %v3393 = vadd.f32 %v3361, %v3295
        %v3394 = vadd.f32 %v3362, %v3298
        %v3395 = vadd.f32 %v3363, %v3300
        %v3396 = vadd.f32 %v3364, %v3303
        %v3397 = vadd.f32 %v3365, %v3305
        %v3398 = vadd.f32 %v3366, %v3308
        %v3399 = vadd.f32 %v3367, %v3310
        %v3400 = vadd.f32 %v3368, %v3313
        %v3401 = vadd.f32 %v3369, %v3315
        %v3402 = vadd.f32 %v3370, %v3318
        %v3403 = vadd.f32 %v3371, %v3320
        %v3404 = vadd.f32 %v3372, %v3323
        %v3405 = vadd.f32 %v3373, %v3325
        %v3406 = vadd.f32 %v3374, %v3328
        %v3407 = vadd.f32 %v3375, %v3330
        %v3408 = vadd.f32 %v3376, %v3333
        %v3409 = vadd.f32 %v3377, %v3335
        %v3410 = vadd.f32 %v3378, %v3338
        %v3411 = vadd.f32 %v3379, %v3340
        %v3412 = vadd.f32 %v3380, %v3343
        %v3413 = vadd.f32 %v3381, %v3345
        %v3414 = vadd.f32 %v3382, %v3348
        %v3415 = vadd.f32 %v3383, %v3350
        %3416 = vst [vmem:[#allocation2] sm:$0xff] %v3384
        %3417 = vst [vmem:[#allocation2 + $0x8] sm:$0xff] %v3385
        %3418 = vst [vmem:[#allocation2 + $0x10] sm:$0xff] %v3386
        %3419 = vst [vmem:[#allocation2 + $0x18] sm:$0xff] %v3387
        %3420 = vst [vmem:[#allocation2 + $0x20] sm:$0xff] %v3388
        %3421 = vst [vmem:[#allocation2 + $0x28] sm:$0xff] %v3389
        %3422 = vst [vmem:[#allocation2 + $0x30] sm:$0xff] %v3390
        %3423 = vst [vmem:[#allocation2 + $0x38] sm:$0xff] %v3391
        %3424 = vst [vmem:[#allocation2 + $0x40] sm:$0xff] %v3392
        %3425 = vst [vmem:[#allocation2 + $0x48] sm:$0xff] %v3393
        %3426 = vst [vmem:[#allocation2 + $0x50] sm:$0xff] %v3394
        %3427 = vst [vmem:[#allocation2 + $0x58] sm:$0xff] %v3395
        %3428 = vst [vmem:[#allocation2 + $0x60] sm:$0xff] %v3396
        %3429 = vst [vmem:[#allocation2 + $0x68] sm:$0xff] %v3397
        %3430 = vst [vmem:[#allocation2 + $0x70] sm:$0xff] %v3398
        %3431 = vst [vmem:[#allocation2 + $0x78] sm:$0xff] %v3399
        %3432 = vst [vmem:[#allocation2 + $0x80] sm:$0xff] %v3400
        %3433 = vst [vmem:[#allocation2 + $0x88] sm:$0xff] %v3401
        %3434 = vst [vmem:[#allocation2 + $0x90] sm:$0xff] %v3402
        %3435 = vst [vmem:[#allocation2 + $0x98] sm:$0xff] %v3403
        %3436 = vst [vmem:[#allocation2 + $0xa0] sm:$0xff] %v3404
        %3437 = vst [vmem:[#allocation2 + $0xa8] sm:$0xff] %v3405
        %3438 = vst [vmem:[#allocation2 + $0xb0] sm:$0xff] %v3406
        %3439 = vst [vmem:[#allocation2 + $0xb8] sm:$0xff] %v3407
        %3440 = vst [vmem:[#allocation2 + $0xc0] sm:$0xff] %v3408
        %3441 = vst [vmem:[#allocation2 + $0xc8] sm:$0xff] %v3409
        %3442 = vst [vmem:[#allocation2 + $0xd0] sm:$0xff] %v3410
        %3443 = vst [vmem:[#allocation2 + $0xd8] sm:$0xff] %v3411
        %3444 = vst [vmem:[#allocation2 + $0xe0] sm:$0xff] %v3412
        %3445 = vst [vmem:[#allocation2 + $0xe8] sm:$0xff] %v3413
        %3446 = vst [vmem:[#allocation2 + $0xf0] sm:$0xff] %v3414
        %3447 = vst [vmem:[#allocation2 + $0xf8] sm:$0xff] %v3415
        %s3448 = scalar_lea.vmem %s206, 24
        %v3449 = vld [vmem:[%s3448] sm:$0xf]
        %v3450 = vld [vmem:[%s3448 + $0x4] sm:$0xf]
        %v3451 = vld [vmem:[%s3448 + $0xc] sm:$0xf]
        %v3452 = vld [vmem:[%s3448 + $0x10] sm:$0xf]
        %v3453 = vld [vmem:[%s3448 + $0x18] sm:$0xf]
        %v3454 = vld [vmem:[%s3448 + $0x1c] sm:$0xf]
        %v3455 = vld [vmem:[%s3448 + $0x24] sm:$0xf]
        %v3456 = vld [vmem:[%s3448 + $0x28] sm:$0xf]
        %v3457 = vld [vmem:[%s3448 + $0x30] sm:$0xf]
        %v3458 = vld [vmem:[%s3448 + $0x34] sm:$0xf]
        %v3459 = vld [vmem:[%s3448 + $0x3c] sm:$0xf]
        %v3460 = vld [vmem:[%s3448 + $0x40] sm:$0xf]
        %v3461 = vld [vmem:[%s3448 + $0x48] sm:$0xf]
        %v3462 = vld [vmem:[%s3448 + $0x4c] sm:$0xf]
        %v3463 = vld [vmem:[%s3448 + $0x54] sm:$0xf]
        %v3464 = vld [vmem:[%s3448 + $0x58] sm:$0xf]
        %v3465 = vld [vmem:[%s3448 + $0x60] sm:$0xf]
        %v3466 = vld [vmem:[%s3448 + $0x64] sm:$0xf]
        %v3467 = vld [vmem:[%s3448 + $0x6c] sm:$0xf]
        %v3468 = vld [vmem:[%s3448 + $0x70] sm:$0xf]
        %v3469 = vld [vmem:[%s3448 + $0x78] sm:$0xf]
        %v3470 = vld [vmem:[%s3448 + $0x7c] sm:$0xf]
        %v3471 = vld [vmem:[%s3448 + $0x84] sm:$0xf]
        %v3472 = vld [vmem:[%s3448 + $0x88] sm:$0xf]
        %v3473 = vld [vmem:[%s3448 + $0x90] sm:$0xf]
        %v3474 = vld [vmem:[%s3448 + $0x94] sm:$0xf]
        %v3475 = vld [vmem:[%s3448 + $0x9c] sm:$0xf]
        %v3476 = vld [vmem:[%s3448 + $0xa0] sm:$0xf]
        %v3477 = vld [vmem:[%s3448 + $0xa8] sm:$0xf]
        %v3478 = vld [vmem:[%s3448 + $0xac] sm:$0xf]
        %v3479 = vld [vmem:[%s3448 + $0xb4] sm:$0xf]
        %v3480 = vld [vmem:[%s3448 + $0xb8] sm:$0xf]
        %s3481 = scalar_lea.vmem %s210, 384
        %v3482 = vld [vmem:[%s3481] sm:$0xf]
        %v3483 = vld [vmem:[%s3481 + $0x4] sm:$0xf]
        %v3484 = vld [vmem:[%s3481 + $0x8] sm:$0xf]
        %v3485 = vld [vmem:[%s3481 + $0xc] sm:$0xf]
        %v3486 = vld [vmem:[%s3481 + $0x10] sm:$0xf]
        %v3487 = vld [vmem:[%s3481 + $0x14] sm:$0xf]
        %v3488 = vld [vmem:[%s3481 + $0x18] sm:$0xf]
        %v3489 = vld [vmem:[%s3481 + $0x1c] sm:$0xf]
        %v3490 = vld [vmem:[%s3481 + $0x20] sm:$0xf]
        %v3491 = vld [vmem:[%s3481 + $0x24] sm:$0xf]
        %v3492 = vld [vmem:[%s3481 + $0x28] sm:$0xf]
        %v3493 = vld [vmem:[%s3481 + $0x2c] sm:$0xf]
        %v3494 = vld [vmem:[%s3481 + $0x30] sm:$0xf]
        %v3495 = vld [vmem:[%s3481 + $0x34] sm:$0xf]
        %v3496 = vld [vmem:[%s3481 + $0x38] sm:$0xf]
        %v3497 = vld [vmem:[%s3481 + $0x3c] sm:$0xf]
        %v3530 = vunpack.c.l.b16 %v3449
        %v3531 = vunpack.c.l.b16 %v3450
        %v3532 = vunpack.c.l.b16 %v3451
        %v3533 = vunpack.c.l.b16 %v3452
        %v3534 = vunpack.c.l.b16 %v3453
        %v3535 = vunpack.c.l.b16 %v3454
        %v3536 = vunpack.c.l.b16 %v3455
        %v3537 = vunpack.c.l.b16 %v3456
        %v3538 = vunpack.c.l.b16 %v3457
        %v3539 = vunpack.c.l.b16 %v3458
        %v3540 = vunpack.c.l.b16 %v3459
        %v3541 = vunpack.c.l.b16 %v3460
        %v3542 = vunpack.c.l.b16 %v3461
        %v3543 = vunpack.c.l.b16 %v3462
        %v3544 = vunpack.c.l.b16 %v3463
        %v3545 = vunpack.c.l.b16 %v3464
        %v3546 = vunpack.c.l.b16 %v3465
        %v3547 = vunpack.c.l.b16 %v3466
        %v3548 = vunpack.c.l.b16 %v3467
        %v3549 = vunpack.c.l.b16 %v3468
        %v3550 = vunpack.c.l.b16 %v3469
        %v3551 = vunpack.c.l.b16 %v3470
        %v3552 = vunpack.c.l.b16 %v3471
        %v3553 = vunpack.c.l.b16 %v3472
        %v3554 = vunpack.c.l.b16 %v3473
        %v3555 = vunpack.c.l.b16 %v3474
        %v3556 = vunpack.c.l.b16 %v3475
        %v3557 = vunpack.c.l.b16 %v3476
        %v3558 = vunpack.c.l.b16 %v3477
        %v3559 = vunpack.c.l.b16 %v3478
        %v3560 = vunpack.c.l.b16 %v3479
        %v3561 = vunpack.c.l.b16 %v3480
        %v3562 = vpack.c.b16 %v3531, %v3530
        %v3563 = vpack.c.b16 %v3533, %v3532
        %v3564 = vpack.c.b16 %v3535, %v3534
        %v3565 = vpack.c.b16 %v3537, %v3536
        %v3566 = vpack.c.b16 %v3539, %v3538
        %v3567 = vpack.c.b16 %v3541, %v3540
        %v3568 = vpack.c.b16 %v3543, %v3542
        %v3569 = vpack.c.b16 %v3545, %v3544
        %v3570 = vpack.c.b16 %v3547, %v3546
        %v3571 = vpack.c.b16 %v3549, %v3548
        %v3572 = vpack.c.b16 %v3551, %v3550
        %v3573 = vpack.c.b16 %v3553, %v3552
        %v3574 = vpack.c.b16 %v3555, %v3554
        %v3575 = vpack.c.b16 %v3557, %v3556
        %v3576 = vpack.c.b16 %v3559, %v3558
        %v3577 = vpack.c.b16 %v3561, %v3560
        %v3610 = vunpack.c.l.b16 %v3482
        %v3611 = vunpack.c.l.b16 %v3483
        %v3612 = vunpack.c.l.b16 %v3484
        %v3613 = vunpack.c.l.b16 %v3485
        %v3614 = vunpack.c.l.b16 %v3486
        %v3615 = vunpack.c.l.b16 %v3487
        %v3616 = vunpack.c.l.b16 %v3488
        %v3617 = vunpack.c.l.b16 %v3489
        %v3618 = vunpack.c.l.b16 %v3490
        %v3619 = vunpack.c.l.b16 %v3491
        %v3620 = vunpack.c.l.b16 %v3492
        %v3621 = vunpack.c.l.b16 %v3493
        %v3622 = vunpack.c.l.b16 %v3494
        %v3623 = vunpack.c.l.b16 %v3495
        %v3624 = vunpack.c.l.b16 %v3496
        %v3625 = vunpack.c.l.b16 %v3497
        %v3626 = vpack.c.b16 %v3611, %v3610
        %v3627 = vpack.c.b16 %v3613, %v3612
        %v3628 = vpack.c.b16 %v3615, %v3614
        %v3629 = vpack.c.b16 %v3617, %v3616
        %v3630 = vpack.c.b16 %v3619, %v3618
        %v3631 = vpack.c.b16 %v3621, %v3620
        %v3632 = vpack.c.b16 %v3623, %v3622
        %v3633 = vpack.c.b16 %v3625, %v3624
        %3642 = vmatpush.bf16.msra.mxu0 %v3633
        %3643 = vmatpush.bf16.msra.mxu0 %v3632
        %3644 = vmatpush.bf16.msra.mxu0 %v3631
        %3645 = vmatpush.bf16.msra.mxu0 %v3630
        %3646 = vmatpush.bf16.msra.mxu0 %v3629
        %3647 = vmatpush.bf16.msra.mxu0 %v3628
        %3648 = vmatpush.bf16.msra.mxu0 %v3627
        %3649 = vmatpush.bf16.msra.mxu0 %v3626
        %3650 = vmatmul.bf16.gmra.mxu0 %v3562
        %v3651 = vpop.f32.mrf.mxu0
        %v3652 = vadd.f32 0.0, %v3651
        %v3653 = vpop.f32.mrf.mxu0
        %v3654 = vadd.f32 0.0, %v3653
        %3655 = vmatmul.bf16.gmra.mxu0 %v3563
        %v3656 = vpop.f32.mrf.mxu0
        %v3657 = vadd.f32 0.0, %v3656
        %v3658 = vpop.f32.mrf.mxu0
        %v3659 = vadd.f32 0.0, %v3658
        %3660 = vmatmul.bf16.gmra.mxu0 %v3564
        %v3661 = vpop.f32.mrf.mxu0
        %v3662 = vadd.f32 0.0, %v3661
        %v3663 = vpop.f32.mrf.mxu0
        %v3664 = vadd.f32 0.0, %v3663
        %3665 = vmatmul.bf16.gmra.mxu0 %v3565
        %v3666 = vpop.f32.mrf.mxu0
        %v3667 = vadd.f32 0.0, %v3666
        %v3668 = vpop.f32.mrf.mxu0
        %v3669 = vadd.f32 0.0, %v3668
        %3670 = vmatmul.bf16.gmra.mxu0 %v3566
        %v3671 = vpop.f32.mrf.mxu0
        %v3672 = vadd.f32 0.0, %v3671
        %v3673 = vpop.f32.mrf.mxu0
        %v3674 = vadd.f32 0.0, %v3673
        %3675 = vmatmul.bf16.gmra.mxu0 %v3567
        %v3676 = vpop.f32.mrf.mxu0
        %v3677 = vadd.f32 0.0, %v3676
        %v3678 = vpop.f32.mrf.mxu0
        %v3679 = vadd.f32 0.0, %v3678
        %3680 = vmatmul.bf16.gmra.mxu0 %v3568
        %v3681 = vpop.f32.mrf.mxu0
        %v3682 = vadd.f32 0.0, %v3681
        %v3683 = vpop.f32.mrf.mxu0
        %v3684 = vadd.f32 0.0, %v3683
        %3685 = vmatmul.bf16.gmra.mxu0 %v3569
        %v3686 = vpop.f32.mrf.mxu0
        %v3687 = vadd.f32 0.0, %v3686
        %v3688 = vpop.f32.mrf.mxu0
        %v3689 = vadd.f32 0.0, %v3688
        %3690 = vmatmul.bf16.gmra.mxu0 %v3570
        %v3691 = vpop.f32.mrf.mxu0
        %v3692 = vadd.f32 0.0, %v3691
        %v3693 = vpop.f32.mrf.mxu0
        %v3694 = vadd.f32 0.0, %v3693
        %3695 = vmatmul.bf16.gmra.mxu0 %v3571
        %v3696 = vpop.f32.mrf.mxu0
        %v3697 = vadd.f32 0.0, %v3696
        %v3698 = vpop.f32.mrf.mxu0
        %v3699 = vadd.f32 0.0, %v3698
        %3700 = vmatmul.bf16.gmra.mxu0 %v3572
        %v3701 = vpop.f32.mrf.mxu0
        %v3702 = vadd.f32 0.0, %v3701
        %v3703 = vpop.f32.mrf.mxu0
        %v3704 = vadd.f32 0.0, %v3703
        %3705 = vmatmul.bf16.gmra.mxu0 %v3573
        %v3706 = vpop.f32.mrf.mxu0
        %v3707 = vadd.f32 0.0, %v3706
        %v3708 = vpop.f32.mrf.mxu0
        %v3709 = vadd.f32 0.0, %v3708
        %3710 = vmatmul.bf16.gmra.mxu0 %v3574
        %v3711 = vpop.f32.mrf.mxu0
        %v3712 = vadd.f32 0.0, %v3711
        %v3713 = vpop.f32.mrf.mxu0
        %v3714 = vadd.f32 0.0, %v3713
        %3715 = vmatmul.bf16.gmra.mxu0 %v3575
        %v3716 = vpop.f32.mrf.mxu0
        %v3717 = vadd.f32 0.0, %v3716
        %v3718 = vpop.f32.mrf.mxu0
        %v3719 = vadd.f32 0.0, %v3718
        %3720 = vmatmul.bf16.gmra.mxu0 %v3576
        %v3721 = vpop.f32.mrf.mxu0
        %v3722 = vadd.f32 0.0, %v3721
        %v3723 = vpop.f32.mrf.mxu0
        %v3724 = vadd.f32 0.0, %v3723
        %3725 = vmatmul.bf16.gmra.mxu0 %v3577
        %v3726 = vpop.f32.mrf.mxu0
        %v3727 = vadd.f32 0.0, %v3726
        %v3728 = vpop.f32.mrf.mxu0
        %v3729 = vadd.f32 0.0, %v3728
        %3730 = vdwg.mxu0
        %v3731 = vld [vmem:[#allocation2] sm:$0xff]
        %v3732 = vld [vmem:[#allocation2 + $0x8] sm:$0xff]
        %v3733 = vld [vmem:[#allocation2 + $0x10] sm:$0xff]
        %v3734 = vld [vmem:[#allocation2 + $0x18] sm:$0xff]
        %v3735 = vld [vmem:[#allocation2 + $0x20] sm:$0xff]
        %v3736 = vld [vmem:[#allocation2 + $0x28] sm:$0xff]
        %v3737 = vld [vmem:[#allocation2 + $0x30] sm:$0xff]
        %v3738 = vld [vmem:[#allocation2 + $0x38] sm:$0xff]
        %v3739 = vld [vmem:[#allocation2 + $0x40] sm:$0xff]
        %v3740 = vld [vmem:[#allocation2 + $0x48] sm:$0xff]
        %v3741 = vld [vmem:[#allocation2 + $0x50] sm:$0xff]
        %v3742 = vld [vmem:[#allocation2 + $0x58] sm:$0xff]
        %v3743 = vld [vmem:[#allocation2 + $0x60] sm:$0xff]
        %v3744 = vld [vmem:[#allocation2 + $0x68] sm:$0xff]
        %v3745 = vld [vmem:[#allocation2 + $0x70] sm:$0xff]
        %v3746 = vld [vmem:[#allocation2 + $0x78] sm:$0xff]
        %v3747 = vld [vmem:[#allocation2 + $0x80] sm:$0xff]
        %v3748 = vld [vmem:[#allocation2 + $0x88] sm:$0xff]
        %v3749 = vld [vmem:[#allocation2 + $0x90] sm:$0xff]
        %v3750 = vld [vmem:[#allocation2 + $0x98] sm:$0xff]
        %v3751 = vld [vmem:[#allocation2 + $0xa0] sm:$0xff]
        %v3752 = vld [vmem:[#allocation2 + $0xa8] sm:$0xff]
        %v3753 = vld [vmem:[#allocation2 + $0xb0] sm:$0xff]
        %v3754 = vld [vmem:[#allocation2 + $0xb8] sm:$0xff]
        %v3755 = vld [vmem:[#allocation2 + $0xc0] sm:$0xff]
        %v3756 = vld [vmem:[#allocation2 + $0xc8] sm:$0xff]
        %v3757 = vld [vmem:[#allocation2 + $0xd0] sm:$0xff]
        %v3758 = vld [vmem:[#allocation2 + $0xd8] sm:$0xff]
        %v3759 = vld [vmem:[#allocation2 + $0xe0] sm:$0xff]
        %v3760 = vld [vmem:[#allocation2 + $0xe8] sm:$0xff]
        %v3761 = vld [vmem:[#allocation2 + $0xf0] sm:$0xff]
        %v3762 = vld [vmem:[#allocation2 + $0xf8] sm:$0xff]
        %v3763 = vadd.f32 %v3731, %v3652
        %v3764 = vadd.f32 %v3732, %v3654
        %v3765 = vadd.f32 %v3733, %v3657
        %v3766 = vadd.f32 %v3734, %v3659
        %v3767 = vadd.f32 %v3735, %v3662
        %v3768 = vadd.f32 %v3736, %v3664
        %v3769 = vadd.f32 %v3737, %v3667
        %v3770 = vadd.f32 %v3738, %v3669
        %v3771 = vadd.f32 %v3739, %v3672
        %v3772 = vadd.f32 %v3740, %v3674
        %v3773 = vadd.f32 %v3741, %v3677
        %v3774 = vadd.f32 %v3742, %v3679
        %v3775 = vadd.f32 %v3743, %v3682
        %v3776 = vadd.f32 %v3744, %v3684
        %v3777 = vadd.f32 %v3745, %v3687
        %v3778 = vadd.f32 %v3746, %v3689
        %v3779 = vadd.f32 %v3747, %v3692
        %v3780 = vadd.f32 %v3748, %v3694
        %v3781 = vadd.f32 %v3749, %v3697
        %v3782 = vadd.f32 %v3750, %v3699
        %v3783 = vadd.f32 %v3751, %v3702
        %v3784 = vadd.f32 %v3752, %v3704
        %v3785 = vadd.f32 %v3753, %v3707
        %v3786 = vadd.f32 %v3754, %v3709
        %v3787 = vadd.f32 %v3755, %v3712
        %v3788 = vadd.f32 %v3756, %v3714
        %v3789 = vadd.f32 %v3757, %v3717
        %v3790 = vadd.f32 %v3758, %v3719
        %v3791 = vadd.f32 %v3759, %v3722
        %v3792 = vadd.f32 %v3760, %v3724
        %v3793 = vadd.f32 %v3761, %v3727
        %v3794 = vadd.f32 %v3762, %v3729
        %3795 = vst [vmem:[#allocation2] sm:$0xff] %v3763
        %3796 = vst [vmem:[#allocation2 + $0x8] sm:$0xff] %v3764
        %3797 = vst [vmem:[#allocation2 + $0x10] sm:$0xff] %v3765
        %3798 = vst [vmem:[#allocation2 + $0x18] sm:$0xff] %v3766
        %3799 = vst [vmem:[#allocation2 + $0x20] sm:$0xff] %v3767
        %3800 = vst [vmem:[#allocation2 + $0x28] sm:$0xff] %v3768
        %3801 = vst [vmem:[#allocation2 + $0x30] sm:$0xff] %v3769
        %3802 = vst [vmem:[#allocation2 + $0x38] sm:$0xff] %v3770
        %3803 = vst [vmem:[#allocation2 + $0x40] sm:$0xff] %v3771
        %3804 = vst [vmem:[#allocation2 + $0x48] sm:$0xff] %v3772
        %3805 = vst [vmem:[#allocation2 + $0x50] sm:$0xff] %v3773
        %3806 = vst [vmem:[#allocation2 + $0x58] sm:$0xff] %v3774
        %3807 = vst [vmem:[#allocation2 + $0x60] sm:$0xff] %v3775
        %3808 = vst [vmem:[#allocation2 + $0x68] sm:$0xff] %v3776
        %3809 = vst [vmem:[#allocation2 + $0x70] sm:$0xff] %v3777
        %3810 = vst [vmem:[#allocation2 + $0x78] sm:$0xff] %v3778
        %3811 = vst [vmem:[#allocation2 + $0x80] sm:$0xff] %v3779
        %3812 = vst [vmem:[#allocation2 + $0x88] sm:$0xff] %v3780
        %3813 = vst [vmem:[#allocation2 + $0x90] sm:$0xff] %v3781
        %3814 = vst [vmem:[#allocation2 + $0x98] sm:$0xff] %v3782
        %3815 = vst [vmem:[#allocation2 + $0xa0] sm:$0xff] %v3783
        %3816 = vst [vmem:[#allocation2 + $0xa8] sm:$0xff] %v3784
        %3817 = vst [vmem:[#allocation2 + $0xb0] sm:$0xff] %v3785
        %3818 = vst [vmem:[#allocation2 + $0xb8] sm:$0xff] %v3786
        %3819 = vst [vmem:[#allocation2 + $0xc0] sm:$0xff] %v3787
        %3820 = vst [vmem:[#allocation2 + $0xc8] sm:$0xff] %v3788
        %3821 = vst [vmem:[#allocation2 + $0xd0] sm:$0xff] %v3789
        %3822 = vst [vmem:[#allocation2 + $0xd8] sm:$0xff] %v3790
        %3823 = vst [vmem:[#allocation2 + $0xe0] sm:$0xff] %v3791
        %3824 = vst [vmem:[#allocation2 + $0xe8] sm:$0xff] %v3792
        %3825 = vst [vmem:[#allocation2 + $0xf0] sm:$0xff] %v3793
        %3826 = vst [vmem:[#allocation2 + $0xf8] sm:$0xff] %v3794
        %v3827 = vld [vmem:[%s3448] sm:$0xf]
        %v3828 = vld [vmem:[%s3448 + $0x4] sm:$0xf]
        %v3829 = vld [vmem:[%s3448 + $0x8] sm:$0x1]
        %v3830 = vld [vmem:[%s3448 + $0xc] sm:$0xf]
        %v3831 = vld [vmem:[%s3448 + $0x10] sm:$0xf]
        %v3832 = vld [vmem:[%s3448 + $0x14] sm:$0x1]
        %v3833 = vld [vmem:[%s3448 + $0x18] sm:$0xf]
        %v3834 = vld [vmem:[%s3448 + $0x1c] sm:$0xf]
        %v3835 = vld [vmem:[%s3448 + $0x20] sm:$0x1]
        %v3836 = vld [vmem:[%s3448 + $0x24] sm:$0xf]
        %v3837 = vld [vmem:[%s3448 + $0x28] sm:$0xf]
        %v3838 = vld [vmem:[%s3448 + $0x2c] sm:$0x1]
        %v3839 = vld [vmem:[%s3448 + $0x30] sm:$0xf]
        %v3840 = vld [vmem:[%s3448 + $0x34] sm:$0xf]
        %v3841 = vld [vmem:[%s3448 + $0x38] sm:$0x1]
        %v3842 = vld [vmem:[%s3448 + $0x3c] sm:$0xf]
        %v3843 = vld [vmem:[%s3448 + $0x40] sm:$0xf]
        %v3844 = vld [vmem:[%s3448 + $0x44] sm:$0x1]
        %v3845 = vld [vmem:[%s3448 + $0x48] sm:$0xf]
        %v3846 = vld [vmem:[%s3448 + $0x4c] sm:$0xf]
        %v3847 = vld [vmem:[%s3448 + $0x50] sm:$0x1]
        %v3848 = vld [vmem:[%s3448 + $0x54] sm:$0xf]
        %v3849 = vld [vmem:[%s3448 + $0x58] sm:$0xf]
        %v3850 = vld [vmem:[%s3448 + $0x5c] sm:$0x1]
        %v3851 = vld [vmem:[%s3448 + $0x60] sm:$0xf]
        %v3852 = vld [vmem:[%s3448 + $0x64] sm:$0xf]
        %v3853 = vld [vmem:[%s3448 + $0x68] sm:$0x1]
        %v3854 = vld [vmem:[%s3448 + $0x6c] sm:$0xf]
        %v3855 = vld [vmem:[%s3448 + $0x70] sm:$0xf]
        %v3856 = vld [vmem:[%s3448 + $0x74] sm:$0x1]
        %v3857 = vld [vmem:[%s3448 + $0x78] sm:$0xf]
        %v3858 = vld [vmem:[%s3448 + $0x7c] sm:$0xf]
        %v3859 = vld [vmem:[%s3448 + $0x80] sm:$0x1]
        %v3860 = vld [vmem:[%s3448 + $0x84] sm:$0xf]
        %v3861 = vld [vmem:[%s3448 + $0x88] sm:$0xf]
        %v3862 = vld [vmem:[%s3448 + $0x8c] sm:$0x1]
        %v3863 = vld [vmem:[%s3448 + $0x90] sm:$0xf]
        %v3864 = vld [vmem:[%s3448 + $0x94] sm:$0xf]
        %v3865 = vld [vmem:[%s3448 + $0x98] sm:$0x1]
        %v3866 = vld [vmem:[%s3448 + $0x9c] sm:$0xf]
        %v3867 = vld [vmem:[%s3448 + $0xa0] sm:$0xf]
        %v3868 = vld [vmem:[%s3448 + $0xa4] sm:$0x1]
        %v3869 = vld [vmem:[%s3448 + $0xa8] sm:$0xf]
        %v3870 = vld [vmem:[%s3448 + $0xac] sm:$0xf]
        %v3871 = vld [vmem:[%s3448 + $0xb0] sm:$0x1]
        %v3872 = vld [vmem:[%s3448 + $0xb4] sm:$0xf]
        %v3873 = vld [vmem:[%s3448 + $0xb8] sm:$0xf]
        %v3874 = vld [vmem:[%s3448 + $0xbc] sm:$0x1]
        %v3876 = vshrl.u32 %v3827, 16
        %v3878 = vrot.slane %v3876, 4
        %v3879 = vshll.u32 %v3827, 16
        %v3881 = vrot.slane %v3879, 5
        %v3882 = vor.u32 %v3878, %v3881
        %v3883 = vrot.slane %v3882, 4
        %v3885 = vshll.u32 %v3828, 16
        %v3887 = vrot.slane %v3885, 5
        %v3888 = vsel %vm577, %v3883, %v3887
        %v3889 = vshrl.u32 %v3828, 16
        %v3891 = vrot.slane %v3889, 4
        %v3892 = vor.u32 %v3891, %v3887
        %v3893 = vrot.slane %v3892, 4
        %v3895 = vshll.u32 %v3829, 16
        %v3897 = vrot.slane %v3895, 5
        %v3898 = vsel %vm577, %v3893, %v3897
        %v3900 = vshrl.u32 %v3830, 16
        %v3902 = vrot.slane %v3900, 4
        %v3903 = vshll.u32 %v3830, 16
        %v3905 = vrot.slane %v3903, 5
        %v3906 = vor.u32 %v3902, %v3905
        %v3907 = vrot.slane %v3906, 4
        %v3909 = vshll.u32 %v3831, 16
        %v3911 = vrot.slane %v3909, 5
        %v3912 = vsel %vm577, %v3907, %v3911
        %v3913 = vshrl.u32 %v3831, 16
        %v3915 = vrot.slane %v3913, 4
        %v3916 = vor.u32 %v3915, %v3911
        %v3917 = vrot.slane %v3916, 4
        %v3919 = vshll.u32 %v3832, 16
        %v3921 = vrot.slane %v3919, 5
        %v3922 = vsel %vm577, %v3917, %v3921
        %v3924 = vshrl.u32 %v3833, 16
        %v3926 = vrot.slane %v3924, 4
        %v3927 = vshll.u32 %v3833, 16
        %v3929 = vrot.slane %v3927, 5
        %v3930 = vor.u32 %v3926, %v3929
        %v3931 = vrot.slane %v3930, 4
        %v3933 = vshll.u32 %v3834, 16
        %v3935 = vrot.slane %v3933, 5
        %v3936 = vsel %vm577, %v3931, %v3935
        %v3937 = vshrl.u32 %v3834, 16
        %v3939 = vrot.slane %v3937, 4
        %v3940 = vor.u32 %v3939, %v3935
        %v3941 = vrot.slane %v3940, 4
        %v3943 = vshll.u32 %v3835, 16
        %v3945 = vrot.slane %v3943, 5
        %v3946 = vsel %vm577, %v3941, %v3945
        %v3948 = vshrl.u32 %v3836, 16
        %v3950 = vrot.slane %v3948, 4
        %v3951 = vshll.u32 %v3836, 16
        %v3953 = vrot.slane %v3951, 5
        %v3954 = vor.u32 %v3950, %v3953
        %v3955 = vrot.slane %v3954, 4
        %v3957 = vshll.u32 %v3837, 16
        %v3959 = vrot.slane %v3957, 5
        %v3960 = vsel %vm577, %v3955, %v3959
        %v3961 = vshrl.u32 %v3837, 16
        %v3963 = vrot.slane %v3961, 4
        %v3964 = vor.u32 %v3963, %v3959
        %v3965 = vrot.slane %v3964, 4
        %v3967 = vshll.u32 %v3838, 16
        %v3969 = vrot.slane %v3967, 5
        %v3970 = vsel %vm577, %v3965, %v3969
        %v3972 = vshrl.u32 %v3839, 16
        %v3974 = vrot.slane %v3972, 4
        %v3975 = vshll.u32 %v3839, 16
        %v3977 = vrot.slane %v3975, 5
        %v3978 = vor.u32 %v3974, %v3977
        %v3979 = vrot.slane %v3978, 4
        %v3981 = vshll.u32 %v3840, 16
        %v3983 = vrot.slane %v3981, 5
        %v3984 = vsel %vm577, %v3979, %v3983
        %v3985 = vshrl.u32 %v3840, 16
        %v3987 = vrot.slane %v3985, 4
        %v3988 = vor.u32 %v3987, %v3983
        %v3989 = vrot.slane %v3988, 4
        %v3991 = vshll.u32 %v3841, 16
        %v3993 = vrot.slane %v3991, 5
        %v3994 = vsel %vm577, %v3989, %v3993
        %v3996 = vshrl.u32 %v3842, 16
        %v3998 = vrot.slane %v3996, 4
        %v3999 = vshll.u32 %v3842, 16
        %v4001 = vrot.slane %v3999, 5
        %v4002 = vor.u32 %v3998, %v4001
        %v4003 = vrot.slane %v4002, 4
        %v4005 = vshll.u32 %v3843, 16
        %v4007 = vrot.slane %v4005, 5
        %v4008 = vsel %vm577, %v4003, %v4007
        %v4009 = vshrl.u32 %v3843, 16
        %v4011 = vrot.slane %v4009, 4
        %v4012 = vor.u32 %v4011, %v4007
        %v4013 = vrot.slane %v4012, 4
        %v4015 = vshll.u32 %v3844, 16
        %v4017 = vrot.slane %v4015, 5
        %v4018 = vsel %vm577, %v4013, %v4017
        %v4020 = vshrl.u32 %v3845, 16
        %v4022 = vrot.slane %v4020, 4
        %v4023 = vshll.u32 %v3845, 16
        %v4025 = vrot.slane %v4023, 5
        %v4026 = vor.u32 %v4022, %v4025
        %v4027 = vrot.slane %v4026, 4
        %v4029 = vshll.u32 %v3846, 16
        %v4031 = vrot.slane %v4029, 5
        %v4032 = vsel %vm577, %v4027, %v4031
        %v4033 = vshrl.u32 %v3846, 16
        %v4035 = vrot.slane %v4033, 4
        %v4036 = vor.u32 %v4035, %v4031
        %v4037 = vrot.slane %v4036, 4
        %v4039 = vshll.u32 %v3847, 16
        %v4041 = vrot.slane %v4039, 5
        %v4042 = vsel %vm577, %v4037, %v4041
        %v4044 = vshrl.u32 %v3848, 16
        %v4046 = vrot.slane %v4044, 4
        %v4047 = vshll.u32 %v3848, 16
        %v4049 = vrot.slane %v4047, 5
        %v4050 = vor.u32 %v4046, %v4049
        %v4051 = vrot.slane %v4050, 4
        %v4053 = vshll.u32 %v3849, 16
        %v4055 = vrot.slane %v4053, 5
        %v4056 = vsel %vm577, %v4051, %v4055
        %v4057 = vshrl.u32 %v3849, 16
        %v4059 = vrot.slane %v4057, 4
        %v4060 = vor.u32 %v4059, %v4055
        %v4061 = vrot.slane %v4060, 4
        %v4063 = vshll.u32 %v3850, 16
        %v4065 = vrot.slane %v4063, 5
        %v4066 = vsel %vm577, %v4061, %v4065
        %v4068 = vshrl.u32 %v3851, 16
        %v4070 = vrot.slane %v4068, 4
        %v4071 = vshll.u32 %v3851, 16
        %v4073 = vrot.slane %v4071, 5
        %v4074 = vor.u32 %v4070, %v4073
        %v4075 = vrot.slane %v4074, 4
        %v4077 = vshll.u32 %v3852, 16
        %v4079 = vrot.slane %v4077, 5
        %v4080 = vsel %vm577, %v4075, %v4079
        %v4081 = vshrl.u32 %v3852, 16
        %v4083 = vrot.slane %v4081, 4
        %v4084 = vor.u32 %v4083, %v4079
        %v4085 = vrot.slane %v4084, 4
        %v4087 = vshll.u32 %v3853, 16
        %v4089 = vrot.slane %v4087, 5
        %v4090 = vsel %vm577, %v4085, %v4089
        %v4092 = vshrl.u32 %v3854, 16
        %v4094 = vrot.slane %v4092, 4
        %v4095 = vshll.u32 %v3854, 16
        %v4097 = vrot.slane %v4095, 5
        %v4098 = vor.u32 %v4094, %v4097
        %v4099 = vrot.slane %v4098, 4
        %v4101 = vshll.u32 %v3855, 16
        %v4103 = vrot.slane %v4101, 5
        %v4104 = vsel %vm577, %v4099, %v4103
        %v4105 = vshrl.u32 %v3855, 16
        %v4107 = vrot.slane %v4105, 4
        %v4108 = vor.u32 %v4107, %v4103
        %v4109 = vrot.slane %v4108, 4
        %v4111 = vshll.u32 %v3856, 16
        %v4113 = vrot.slane %v4111, 5
        %v4114 = vsel %vm577, %v4109, %v4113
        %v4116 = vshrl.u32 %v3857, 16
        %v4118 = vrot.slane %v4116, 4
        %v4119 = vshll.u32 %v3857, 16
        %v4121 = vrot.slane %v4119, 5
        %v4122 = vor.u32 %v4118, %v4121
        %v4123 = vrot.slane %v4122, 4
        %v4125 = vshll.u32 %v3858, 16
        %v4127 = vrot.slane %v4125, 5
        %v4128 = vsel %vm577, %v4123, %v4127
        %v4129 = vshrl.u32 %v3858, 16
        %v4131 = vrot.slane %v4129, 4
        %v4132 = vor.u32 %v4131, %v4127
        %v4133 = vrot.slane %v4132, 4
        %v4135 = vshll.u32 %v3859, 16
        %v4137 = vrot.slane %v4135, 5
        %v4138 = vsel %vm577, %v4133, %v4137
        %v4140 = vshrl.u32 %v3860, 16
        %v4142 = vrot.slane %v4140, 4
        %v4143 = vshll.u32 %v3860, 16
        %v4145 = vrot.slane %v4143, 5
        %v4146 = vor.u32 %v4142, %v4145
        %v4147 = vrot.slane %v4146, 4
        %v4149 = vshll.u32 %v3861, 16
        %v4151 = vrot.slane %v4149, 5
        %v4152 = vsel %vm577, %v4147, %v4151
        %v4153 = vshrl.u32 %v3861, 16
        %v4155 = vrot.slane %v4153, 4
        %v4156 = vor.u32 %v4155, %v4151
        %v4157 = vrot.slane %v4156, 4
        %v4159 = vshll.u32 %v3862, 16
        %v4161 = vrot.slane %v4159, 5
        %v4162 = vsel %vm577, %v4157, %v4161
        %v4164 = vshrl.u32 %v3863, 16
        %v4166 = vrot.slane %v4164, 4
        %v4167 = vshll.u32 %v3863, 16
        %v4169 = vrot.slane %v4167, 5
        %v4170 = vor.u32 %v4166, %v4169
        %v4171 = vrot.slane %v4170, 4
        %v4173 = vshll.u32 %v3864, 16
        %v4175 = vrot.slane %v4173, 5
        %v4176 = vsel %vm577, %v4171, %v4175
        %v4177 = vshrl.u32 %v3864, 16
        %v4179 = vrot.slane %v4177, 4
        %v4180 = vor.u32 %v4179, %v4175
        %v4181 = vrot.slane %v4180, 4
        %v4183 = vshll.u32 %v3865, 16
        %v4185 = vrot.slane %v4183, 5
        %v4186 = vsel %vm577, %v4181, %v4185
        %v4188 = vshrl.u32 %v3866, 16
        %v4190 = vrot.slane %v4188, 4
        %v4191 = vshll.u32 %v3866, 16
        %v4193 = vrot.slane %v4191, 5
        %v4194 = vor.u32 %v4190, %v4193
        %v4195 = vrot.slane %v4194, 4
        %v4197 = vshll.u32 %v3867, 16
        %v4199 = vrot.slane %v4197, 5
        %v4200 = vsel %vm577, %v4195, %v4199
        %v4201 = vshrl.u32 %v3867, 16
        %v4203 = vrot.slane %v4201, 4
        %v4204 = vor.u32 %v4203, %v4199
        %v4205 = vrot.slane %v4204, 4
        %v4207 = vshll.u32 %v3868, 16
        %v4209 = vrot.slane %v4207, 5
        %v4210 = vsel %vm577, %v4205, %v4209
        %v4212 = vshrl.u32 %v3869, 16
        %v4214 = vrot.slane %v4212, 4
        %v4215 = vshll.u32 %v3869, 16
        %v4217 = vrot.slane %v4215, 5
        %v4218 = vor.u32 %v4214, %v4217
        %v4219 = vrot.slane %v4218, 4
        %v4221 = vshll.u32 %v3870, 16
        %v4223 = vrot.slane %v4221, 5
        %v4224 = vsel %vm577, %v4219, %v4223
        %v4225 = vshrl.u32 %v3870, 16
        %v4227 = vrot.slane %v4225, 4
        %v4228 = vor.u32 %v4227, %v4223
        %v4229 = vrot.slane %v4228, 4
        %v4231 = vshll.u32 %v3871, 16
        %v4233 = vrot.slane %v4231, 5
        %v4234 = vsel %vm577, %v4229, %v4233
        %v4236 = vshrl.u32 %v3872, 16
        %v4238 = vrot.slane %v4236, 4
        %v4239 = vshll.u32 %v3872, 16
        %v4241 = vrot.slane %v4239, 5
        %v4242 = vor.u32 %v4238, %v4241
        %v4243 = vrot.slane %v4242, 4
        %v4245 = vshll.u32 %v3873, 16
        %v4247 = vrot.slane %v4245, 5
        %v4248 = vsel %vm577, %v4243, %v4247
        %v4249 = vshrl.u32 %v3873, 16
        %v4251 = vrot.slane %v4249, 4
        %v4252 = vor.u32 %v4251, %v4247
        %v4253 = vrot.slane %v4252, 4
        %v4255 = vshll.u32 %v3874, 16
        %v4257 = vrot.slane %v4255, 5
        %v4258 = vsel %vm577, %v4253, %v4257
        %s4259 = scalar_lea.vmem %s210, 448
        %v4260 = vld [vmem:[%s4259] sm:$0xf]
        %v4261 = vld [vmem:[%s4259 + $0x4] sm:$0xf]
        %v4262 = vld [vmem:[%s4259 + $0x8] sm:$0xf]
        %v4263 = vld [vmem:[%s4259 + $0xc] sm:$0xf]
        %v4264 = vld [vmem:[%s4259 + $0x10] sm:$0xf]
        %v4265 = vld [vmem:[%s4259 + $0x14] sm:$0xf]
        %v4266 = vld [vmem:[%s4259 + $0x18] sm:$0xf]
        %v4267 = vld [vmem:[%s4259 + $0x1c] sm:$0xf]
        %v4268 = vld [vmem:[%s4259 + $0x20] sm:$0xf]
        %v4269 = vld [vmem:[%s4259 + $0x24] sm:$0xf]
        %v4270 = vld [vmem:[%s4259 + $0x28] sm:$0xf]
        %v4271 = vld [vmem:[%s4259 + $0x2c] sm:$0xf]
        %v4272 = vld [vmem:[%s4259 + $0x30] sm:$0xf]
        %v4273 = vld [vmem:[%s4259 + $0x34] sm:$0xf]
        %v4274 = vld [vmem:[%s4259 + $0x38] sm:$0xf]
        %v4275 = vld [vmem:[%s4259 + $0x3c] sm:$0xf]
        %v4276 = vunpack.c.l.b16 %v3888
        %v4277 = vunpack.c.l.b16 %v3898
        %v4278 = vunpack.c.l.b16 %v3912
        %v4279 = vunpack.c.l.b16 %v3922
        %v4280 = vunpack.c.l.b16 %v3936
        %v4281 = vunpack.c.l.b16 %v3946
        %v4282 = vunpack.c.l.b16 %v3960
        %v4283 = vunpack.c.l.b16 %v3970
        %v4284 = vunpack.c.l.b16 %v3984
        %v4285 = vunpack.c.l.b16 %v3994
        %v4286 = vunpack.c.l.b16 %v4008
        %v4287 = vunpack.c.l.b16 %v4018
        %v4288 = vunpack.c.l.b16 %v4032
        %v4289 = vunpack.c.l.b16 %v4042
        %v4290 = vunpack.c.l.b16 %v4056
        %v4291 = vunpack.c.l.b16 %v4066
        %v4292 = vunpack.c.l.b16 %v4080
        %v4293 = vunpack.c.l.b16 %v4090
        %v4294 = vunpack.c.l.b16 %v4104
        %v4295 = vunpack.c.l.b16 %v4114
        %v4296 = vunpack.c.l.b16 %v4128
        %v4297 = vunpack.c.l.b16 %v4138
        %v4298 = vunpack.c.l.b16 %v4152
        %v4299 = vunpack.c.l.b16 %v4162
        %v4300 = vunpack.c.l.b16 %v4176
        %v4301 = vunpack.c.l.b16 %v4186
        %v4302 = vunpack.c.l.b16 %v4200
        %v4303 = vunpack.c.l.b16 %v4210
        %v4304 = vunpack.c.l.b16 %v4224
        %v4305 = vunpack.c.l.b16 %v4234
        %v4306 = vunpack.c.l.b16 %v4248
        %v4307 = vunpack.c.l.b16 %v4258
        %v4308 = vpack.c.b16 %v4277, %v4276
        %v4309 = vpack.c.b16 %v4279, %v4278
        %v4310 = vpack.c.b16 %v4281, %v4280
        %v4311 = vpack.c.b16 %v4283, %v4282
        %v4312 = vpack.c.b16 %v4285, %v4284
        %v4313 = vpack.c.b16 %v4287, %v4286
        %v4314 = vpack.c.b16 %v4289, %v4288
        %v4315 = vpack.c.b16 %v4291, %v4290
        %v4316 = vpack.c.b16 %v4293, %v4292
        %v4317 = vpack.c.b16 %v4295, %v4294
        %v4318 = vpack.c.b16 %v4297, %v4296
        %v4319 = vpack.c.b16 %v4299, %v4298
        %v4320 = vpack.c.b16 %v4301, %v4300
        %v4321 = vpack.c.b16 %v4303, %v4302
        %v4322 = vpack.c.b16 %v4305, %v4304
        %v4323 = vpack.c.b16 %v4307, %v4306
        %v4356 = vunpack.c.l.b16 %v4260
        %v4357 = vunpack.c.l.b16 %v4261
        %v4358 = vunpack.c.l.b16 %v4262
        %v4359 = vunpack.c.l.b16 %v4263
        %v4360 = vunpack.c.l.b16 %v4264
        %v4361 = vunpack.c.l.b16 %v4265
        %v4362 = vunpack.c.l.b16 %v4266
        %v4363 = vunpack.c.l.b16 %v4267
        %v4364 = vunpack.c.l.b16 %v4268
        %v4365 = vunpack.c.l.b16 %v4269
        %v4366 = vunpack.c.l.b16 %v4270
        %v4367 = vunpack.c.l.b16 %v4271
        %v4368 = vunpack.c.l.b16 %v4272
        %v4369 = vunpack.c.l.b16 %v4273
        %v4370 = vunpack.c.l.b16 %v4274
        %v4371 = vunpack.c.l.b16 %v4275
        %v4372 = vpack.c.b16 %v4357, %v4356
        %v4373 = vpack.c.b16 %v4359, %v4358
        %v4374 = vpack.c.b16 %v4361, %v4360
        %v4375 = vpack.c.b16 %v4363, %v4362
        %v4376 = vpack.c.b16 %v4365, %v4364
        %v4377 = vpack.c.b16 %v4367, %v4366
        %v4378 = vpack.c.b16 %v4369, %v4368
        %v4379 = vpack.c.b16 %v4371, %v4370
        %4388 = vmatpush.bf16.msra.mxu0 %v4379
        %4389 = vmatpush.bf16.msra.mxu0 %v4378
        %4390 = vmatpush.bf16.msra.mxu0 %v4377
        %4391 = vmatpush.bf16.msra.mxu0 %v4376
        %4392 = vmatpush.bf16.msra.mxu0 %v4375
        %4393 = vmatpush.bf16.msra.mxu0 %v4374
        %4394 = vmatpush.bf16.msra.mxu0 %v4373
        %4395 = vmatpush.bf16.msra.mxu0 %v4372
        %4396 = vmatmul.bf16.gmra.mxu0 %v4308
        %v4397 = vpop.f32.mrf.mxu0
        %v4398 = vadd.f32 0.0, %v4397
        %v4399 = vpop.f32.mrf.mxu0
        %v4400 = vadd.f32 0.0, %v4399
        %4401 = vmatmul.bf16.gmra.mxu0 %v4309
        %v4402 = vpop.f32.mrf.mxu0
        %v4403 = vadd.f32 0.0, %v4402
        %v4404 = vpop.f32.mrf.mxu0
        %v4405 = vadd.f32 0.0, %v4404
        %4406 = vmatmul.bf16.gmra.mxu0 %v4310
        %v4407 = vpop.f32.mrf.mxu0
        %v4408 = vadd.f32 0.0, %v4407
        %v4409 = vpop.f32.mrf.mxu0
        %v4410 = vadd.f32 0.0, %v4409
        %4411 = vmatmul.bf16.gmra.mxu0 %v4311
        %v4412 = vpop.f32.mrf.mxu0
        %v4413 = vadd.f32 0.0, %v4412
        %v4414 = vpop.f32.mrf.mxu0
        %v4415 = vadd.f32 0.0, %v4414
        %4416 = vmatmul.bf16.gmra.mxu0 %v4312
        %v4417 = vpop.f32.mrf.mxu0
        %v4418 = vadd.f32 0.0, %v4417
        %v4419 = vpop.f32.mrf.mxu0
        %v4420 = vadd.f32 0.0, %v4419
        %4421 = vmatmul.bf16.gmra.mxu0 %v4313
        %v4422 = vpop.f32.mrf.mxu0
        %v4423 = vadd.f32 0.0, %v4422
        %v4424 = vpop.f32.mrf.mxu0
        %v4425 = vadd.f32 0.0, %v4424
        %4426 = vmatmul.bf16.gmra.mxu0 %v4314
        %v4427 = vpop.f32.mrf.mxu0
        %v4428 = vadd.f32 0.0, %v4427
        %v4429 = vpop.f32.mrf.mxu0
        %v4430 = vadd.f32 0.0, %v4429
        %4431 = vmatmul.bf16.gmra.mxu0 %v4315
        %v4432 = vpop.f32.mrf.mxu0
        %v4433 = vadd.f32 0.0, %v4432
        %v4434 = vpop.f32.mrf.mxu0
        %v4435 = vadd.f32 0.0, %v4434
        %4436 = vmatmul.bf16.gmra.mxu0 %v4316
        %v4437 = vpop.f32.mrf.mxu0
        %v4438 = vadd.f32 0.0, %v4437
        %v4439 = vpop.f32.mrf.mxu0
        %v4440 = vadd.f32 0.0, %v4439
        %4441 = vmatmul.bf16.gmra.mxu0 %v4317
        %v4442 = vpop.f32.mrf.mxu0
        %v4443 = vadd.f32 0.0, %v4442
        %v4444 = vpop.f32.mrf.mxu0
        %v4445 = vadd.f32 0.0, %v4444
        %4446 = vmatmul.bf16.gmra.mxu0 %v4318
        %v4447 = vpop.f32.mrf.mxu0
        %v4448 = vadd.f32 0.0, %v4447
        %v4449 = vpop.f32.mrf.mxu0
        %v4450 = vadd.f32 0.0, %v4449
        %4451 = vmatmul.bf16.gmra.mxu0 %v4319
        %v4452 = vpop.f32.mrf.mxu0
        %v4453 = vadd.f32 0.0, %v4452
        %v4454 = vpop.f32.mrf.mxu0
        %v4455 = vadd.f32 0.0, %v4454
        %4456 = vmatmul.bf16.gmra.mxu0 %v4320
        %v4457 = vpop.f32.mrf.mxu0
        %v4458 = vadd.f32 0.0, %v4457
        %v4459 = vpop.f32.mrf.mxu0
        %v4460 = vadd.f32 0.0, %v4459
        %4461 = vmatmul.bf16.gmra.mxu0 %v4321
        %v4462 = vpop.f32.mrf.mxu0
        %v4463 = vadd.f32 0.0, %v4462
        %v4464 = vpop.f32.mrf.mxu0
        %v4465 = vadd.f32 0.0, %v4464
        %4466 = vmatmul.bf16.gmra.mxu0 %v4322
        %v4467 = vpop.f32.mrf.mxu0
        %v4468 = vadd.f32 0.0, %v4467
        %v4469 = vpop.f32.mrf.mxu0
        %v4470 = vadd.f32 0.0, %v4469
        %4471 = vmatmul.bf16.gmra.mxu0 %v4323
        %v4472 = vpop.f32.mrf.mxu0
        %v4473 = vadd.f32 0.0, %v4472
        %v4474 = vpop.f32.mrf.mxu0
        %v4475 = vadd.f32 0.0, %v4474
        %4476 = vdwg.mxu0
        %v4477 = vld [vmem:[#allocation2] sm:$0xff]
        %v4478 = vld [vmem:[#allocation2 + $0x8] sm:$0xff]
        %v4479 = vld [vmem:[#allocation2 + $0x10] sm:$0xff]
        %v4480 = vld [vmem:[#allocation2 + $0x18] sm:$0xff]
        %v4481 = vld [vmem:[#allocation2 + $0x20] sm:$0xff]
        %v4482 = vld [vmem:[#allocation2 + $0x28] sm:$0xff]
        %v4483 = vld [vmem:[#allocation2 + $0x30] sm:$0xff]
        %v4484 = vld [vmem:[#allocation2 + $0x38] sm:$0xff]
        %v4485 = vld [vmem:[#allocation2 + $0x40] sm:$0xff]
        %v4486 = vld [vmem:[#allocation2 + $0x48] sm:$0xff]
        %v4487 = vld [vmem:[#allocation2 + $0x50] sm:$0xff]
        %v4488 = vld [vmem:[#allocation2 + $0x58] sm:$0xff]
        %v4489 = vld [vmem:[#allocation2 + $0x60] sm:$0xff]
        %v4490 = vld [vmem:[#allocation2 + $0x68] sm:$0xff]
        %v4491 = vld [vmem:[#allocation2 + $0x70] sm:$0xff]
        %v4492 = vld [vmem:[#allocation2 + $0x78] sm:$0xff]
        %v4493 = vld [vmem:[#allocation2 + $0x80] sm:$0xff]
        %v4494 = vld [vmem:[#allocation2 + $0x88] sm:$0xff]
        %v4495 = vld [vmem:[#allocation2 + $0x90] sm:$0xff]
        %v4496 = vld [vmem:[#allocation2 + $0x98] sm:$0xff]
        %v4497 = vld [vmem:[#allocation2 + $0xa0] sm:$0xff]
        %v4498 = vld [vmem:[#allocation2 + $0xa8] sm:$0xff]
        %v4499 = vld [vmem:[#allocation2 + $0xb0] sm:$0xff]
        %v4500 = vld [vmem:[#allocation2 + $0xb8] sm:$0xff]
        %v4501 = vld [vmem:[#allocation2 + $0xc0] sm:$0xff]
        %v4502 = vld [vmem:[#allocation2 + $0xc8] sm:$0xff]
        %v4503 = vld [vmem:[#allocation2 + $0xd0] sm:$0xff]
        %v4504 = vld [vmem:[#allocation2 + $0xd8] sm:$0xff]
        %v4505 = vld [vmem:[#allocation2 + $0xe0] sm:$0xff]
        %v4506 = vld [vmem:[#allocation2 + $0xe8] sm:$0xff]
        %v4507 = vld [vmem:[#allocation2 + $0xf0] sm:$0xff]
        %v4508 = vld [vmem:[#allocation2 + $0xf8] sm:$0xff]
        %v4509 = vadd.f32 %v4477, %v4398
        %v4510 = vadd.f32 %v4478, %v4400
        %v4511 = vadd.f32 %v4479, %v4403
        %v4512 = vadd.f32 %v4480, %v4405
        %v4513 = vadd.f32 %v4481, %v4408
        %v4514 = vadd.f32 %v4482, %v4410
        %v4515 = vadd.f32 %v4483, %v4413
        %v4516 = vadd.f32 %v4484, %v4415
        %v4517 = vadd.f32 %v4485, %v4418
        %v4518 = vadd.f32 %v4486, %v4420
        %v4519 = vadd.f32 %v4487, %v4423
        %v4520 = vadd.f32 %v4488, %v4425
        %v4521 = vadd.f32 %v4489, %v4428
        %v4522 = vadd.f32 %v4490, %v4430
        %v4523 = vadd.f32 %v4491, %v4433
        %v4524 = vadd.f32 %v4492, %v4435
        %v4525 = vadd.f32 %v4493, %v4438
        %v4526 = vadd.f32 %v4494, %v4440
        %v4527 = vadd.f32 %v4495, %v4443
        %v4528 = vadd.f32 %v4496, %v4445
        %v4529 = vadd.f32 %v4497, %v4448
        %v4530 = vadd.f32 %v4498, %v4450
        %v4531 = vadd.f32 %v4499, %v4453
        %v4532 = vadd.f32 %v4500, %v4455
        %v4533 = vadd.f32 %v4501, %v4458
        %v4534 = vadd.f32 %v4502, %v4460
        %v4535 = vadd.f32 %v4503, %v4463
        %v4536 = vadd.f32 %v4504, %v4465
        %v4537 = vadd.f32 %v4505, %v4468
        %v4538 = vadd.f32 %v4506, %v4470
        %v4539 = vadd.f32 %v4507, %v4473
        %v4540 = vadd.f32 %v4508, %v4475
        %4541 = vst [vmem:[#allocation2] sm:$0xff] %v4509
        %4542 = vst [vmem:[#allocation2 + $0x8] sm:$0xff] %v4510
        %4543 = vst [vmem:[#allocation2 + $0x10] sm:$0xff] %v4511
        %4544 = vst [vmem:[#allocation2 + $0x18] sm:$0xff] %v4512
        %4545 = vst [vmem:[#allocation2 + $0x20] sm:$0xff] %v4513
        %4546 = vst [vmem:[#allocation2 + $0x28] sm:$0xff] %v4514
        %4547 = vst [vmem:[#allocation2 + $0x30] sm:$0xff] %v4515
        %4548 = vst [vmem:[#allocation2 + $0x38] sm:$0xff] %v4516
        %4549 = vst [vmem:[#allocation2 + $0x40] sm:$0xff] %v4517
        %4550 = vst [vmem:[#allocation2 + $0x48] sm:$0xff] %v4518
        %4551 = vst [vmem:[#allocation2 + $0x50] sm:$0xff] %v4519
        %4552 = vst [vmem:[#allocation2 + $0x58] sm:$0xff] %v4520
        %4553 = vst [vmem:[#allocation2 + $0x60] sm:$0xff] %v4521
        %4554 = vst [vmem:[#allocation2 + $0x68] sm:$0xff] %v4522
        %4555 = vst [vmem:[#allocation2 + $0x70] sm:$0xff] %v4523
        %4556 = vst [vmem:[#allocation2 + $0x78] sm:$0xff] %v4524
        %4557 = vst [vmem:[#allocation2 + $0x80] sm:$0xff] %v4525
        %4558 = vst [vmem:[#allocation2 + $0x88] sm:$0xff] %v4526
        %4559 = vst [vmem:[#allocation2 + $0x90] sm:$0xff] %v4527
        %4560 = vst [vmem:[#allocation2 + $0x98] sm:$0xff] %v4528
        %4561 = vst [vmem:[#allocation2 + $0xa0] sm:$0xff] %v4529
        %4562 = vst [vmem:[#allocation2 + $0xa8] sm:$0xff] %v4530
        %4563 = vst [vmem:[#allocation2 + $0xb0] sm:$0xff] %v4531
        %4564 = vst [vmem:[#allocation2 + $0xb8] sm:$0xff] %v4532
        %4565 = vst [vmem:[#allocation2 + $0xc0] sm:$0xff] %v4533
        %4566 = vst [vmem:[#allocation2 + $0xc8] sm:$0xff] %v4534
        %4567 = vst [vmem:[#allocation2 + $0xd0] sm:$0xff] %v4535
        %4568 = vst [vmem:[#allocation2 + $0xd8] sm:$0xff] %v4536
        %4569 = vst [vmem:[#allocation2 + $0xe0] sm:$0xff] %v4537
        %4570 = vst [vmem:[#allocation2 + $0xe8] sm:$0xff] %v4538
        %4571 = vst [vmem:[#allocation2 + $0xf0] sm:$0xff] %v4539
        %4572 = vst [vmem:[#allocation2 + $0xf8] sm:$0xff] %v4540
        %v4573 = vld [vmem:[%s3448] sm:$0xe]
        %v4574 = vld [vmem:[%s3448 + $0x4] sm:$0xf]
        %v4575 = vld [vmem:[%s3448 + $0x8] sm:$0x1]
        %v4576 = vld [vmem:[%s3448 + $0xc] sm:$0xe]
        %v4577 = vld [vmem:[%s3448 + $0x10] sm:$0xf]
        %v4578 = vld [vmem:[%s3448 + $0x14] sm:$0x1]
        %v4579 = vld [vmem:[%s3448 + $0x18] sm:$0xe]
        %v4580 = vld [vmem:[%s3448 + $0x1c] sm:$0xf]
        %v4581 = vld [vmem:[%s3448 + $0x20] sm:$0x1]
        %v4582 = vld [vmem:[%s3448 + $0x24] sm:$0xe]
        %v4583 = vld [vmem:[%s3448 + $0x28] sm:$0xf]
        %v4584 = vld [vmem:[%s3448 + $0x2c] sm:$0x1]
        %v4585 = vld [vmem:[%s3448 + $0x30] sm:$0xe]
        %v4586 = vld [vmem:[%s3448 + $0x34] sm:$0xf]
        %v4587 = vld [vmem:[%s3448 + $0x38] sm:$0x1]
        %v4588 = vld [vmem:[%s3448 + $0x3c] sm:$0xe]
        %v4589 = vld [vmem:[%s3448 + $0x40] sm:$0xf]
        %v4590 = vld [vmem:[%s3448 + $0x44] sm:$0x1]
        %v4591 = vld [vmem:[%s3448 + $0x48] sm:$0xe]
        %v4592 = vld [vmem:[%s3448 + $0x4c] sm:$0xf]
        %v4593 = vld [vmem:[%s3448 + $0x50] sm:$0x1]
        %v4594 = vld [vmem:[%s3448 + $0x54] sm:$0xe]
        %v4595 = vld [vmem:[%s3448 + $0x58] sm:$0xf]
        %v4596 = vld [vmem:[%s3448 + $0x5c] sm:$0x1]
        %v4597 = vld [vmem:[%s3448 + $0x60] sm:$0xe]
        %v4598 = vld [vmem:[%s3448 + $0x64] sm:$0xf]
        %v4599 = vld [vmem:[%s3448 + $0x68] sm:$0x1]
        %v4600 = vld [vmem:[%s3448 + $0x6c] sm:$0xe]
        %v4601 = vld [vmem:[%s3448 + $0x70] sm:$0xf]
        %v4602 = vld [vmem:[%s3448 + $0x74] sm:$0x1]
        %v4603 = vld [vmem:[%s3448 + $0x78] sm:$0xe]
        %v4604 = vld [vmem:[%s3448 + $0x7c] sm:$0xf]
        %v4605 = vld [vmem:[%s3448 + $0x80] sm:$0x1]
        %v4606 = vld [vmem:[%s3448 + $0x84] sm:$0xe]
        %v4607 = vld [vmem:[%s3448 + $0x88] sm:$0xf]
        %v4608 = vld [vmem:[%s3448 + $0x8c] sm:$0x1]
        %v4609 = vld [vmem:[%s3448 + $0x90] sm:$0xe]
        %v4610 = vld [vmem:[%s3448 + $0x94] sm:$0xf]
        %v4611 = vld [vmem:[%s3448 + $0x98] sm:$0x1]
        %v4612 = vld [vmem:[%s3448 + $0x9c] sm:$0xe]
        %v4613 = vld [vmem:[%s3448 + $0xa0] sm:$0xf]
        %v4614 = vld [vmem:[%s3448 + $0xa4] sm:$0x1]
        %v4615 = vld [vmem:[%s3448 + $0xa8] sm:$0xe]
        %v4616 = vld [vmem:[%s3448 + $0xac] sm:$0xf]
        %v4617 = vld [vmem:[%s3448 + $0xb0] sm:$0x1]
        %v4618 = vld [vmem:[%s3448 + $0xb4] sm:$0xe]
        %v4619 = vld [vmem:[%s3448 + $0xb8] sm:$0xf]
        %v4620 = vld [vmem:[%s3448 + $0xbc] sm:$0x1]
        %v4669 = vrot.slane %v4573, 5
        %v4670 = vrot.slane %v4669, 4
        %v4671 = vrot.slane %v4574, 5
        %v4672 = vsel %vm1374, %v4670, %v4671
        %v4673 = vrot.slane %v4671, 4
        %v4674 = vrot.slane %v4575, 5
        %v4675 = vsel %vm1374, %v4673, %v4674
        %v4676 = vrot.slane %v4576, 5
        %v4677 = vrot.slane %v4676, 4
        %v4678 = vrot.slane %v4577, 5
        %v4679 = vsel %vm1374, %v4677, %v4678
        %v4680 = vrot.slane %v4678, 4
        %v4681 = vrot.slane %v4578, 5
        %v4682 = vsel %vm1374, %v4680, %v4681
        %v4683 = vrot.slane %v4579, 5
        %v4684 = vrot.slane %v4683, 4
        %v4685 = vrot.slane %v4580, 5
        %v4686 = vsel %vm1374, %v4684, %v4685
        %v4687 = vrot.slane %v4685, 4
        %v4688 = vrot.slane %v4581, 5
        %v4689 = vsel %vm1374, %v4687, %v4688
        %v4690 = vrot.slane %v4582, 5
        %v4691 = vrot.slane %v4690, 4
        %v4692 = vrot.slane %v4583, 5
        %v4693 = vsel %vm1374, %v4691, %v4692
        %v4694 = vrot.slane %v4692, 4
        %v4695 = vrot.slane %v4584, 5
        %v4696 = vsel %vm1374, %v4694, %v4695
        %v4697 = vrot.slane %v4585, 5
        %v4698 = vrot.slane %v4697, 4
        %v4699 = vrot.slane %v4586, 5
        %v4700 = vsel %vm1374, %v4698, %v4699
        %v4701 = vrot.slane %v4699, 4
        %v4702 = vrot.slane %v4587, 5
        %v4703 = vsel %vm1374, %v4701, %v4702
        %v4704 = vrot.slane %v4588, 5
        %v4705 = vrot.slane %v4704, 4
        %v4706 = vrot.slane %v4589, 5
        %v4707 = vsel %vm1374, %v4705, %v4706
        %v4708 = vrot.slane %v4706, 4
        %v4709 = vrot.slane %v4590, 5
        %v4710 = vsel %vm1374, %v4708, %v4709
        %v4711 = vrot.slane %v4591, 5
        %v4712 = vrot.slane %v4711, 4
        %v4713 = vrot.slane %v4592, 5
        %v4714 = vsel %vm1374, %v4712, %v4713
        %v4715 = vrot.slane %v4713, 4
        %v4716 = vrot.slane %v4593, 5
        %v4717 = vsel %vm1374, %v4715, %v4716
        %v4718 = vrot.slane %v4594, 5
        %v4719 = vrot.slane %v4718, 4
        %v4720 = vrot.slane %v4595, 5
        %v4721 = vsel %vm1374, %v4719, %v4720
        %v4722 = vrot.slane %v4720, 4
        %v4723 = vrot.slane %v4596, 5
        %v4724 = vsel %vm1374, %v4722, %v4723
        %v4725 = vrot.slane %v4597, 5
        %v4726 = vrot.slane %v4725, 4
        %v4727 = vrot.slane %v4598, 5
        %v4728 = vsel %vm1374, %v4726, %v4727
        %v4729 = vrot.slane %v4727, 4
        %v4730 = vrot.slane %v4599, 5
        %v4731 = vsel %vm1374, %v4729, %v4730
        %v4732 = vrot.slane %v4600, 5
        %v4733 = vrot.slane %v4732, 4
        %v4734 = vrot.slane %v4601, 5
        %v4735 = vsel %vm1374, %v4733, %v4734
        %v4736 = vrot.slane %v4734, 4
        %v4737 = vrot.slane %v4602, 5
        %v4738 = vsel %vm1374, %v4736, %v4737
        %v4739 = vrot.slane %v4603, 5
        %v4740 = vrot.slane %v4739, 4
        %v4741 = vrot.slane %v4604, 5
        %v4742 = vsel %vm1374, %v4740, %v4741
        %v4743 = vrot.slane %v4741, 4
        %v4744 = vrot.slane %v4605, 5
        %v4745 = vsel %vm1374, %v4743, %v4744
        %v4746 = vrot.slane %v4606, 5
        %v4747 = vrot.slane %v4746, 4
        %v4748 = vrot.slane %v4607, 5
        %v4749 = vsel %vm1374, %v4747, %v4748
        %v4750 = vrot.slane %v4748, 4
        %v4751 = vrot.slane %v4608, 5
        %v4752 = vsel %vm1374, %v4750, %v4751
        %v4753 = vrot.slane %v4609, 5
        %v4754 = vrot.slane %v4753, 4
        %v4755 = vrot.slane %v4610, 5
        %v4756 = vsel %vm1374, %v4754, %v4755
        %v4757 = vrot.slane %v4755, 4
        %v4758 = vrot.slane %v4611, 5
        %v4759 = vsel %vm1374, %v4757, %v4758
        %v4760 = vrot.slane %v4612, 5
        %v4761 = vrot.slane %v4760, 4
        %v4762 = vrot.slane %v4613, 5
        %v4763 = vsel %vm1374, %v4761, %v4762
        %v4764 = vrot.slane %v4762, 4
        %v4765 = vrot.slane %v4614, 5
        %v4766 = vsel %vm1374, %v4764, %v4765
        %v4767 = vrot.slane %v4615, 5
        %v4768 = vrot.slane %v4767, 4
        %v4769 = vrot.slane %v4616, 5
        %v4770 = vsel %vm1374, %v4768, %v4769
        %v4771 = vrot.slane %v4769, 4
        %v4772 = vrot.slane %v4617, 5
        %v4773 = vsel %vm1374, %v4771, %v4772
        %v4774 = vrot.slane %v4618, 5
        %v4775 = vrot.slane %v4774, 4
        %v4776 = vrot.slane %v4619, 5
        %v4777 = vsel %vm1374, %v4775, %v4776
        %v4778 = vrot.slane %v4776, 4
        %v4779 = vrot.slane %v4620, 5
        %v4780 = vsel %vm1374, %v4778, %v4779
        %s4781 = scalar_lea.vmem %s210, 512
        %v4782 = vld [vmem:[%s4781] sm:$0xf]
        %v4783 = vld [vmem:[%s4781 + $0x4] sm:$0xf]
        %v4784 = vld [vmem:[%s4781 + $0x8] sm:$0xf]
        %v4785 = vld [vmem:[%s4781 + $0xc] sm:$0xf]
        %v4786 = vld [vmem:[%s4781 + $0x10] sm:$0xf]
        %v4787 = vld [vmem:[%s4781 + $0x14] sm:$0xf]
        %v4788 = vld [vmem:[%s4781 + $0x18] sm:$0xf]
        %v4789 = vld [vmem:[%s4781 + $0x1c] sm:$0xf]
        %v4790 = vld [vmem:[%s4781 + $0x20] sm:$0xf]
        %v4791 = vld [vmem:[%s4781 + $0x24] sm:$0xf]
        %v4792 = vld [vmem:[%s4781 + $0x28] sm:$0xf]
        %v4793 = vld [vmem:[%s4781 + $0x2c] sm:$0xf]
        %v4794 = vld [vmem:[%s4781 + $0x30] sm:$0xf]
        %v4795 = vld [vmem:[%s4781 + $0x34] sm:$0xf]
        %v4796 = vld [vmem:[%s4781 + $0x38] sm:$0xf]
        %v4797 = vld [vmem:[%s4781 + $0x3c] sm:$0xf]
        %v4798 = vunpack.c.l.b16 %v4672
        %v4799 = vunpack.c.l.b16 %v4675
        %v4800 = vunpack.c.l.b16 %v4679
        %v4801 = vunpack.c.l.b16 %v4682
        %v4802 = vunpack.c.l.b16 %v4686
        %v4803 = vunpack.c.l.b16 %v4689
        %v4804 = vunpack.c.l.b16 %v4693
        %v4805 = vunpack.c.l.b16 %v4696
        %v4806 = vunpack.c.l.b16 %v4700
        %v4807 = vunpack.c.l.b16 %v4703
        %v4808 = vunpack.c.l.b16 %v4707
        %v4809 = vunpack.c.l.b16 %v4710
        %v4810 = vunpack.c.l.b16 %v4714
        %v4811 = vunpack.c.l.b16 %v4717
        %v4812 = vunpack.c.l.b16 %v4721
        %v4813 = vunpack.c.l.b16 %v4724
        %v4814 = vunpack.c.l.b16 %v4728
        %v4815 = vunpack.c.l.b16 %v4731
        %v4816 = vunpack.c.l.b16 %v4735
        %v4817 = vunpack.c.l.b16 %v4738
        %v4818 = vunpack.c.l.b16 %v4742
        %v4819 = vunpack.c.l.b16 %v4745
        %v4820 = vunpack.c.l.b16 %v4749
        %v4821 = vunpack.c.l.b16 %v4752
        %v4822 = vunpack.c.l.b16 %v4756
        %v4823 = vunpack.c.l.b16 %v4759
        %v4824 = vunpack.c.l.b16 %v4763
        %v4825 = vunpack.c.l.b16 %v4766
        %v4826 = vunpack.c.l.b16 %v4770
        %v4827 = vunpack.c.l.b16 %v4773
        %v4828 = vunpack.c.l.b16 %v4777
        %v4829 = vunpack.c.l.b16 %v4780
        %v4830 = vpack.c.b16 %v4799, %v4798
        %v4831 = vpack.c.b16 %v4801, %v4800
        %v4832 = vpack.c.b16 %v4803, %v4802
        %v4833 = vpack.c.b16 %v4805, %v4804
        %v4834 = vpack.c.b16 %v4807, %v4806
        %v4835 = vpack.c.b16 %v4809, %v4808
        %v4836 = vpack.c.b16 %v4811, %v4810
        %v4837 = vpack.c.b16 %v4813, %v4812
        %v4838 = vpack.c.b16 %v4815, %v4814
        %v4839 = vpack.c.b16 %v4817, %v4816
        %v4840 = vpack.c.b16 %v4819, %v4818
        %v4841 = vpack.c.b16 %v4821, %v4820
        %v4842 = vpack.c.b16 %v4823, %v4822
        %v4843 = vpack.c.b16 %v4825, %v4824
        %v4844 = vpack.c.b16 %v4827, %v4826
        %v4845 = vpack.c.b16 %v4829, %v4828
        %v4878 = vunpack.c.l.b16 %v4782
        %v4879 = vunpack.c.l.b16 %v4783
        %v4880 = vunpack.c.l.b16 %v4784
        %v4881 = vunpack.c.l.b16 %v4785
        %v4882 = vunpack.c.l.b16 %v4786
        %v4883 = vunpack.c.l.b16 %v4787
        %v4884 = vunpack.c.l.b16 %v4788
        %v4885 = vunpack.c.l.b16 %v4789
        %v4886 = vunpack.c.l.b16 %v4790
        %v4887 = vunpack.c.l.b16 %v4791
        %v4888 = vunpack.c.l.b16 %v4792
        %v4889 = vunpack.c.l.b16 %v4793
        %v4890 = vunpack.c.l.b16 %v4794
        %v4891 = vunpack.c.l.b16 %v4795
        %v4892 = vunpack.c.l.b16 %v4796
        %v4893 = vunpack.c.l.b16 %v4797
        %v4894 = vpack.c.b16 %v4879, %v4878
        %v4895 = vpack.c.b16 %v4881, %v4880
        %v4896 = vpack.c.b16 %v4883, %v4882
        %v4897 = vpack.c.b16 %v4885, %v4884
        %v4898 = vpack.c.b16 %v4887, %v4886
        %v4899 = vpack.c.b16 %v4889, %v4888
        %v4900 = vpack.c.b16 %v4891, %v4890
        %v4901 = vpack.c.b16 %v4893, %v4892
        %4910 = vmatpush.bf16.msra.mxu0 %v4901
        %4911 = vmatpush.bf16.msra.mxu0 %v4900
        %4912 = vmatpush.bf16.msra.mxu0 %v4899
        %4913 = vmatpush.bf16.msra.mxu0 %v4898
        %4914 = vmatpush.bf16.msra.mxu0 %v4897
        %4915 = vmatpush.bf16.msra.mxu0 %v4896
        %4916 = vmatpush.bf16.msra.mxu0 %v4895
        %4917 = vmatpush.bf16.msra.mxu0 %v4894
        %4918 = vmatmul.bf16.gmra.mxu0 %v4830
        %v4919 = vpop.f32.mrf.mxu0
        %v4920 = vadd.f32 0.0, %v4919
        %v4921 = vpop.f32.mrf.mxu0
        %v4922 = vadd.f32 0.0, %v4921
        %4923 = vmatmul.bf16.gmra.mxu0 %v4831
        %v4924 = vpop.f32.mrf.mxu0
        %v4925 = vadd.f32 0.0, %v4924
        %v4926 = vpop.f32.mrf.mxu0
        %v4927 = vadd.f32 0.0, %v4926
        %4928 = vmatmul.bf16.gmra.mxu0 %v4832
        %v4929 = vpop.f32.mrf.mxu0
        %v4930 = vadd.f32 0.0, %v4929
        %v4931 = vpop.f32.mrf.mxu0
        %v4932 = vadd.f32 0.0, %v4931
        %4933 = vmatmul.bf16.gmra.mxu0 %v4833
        %v4934 = vpop.f32.mrf.mxu0
        %v4935 = vadd.f32 0.0, %v4934
        %v4936 = vpop.f32.mrf.mxu0
        %v4937 = vadd.f32 0.0, %v4936
        %4938 = vmatmul.bf16.gmra.mxu0 %v4834
        %v4939 = vpop.f32.mrf.mxu0
        %v4940 = vadd.f32 0.0, %v4939
        %v4941 = vpop.f32.mrf.mxu0
        %v4942 = vadd.f32 0.0, %v4941
        %4943 = vmatmul.bf16.gmra.mxu0 %v4835
        %v4944 = vpop.f32.mrf.mxu0
        %v4945 = vadd.f32 0.0, %v4944
        %v4946 = vpop.f32.mrf.mxu0
        %v4947 = vadd.f32 0.0, %v4946
        %4948 = vmatmul.bf16.gmra.mxu0 %v4836
        %v4949 = vpop.f32.mrf.mxu0
        %v4950 = vadd.f32 0.0, %v4949
        %v4951 = vpop.f32.mrf.mxu0
        %v4952 = vadd.f32 0.0, %v4951
        %4953 = vmatmul.bf16.gmra.mxu0 %v4837
        %v4954 = vpop.f32.mrf.mxu0
        %v4955 = vadd.f32 0.0, %v4954
        %v4956 = vpop.f32.mrf.mxu0
        %v4957 = vadd.f32 0.0, %v4956
        %4958 = vmatmul.bf16.gmra.mxu0 %v4838
        %v4959 = vpop.f32.mrf.mxu0
        %v4960 = vadd.f32 0.0, %v4959
        %v4961 = vpop.f32.mrf.mxu0
        %v4962 = vadd.f32 0.0, %v4961
        %4963 = vmatmul.bf16.gmra.mxu0 %v4839
        %v4964 = vpop.f32.mrf.mxu0
        %v4965 = vadd.f32 0.0, %v4964
        %v4966 = vpop.f32.mrf.mxu0
        %v4967 = vadd.f32 0.0, %v4966
        %4968 = vmatmul.bf16.gmra.mxu0 %v4840
        %v4969 = vpop.f32.mrf.mxu0
        %v4970 = vadd.f32 0.0, %v4969
        %v4971 = vpop.f32.mrf.mxu0
        %v4972 = vadd.f32 0.0, %v4971
        %4973 = vmatmul.bf16.gmra.mxu0 %v4841
        %v4974 = vpop.f32.mrf.mxu0
        %v4975 = vadd.f32 0.0, %v4974
        %v4976 = vpop.f32.mrf.mxu0
        %v4977 = vadd.f32 0.0, %v4976
        %4978 = vmatmul.bf16.gmra.mxu0 %v4842
        %v4979 = vpop.f32.mrf.mxu0
        %v4980 = vadd.f32 0.0, %v4979
        %v4981 = vpop.f32.mrf.mxu0
        %v4982 = vadd.f32 0.0, %v4981
        %4983 = vmatmul.bf16.gmra.mxu0 %v4843
        %v4984 = vpop.f32.mrf.mxu0
        %v4985 = vadd.f32 0.0, %v4984
        %v4986 = vpop.f32.mrf.mxu0
        %v4987 = vadd.f32 0.0, %v4986
        %4988 = vmatmul.bf16.gmra.mxu0 %v4844
        %v4989 = vpop.f32.mrf.mxu0
        %v4990 = vadd.f32 0.0, %v4989
        %v4991 = vpop.f32.mrf.mxu0
        %v4992 = vadd.f32 0.0, %v4991
        %4993 = vmatmul.bf16.gmra.mxu0 %v4845
        %v4994 = vpop.f32.mrf.mxu0
        %v4995 = vadd.f32 0.0, %v4994
        %v4996 = vpop.f32.mrf.mxu0
        %v4997 = vadd.f32 0.0, %v4996
        %4998 = vdwg.mxu0
        %v4999 = vld [vmem:[#allocation2] sm:$0xff]
        %v5000 = vld [vmem:[#allocation2 + $0x8] sm:$0xff]
        %v5001 = vld [vmem:[#allocation2 + $0x10] sm:$0xff]
        %v5002 = vld [vmem:[#allocation2 + $0x18] sm:$0xff]
        %v5003 = vld [vmem:[#allocation2 + $0x20] sm:$0xff]
        %v5004 = vld [vmem:[#allocation2 + $0x28] sm:$0xff]
        %v5005 = vld [vmem:[#allocation2 + $0x30] sm:$0xff]
        %v5006 = vld [vmem:[#allocation2 + $0x38] sm:$0xff]
        %v5007 = vld [vmem:[#allocation2 + $0x40] sm:$0xff]
        %v5008 = vld [vmem:[#allocation2 + $0x48] sm:$0xff]
        %v5009 = vld [vmem:[#allocation2 + $0x50] sm:$0xff]
        %v5010 = vld [vmem:[#allocation2 + $0x58] sm:$0xff]
        %v5011 = vld [vmem:[#allocation2 + $0x60] sm:$0xff]
        %v5012 = vld [vmem:[#allocation2 + $0x68] sm:$0xff]
        %v5013 = vld [vmem:[#allocation2 + $0x70] sm:$0xff]
        %v5014 = vld [vmem:[#allocation2 + $0x78] sm:$0xff]
        %v5015 = vld [vmem:[#allocation2 + $0x80] sm:$0xff]
        %v5016 = vld [vmem:[#allocation2 + $0x88] sm:$0xff]
        %v5017 = vld [vmem:[#allocation2 + $0x90] sm:$0xff]
        %v5018 = vld [vmem:[#allocation2 + $0x98] sm:$0xff]
        %v5019 = vld [vmem:[#allocation2 + $0xa0] sm:$0xff]
        %v5020 = vld [vmem:[#allocation2 + $0xa8] sm:$0xff]
        %v5021 = vld [vmem:[#allocation2 + $0xb0] sm:$0xff]
        %v5022 = vld [vmem:[#allocation2 + $0xb8] sm:$0xff]
        %v5023 = vld [vmem:[#allocation2 + $0xc0] sm:$0xff]
        %v5024 = vld [vmem:[#allocation2 + $0xc8] sm:$0xff]
        %v5025 = vld [vmem:[#allocation2 + $0xd0] sm:$0xff]
        %v5026 = vld [vmem:[#allocation2 + $0xd8] sm:$0xff]
        %v5027 = vld [vmem:[#allocation2 + $0xe0] sm:$0xff]
        %v5028 = vld [vmem:[#allocation2 + $0xe8] sm:$0xff]
        %v5029 = vld [vmem:[#allocation2 + $0xf0] sm:$0xff]
        %v5030 = vld [vmem:[#allocation2 + $0xf8] sm:$0xff]
        %v5031 = vadd.f32 %v4999, %v4920
        %v5032 = vadd.f32 %v5000, %v4922
        %v5033 = vadd.f32 %v5001, %v4925
        %v5034 = vadd.f32 %v5002, %v4927
        %v5035 = vadd.f32 %v5003, %v4930
        %v5036 = vadd.f32 %v5004, %v4932
        %v5037 = vadd.f32 %v5005, %v4935
        %v5038 = vadd.f32 %v5006, %v4937
        %v5039 = vadd.f32 %v5007, %v4940
        %v5040 = vadd.f32 %v5008, %v4942
        %v5041 = vadd.f32 %v5009, %v4945
        %v5042 = vadd.f32 %v5010, %v4947
        %v5043 = vadd.f32 %v5011, %v4950
        %v5044 = vadd.f32 %v5012, %v4952
        %v5045 = vadd.f32 %v5013, %v4955
        %v5046 = vadd.f32 %v5014, %v4957
        %v5047 = vadd.f32 %v5015, %v4960
        %v5048 = vadd.f32 %v5016, %v4962
        %v5049 = vadd.f32 %v5017, %v4965
        %v5050 = vadd.f32 %v5018, %v4967
        %v5051 = vadd.f32 %v5019, %v4970
        %v5052 = vadd.f32 %v5020, %v4972
        %v5053 = vadd.f32 %v5021, %v4975
        %v5054 = vadd.f32 %v5022, %v4977
        %v5055 = vadd.f32 %v5023, %v4980
        %v5056 = vadd.f32 %v5024, %v4982
        %v5057 = vadd.f32 %v5025, %v4985
        %v5058 = vadd.f32 %v5026, %v4987
        %v5059 = vadd.f32 %v5027, %v4990
        %v5060 = vadd.f32 %v5028, %v4992
        %v5061 = vadd.f32 %v5029, %v4995
        %v5062 = vadd.f32 %v5030, %v4997
        %5063 = vst [vmem:[#allocation2] sm:$0xff] %v5031
        %5064 = vst [vmem:[#allocation2 + $0x8] sm:$0xff] %v5032
        %5065 = vst [vmem:[#allocation2 + $0x10] sm:$0xff] %v5033
        %5066 = vst [vmem:[#allocation2 + $0x18] sm:$0xff] %v5034
        %5067 = vst [vmem:[#allocation2 + $0x20] sm:$0xff] %v5035
        %5068 = vst [vmem:[#allocation2 + $0x28] sm:$0xff] %v5036
        %5069 = vst [vmem:[#allocation2 + $0x30] sm:$0xff] %v5037
        %5070 = vst [vmem:[#allocation2 + $0x38] sm:$0xff] %v5038
        %5071 = vst [vmem:[#allocation2 + $0x40] sm:$0xff] %v5039
        %5072 = vst [vmem:[#allocation2 + $0x48] sm:$0xff] %v5040
        %5073 = vst [vmem:[#allocation2 + $0x50] sm:$0xff] %v5041
        %5074 = vst [vmem:[#allocation2 + $0x58] sm:$0xff] %v5042
        %5075 = vst [vmem:[#allocation2 + $0x60] sm:$0xff] %v5043
        %5076 = vst [vmem:[#allocation2 + $0x68] sm:$0xff] %v5044
        %5077 = vst [vmem:[#allocation2 + $0x70] sm:$0xff] %v5045
        %5078 = vst [vmem:[#allocation2 + $0x78] sm:$0xff] %v5046
        %5079 = vst [vmem:[#allocation2 + $0x80] sm:$0xff] %v5047
        %5080 = vst [vmem:[#allocation2 + $0x88] sm:$0xff] %v5048
        %5081 = vst [vmem:[#allocation2 + $0x90] sm:$0xff] %v5049
        %5082 = vst [vmem:[#allocation2 + $0x98] sm:$0xff] %v5050
        %5083 = vst [vmem:[#allocation2 + $0xa0] sm:$0xff] %v5051
        %5084 = vst [vmem:[#allocation2 + $0xa8] sm:$0xff] %v5052
        %5085 = vst [vmem:[#allocation2 + $0xb0] sm:$0xff] %v5053
        %5086 = vst [vmem:[#allocation2 + $0xb8] sm:$0xff] %v5054
        %5087 = vst [vmem:[#allocation2 + $0xc0] sm:$0xff] %v5055
        %5088 = vst [vmem:[#allocation2 + $0xc8] sm:$0xff] %v5056
        %5089 = vst [vmem:[#allocation2 + $0xd0] sm:$0xff] %v5057
        %5090 = vst [vmem:[#allocation2 + $0xd8] sm:$0xff] %v5058
        %5091 = vst [vmem:[#allocation2 + $0xe0] sm:$0xff] %v5059
        %5092 = vst [vmem:[#allocation2 + $0xe8] sm:$0xff] %v5060
        %5093 = vst [vmem:[#allocation2 + $0xf0] sm:$0xff] %v5061
        %5094 = vst [vmem:[#allocation2 + $0xf8] sm:$0xff] %v5062
        %v5095 = vld [vmem:[#allocation2] sm:$0xff]
        %v5096 = vld [vmem:[#allocation2 + $0x8] sm:$0xff]
        %v5097 = vld [vmem:[#allocation2 + $0x10] sm:$0xff]
        %v5098 = vld [vmem:[#allocation2 + $0x18] sm:$0xff]
        %v5099 = vld [vmem:[#allocation2 + $0x20] sm:$0xff]
        %v5100 = vld [vmem:[#allocation2 + $0x28] sm:$0xff]
        %v5101 = vld [vmem:[#allocation2 + $0x30] sm:$0xff]
        %v5102 = vld [vmem:[#allocation2 + $0x38] sm:$0xff]
        %v5103 = vld [vmem:[#allocation2 + $0x40] sm:$0xff]
        %v5104 = vld [vmem:[#allocation2 + $0x48] sm:$0xff]
        %v5105 = vld [vmem:[#allocation2 + $0x50] sm:$0xff]
        %v5106 = vld [vmem:[#allocation2 + $0x58] sm:$0xff]
        %v5107 = vld [vmem:[#allocation2 + $0x60] sm:$0xff]
        %v5108 = vld [vmem:[#allocation2 + $0x68] sm:$0xff]
        %v5109 = vld [vmem:[#allocation2 + $0x70] sm:$0xff]
        %v5110 = vld [vmem:[#allocation2 + $0x78] sm:$0xff]
        %v5111 = vld [vmem:[#allocation2 + $0x80] sm:$0xff]
        %v5112 = vld [vmem:[#allocation2 + $0x88] sm:$0xff]
        %v5113 = vld [vmem:[#allocation2 + $0x90] sm:$0xff]
        %v5114 = vld [vmem:[#allocation2 + $0x98] sm:$0xff]
        %v5115 = vld [vmem:[#allocation2 + $0xa0] sm:$0xff]
        %v5116 = vld [vmem:[#allocation2 + $0xa8] sm:$0xff]
        %v5117 = vld [vmem:[#allocation2 + $0xb0] sm:$0xff]
        %v5118 = vld [vmem:[#allocation2 + $0xb8] sm:$0xff]
        %v5119 = vld [vmem:[#allocation2 + $0xc0] sm:$0xff]
        %v5120 = vld [vmem:[#allocation2 + $0xc8] sm:$0xff]
        %v5121 = vld [vmem:[#allocation2 + $0xd0] sm:$0xff]
        %v5122 = vld [vmem:[#allocation2 + $0xd8] sm:$0xff]
        %v5123 = vld [vmem:[#allocation2 + $0xe0] sm:$0xff]
        %v5124 = vld [vmem:[#allocation2 + $0xe8] sm:$0xff]
        %v5125 = vld [vmem:[#allocation2 + $0xf0] sm:$0xff]
        %v5126 = vld [vmem:[#allocation2 + $0xf8] sm:$0xff]
        %v5127 = vld [vmem:[%s213] sm:$0x1]
        %v5129 = vperm.slane %v5127, 0
        %v5131 = vadd.f32 %v5095, %v5129
        %v5132 = vadd.f32 %v5096, %v5129
        %v5133 = vadd.f32 %v5097, %v5129
        %v5134 = vadd.f32 %v5098, %v5129
        %v5135 = vadd.f32 %v5099, %v5129
        %v5136 = vadd.f32 %v5100, %v5129
        %v5137 = vadd.f32 %v5101, %v5129
        %v5138 = vadd.f32 %v5102, %v5129
        %v5139 = vadd.f32 %v5103, %v5129
        %v5140 = vadd.f32 %v5104, %v5129
        %v5141 = vadd.f32 %v5105, %v5129
        %v5142 = vadd.f32 %v5106, %v5129
        %v5143 = vadd.f32 %v5107, %v5129
        %v5144 = vadd.f32 %v5108, %v5129
        %v5145 = vadd.f32 %v5109, %v5129
        %v5146 = vadd.f32 %v5110, %v5129
        %v5147 = vadd.f32 %v5111, %v5129
        %v5148 = vadd.f32 %v5112, %v5129
        %v5149 = vadd.f32 %v5113, %v5129
        %v5150 = vadd.f32 %v5114, %v5129
        %v5151 = vadd.f32 %v5115, %v5129
        %v5152 = vadd.f32 %v5116, %v5129
        %v5153 = vadd.f32 %v5117, %v5129
        %v5154 = vadd.f32 %v5118, %v5129
        %v5155 = vadd.f32 %v5119, %v5129
        %v5156 = vadd.f32 %v5120, %v5129
        %v5157 = vadd.f32 %v5121, %v5129
        %v5158 = vadd.f32 %v5122, %v5129
        %v5159 = vadd.f32 %v5123, %v5129
        %v5160 = vadd.f32 %v5124, %v5129
        %v5161 = vadd.f32 %v5125, %v5129
        %v5162 = vadd.f32 %v5126, %v5129
        %vm5163 = vcmp.gt.f32.partialorder %v5131, 0.0
        %vm5164 = vcmp.gt.f32.partialorder %v5132, 0.0
        %vm5165 = vcmp.gt.f32.partialorder %v5133, 0.0
        %vm5166 = vcmp.gt.f32.partialorder %v5134, 0.0
        %vm5167 = vcmp.gt.f32.partialorder %v5135, 0.0
        %vm5168 = vcmp.gt.f32.partialorder %v5136, 0.0
        %vm5169 = vcmp.gt.f32.partialorder %v5137, 0.0
        %vm5170 = vcmp.gt.f32.partialorder %v5138, 0.0
        %vm5171 = vcmp.gt.f32.partialorder %v5139, 0.0
        %vm5172 = vcmp.gt.f32.partialorder %v5140, 0.0
        %vm5173 = vcmp.gt.f32.partialorder %v5141, 0.0
        %vm5174 = vcmp.gt.f32.partialorder %v5142, 0.0
        %vm5175 = vcmp.gt.f32.partialorder %v5143, 0.0
        %vm5176 = vcmp.gt.f32.partialorder %v5144, 0.0
        %vm5177 = vcmp.gt.f32.partialorder %v5145, 0.0
        %vm5178 = vcmp.gt.f32.partialorder %v5146, 0.0
        %vm5179 = vcmp.gt.f32.partialorder %v5147, 0.0
        %vm5180 = vcmp.gt.f32.partialorder %v5148, 0.0
        %vm5181 = vcmp.gt.f32.partialorder %v5149, 0.0
        %vm5182 = vcmp.gt.f32.partialorder %v5150, 0.0
        %vm5183 = vcmp.gt.f32.partialorder %v5151, 0.0
        %vm5184 = vcmp.gt.f32.partialorder %v5152, 0.0
        %vm5185 = vcmp.gt.f32.partialorder %v5153, 0.0
        %vm5186 = vcmp.gt.f32.partialorder %v5154, 0.0
        %vm5187 = vcmp.gt.f32.partialorder %v5155, 0.0
        %vm5188 = vcmp.gt.f32.partialorder %v5156, 0.0
        %vm5189 = vcmp.gt.f32.partialorder %v5157, 0.0
        %vm5190 = vcmp.gt.f32.partialorder %v5158, 0.0
        %vm5191 = vcmp.gt.f32.partialorder %v5159, 0.0
        %vm5192 = vcmp.gt.f32.partialorder %v5160, 0.0
        %vm5193 = vcmp.gt.f32.partialorder %v5161, 0.0
        %vm5194 = vcmp.gt.f32.partialorder %v5162, 0.0
        %v5195 = vmul.f32 %v5131, 0.01
        %v5196 = vmul.f32 %v5132, 0.01
        %v5197 = vmul.f32 %v5133, 0.01
        %v5198 = vmul.f32 %v5134, 0.01
        %v5199 = vmul.f32 %v5135, 0.01
        %v5200 = vmul.f32 %v5136, 0.01
        %v5201 = vmul.f32 %v5137, 0.01
        %v5202 = vmul.f32 %v5138, 0.01
        %v5203 = vmul.f32 %v5139, 0.01
        %v5204 = vmul.f32 %v5140, 0.01
        %v5205 = vmul.f32 %v5141, 0.01
        %v5206 = vmul.f32 %v5142, 0.01
        %v5207 = vmul.f32 %v5143, 0.01
        %v5208 = vmul.f32 %v5144, 0.01
        %v5209 = vmul.f32 %v5145, 0.01
        %v5210 = vmul.f32 %v5146, 0.01
        %v5211 = vmul.f32 %v5147, 0.01
        %v5212 = vmul.f32 %v5148, 0.01
        %v5213 = vmul.f32 %v5149, 0.01
        %v5214 = vmul.f32 %v5150, 0.01
        %v5215 = vmul.f32 %v5151, 0.01
        %v5216 = vmul.f32 %v5152, 0.01
        %v5217 = vmul.f32 %v5153, 0.01
        %v5218 = vmul.f32 %v5154, 0.01
        %v5219 = vmul.f32 %v5155, 0.01
        %v5220 = vmul.f32 %v5156, 0.01
        %v5221 = vmul.f32 %v5157, 0.01
        %v5222 = vmul.f32 %v5158, 0.01
        %v5223 = vmul.f32 %v5159, 0.01
        %v5224 = vmul.f32 %v5160, 0.01
        %v5225 = vmul.f32 %v5161, 0.01
        %v5226 = vmul.f32 %v5162, 0.01
        %v5227 = vsel %vm5163, %v5131, %v5195
        %v5228 = vsel %vm5164, %v5132, %v5196
        %v5229 = vsel %vm5165, %v5133, %v5197
        %v5230 = vsel %vm5166, %v5134, %v5198
        %v5231 = vsel %vm5167, %v5135, %v5199
        %v5232 = vsel %vm5168, %v5136, %v5200
        %v5233 = vsel %vm5169, %v5137, %v5201
        %v5234 = vsel %vm5170, %v5138, %v5202
        %v5235 = vsel %vm5171, %v5139, %v5203
        %v5236 = vsel %vm5172, %v5140, %v5204
        %v5237 = vsel %vm5173, %v5141, %v5205
        %v5238 = vsel %vm5174, %v5142, %v5206
        %v5239 = vsel %vm5175, %v5143, %v5207
        %v5240 = vsel %vm5176, %v5144, %v5208
        %v5241 = vsel %vm5177, %v5145, %v5209
        %v5242 = vsel %vm5178, %v5146, %v5210
        %v5243 = vsel %vm5179, %v5147, %v5211
        %v5244 = vsel %vm5180, %v5148, %v5212
        %v5245 = vsel %vm5181, %v5149, %v5213
        %v5246 = vsel %vm5182, %v5150, %v5214
        %v5247 = vsel %vm5183, %v5151, %v5215
        %v5248 = vsel %vm5184, %v5152, %v5216
        %v5249 = vsel %vm5185, %v5153, %v5217
        %v5250 = vsel %vm5186, %v5154, %v5218
        %v5251 = vsel %vm5187, %v5155, %v5219
        %v5252 = vsel %vm5188, %v5156, %v5220
        %v5253 = vsel %vm5189, %v5157, %v5221
        %v5254 = vsel %vm5190, %v5158, %v5222
        %v5255 = vsel %vm5191, %v5159, %v5223
        %v5256 = vsel %vm5192, %v5160, %v5224
        %v5257 = vsel %vm5193, %v5161, %v5225
        %v5258 = vsel %vm5194, %v5162, %v5226
        %5259 = vst [vmem:[%s201] sm:$0xff] %v5227
        %5260 = vst [vmem:[%s201 + $0x8] sm:$0xff] %v5228
        %5261 = vst [vmem:[%s201 + $0x10] sm:$0xff] %v5229
        %5262 = vst [vmem:[%s201 + $0x18] sm:$0xff] %v5230
        %5263 = vst [vmem:[%s201 + $0x20] sm:$0xff] %v5231
        %5264 = vst [vmem:[%s201 + $0x28] sm:$0xff] %v5232
        %5265 = vst [vmem:[%s201 + $0x30] sm:$0xff] %v5233
        %5266 = vst [vmem:[%s201 + $0x38] sm:$0xff] %v5234
        %5267 = vst [vmem:[%s201 + $0x40] sm:$0xff] %v5235
        %5268 = vst [vmem:[%s201 + $0x48] sm:$0xff] %v5236
        %5269 = vst [vmem:[%s201 + $0x50] sm:$0xff] %v5237
        %5270 = vst [vmem:[%s201 + $0x58] sm:$0xff] %v5238
        %5271 = vst [vmem:[%s201 + $0x60] sm:$0xff] %v5239
        %5272 = vst [vmem:[%s201 + $0x68] sm:$0xff] %v5240
        %5273 = vst [vmem:[%s201 + $0x70] sm:$0xff] %v5241
        %5274 = vst [vmem:[%s201 + $0x78] sm:$0xff] %v5242
        %5275 = vst [vmem:[%s201 + $0x80] sm:$0xff] %v5243
        %5276 = vst [vmem:[%s201 + $0x88] sm:$0xff] %v5244
        %5277 = vst [vmem:[%s201 + $0x90] sm:$0xff] %v5245
        %5278 = vst [vmem:[%s201 + $0x98] sm:$0xff] %v5246
        %5279 = vst [vmem:[%s201 + $0xa0] sm:$0xff] %v5247
        %5280 = vst [vmem:[%s201 + $0xa8] sm:$0xff] %v5248
        %5281 = vst [vmem:[%s201 + $0xb0] sm:$0xff] %v5249
        %5282 = vst [vmem:[%s201 + $0xb8] sm:$0xff] %v5250
        %5283 = vst [vmem:[%s201 + $0xc0] sm:$0xff] %v5251
        %5284 = vst [vmem:[%s201 + $0xc8] sm:$0xff] %v5252
        %5285 = vst [vmem:[%s201 + $0xd0] sm:$0xff] %v5253
        %5286 = vst [vmem:[%s201 + $0xd8] sm:$0xff] %v5254
        %5287 = vst [vmem:[%s201 + $0xe0] sm:$0xff] %v5255
        %5288 = vst [vmem:[%s201 + $0xe8] sm:$0xff] %v5256
        %5289 = vst [vmem:[%s201 + $0xf0] sm:$0xff] %v5257
        %5290 = vst [vmem:[%s201 + $0xf8] sm:$0xff] %v5258
        %s5291 = sand.u32 %s117, 1
        %s5292 = scalar_lea.sflag [#allocation4], %s5291
        %s5293 = sand.u32 %s117, 1
        %s5294 = smul.addr %s5293, 256
        %s5295 = scalar_lea.vmem [#allocation3], %s5294
        // Predicated region
        $region33: #{dbl_forward.1} parent=31 // pred_check
          %p5296 = pneg %p127
        $region34: #{dbl_forward.1} parent=31 // pred_check_branch
          %5298 = sbr.rel (%p5296) target = $region36
        $region35: #{dbl_forward.1} parent=31 // pred_region
          %5300 = vsyncadd %s5292, 0
          %s5301 = smul.addr %s21, 32
          %s5302 = sadd.s32 %s22, %s5301
          %s5303 = smul.addr %s5302, 8
          %s5304 = scalar_lea.hbm %s3, %s5303
          %s5305 = sshll.u32 %s5295, 4
          %s5306 = int_to_ptr.vmem [resolvable:$true] %s5305
          %s5307 = sshll.u32 %s5304, 4
          %s5308 = int_to_ptr.hbm [resolvable:$true] %s5307
          %5313 = dma.vmem_to_hbm [thread:$0]  %s5306, 4096, %s5308, %s5292, 128, 128, 8
        $region36: #{dbl_forward.1} parent=31 // pred_fallthru
          _
      $region32: #{dbl_forward.1} parent=5 // pred_fallthru
        _
      %p5314 = scmp.le.s32.totalorder 2, %s12
      // Predicated region
      $region37: #{dbl_forward.1} parent=5 // pred_check
        %p5315 = pneg %p5314
      $region38: #{dbl_forward.1} parent=5 // pred_check_branch
        %5317 = sbr.rel (%p5315) target = $region40
      $region39: #{dbl_forward.1} parent=5 // pred_region
        %s5318 = ssub.s32 %s12, 2
        // Predicated region
        $region41: #{dbl_forward.1} parent=39 // pred_check
          %p5319 = pneg %p133
        $region42: #{dbl_forward.1} parent=39 // pred_check_branch
          %5321 = sbr.rel (%p5319) target = $region44
        $region43: #{dbl_forward.1} parent=39 // pred_region
          %s5322 = sand.u32 %s118, 1
          %s5323 = scalar_lea.sflag [#allocation4], %s5322
          %s5324 = sand.u32 %s118, 1
          %s5325 = smul.addr %s5324, 256
          %s5326 = scalar_lea.vmem [#allocation3], %s5325
          %5328 = dma.done %s5323, 4096
        $region44: #{dbl_forward.1} parent=39 // pred_fallthru
          _
      $region40: #{dbl_forward.1} parent=5 // pred_fallthru
        _
    $region6: #{dbl_forward.1} parent=1 // loop_footer
      %s16 = sadd.s32 1, %s12
    $region7: #{dbl_forward.1} parent=1 // loop_footer_branch
      %11 = sbr.rel target = $region3
    $region8: #{dbl_forward.1} parent=1 // loop_exit
      _
    %5329 = vsyncpa [#allocation4], 1
    %s5330 = scalar_lea.sflag [#allocation4], 1
    %5331 = vsyncpa %s5330, 1

</llo_original>
